<compile_context>
chip_gen: v6e
topology: v6e:2x2x1
jax: 0.10.0
libtpu: 0.0.40
codegen_flags: <defaults>
</compile_context>

<pallas_src>
import jax
import jax.numpy as jnp
from jax.experimental import pallas as pl
from jax.experimental.pallas import tpu as pltpu

LEAKY_SLOPE = 0.01   # PyTorch nn.LeakyReLU default negative_slope
LANE = 128


def _leaky_relu(h):
    return jnp.where(h > 0, h, LEAKY_SLOPE * h)


def _round_up(n, m):
    return ((n + m - 1) // m) * m


def point_decoder_kernel(x_ref,
                         w1_ref, s1_ref, b1_ref,
                         w2_ref, s2_ref, b2_ref,
                         w3_ref, s3_ref, b3_ref,
                         w4_ref, s4_ref, b4_ref,
                         o_ref):
    """4-layer MLP on one (TB, in_dim) row tile.  int8 weights are cast to
    bf16 feeding the MXU (f32 accumulation); the per-output-channel dequant
    scale is applied as a single VPU multiply next to the f32 bias add."""

    def layer(h, w_ref, s_ref, b_ref):
        acc = jnp.dot(h, w_ref[...].astype(jnp.bfloat16),
                      preferred_element_type=jnp.float32)
        return acc * s_ref[...] + b_ref[...]

    h = x_ref[...]                                         # (TB, in_dim) bf16
    h = _leaky_relu(layer(h, w1_ref, s1_ref, b1_ref)).astype(jnp.bfloat16)
    h = _leaky_relu(layer(h, w2_ref, s2_ref, b2_ref)).astype(jnp.bfloat16)
    h = _leaky_relu(layer(h, w3_ref, s3_ref, b3_ref)).astype(jnp.bfloat16)
    h = layer(h, w4_ref, s4_ref, b4_ref)                   # (TB, out_pad) f32
    o_ref[...] = jnp.tanh(h).astype(o_ref.dtype)


def point_decoder_forward(x, params, num_points, *,
                          block_rows=256, out_dtype=jnp.float32):
    """x: (B, in_dim); params: dict of int8 weights + f32 scales/biases
    (last layer lane-padded).  Returns (B, num_points, 3) in out_dtype."""
    B, in_dim = x.shape
    out_dim = num_points * 3
    out_pad = params["w4"].shape[1]
    assert out_pad == _round_up(out_dim, LANE), "w4 must be lane-padded"

    # Row tile: whole batch when small, else block_rows (MXU-friendly 256 on
    # v6e/v7x, still a multiple of 128 for v5e).  Pad B up when tiling.
    if B <= block_rows:
        tb, b_pad = B, B
    else:
        tb = block_rows
        b_pad = _round_up(B, tb)

    x = x.astype(jnp.bfloat16)
    if b_pad != B:
        x = jnp.pad(x, ((0, b_pad - B), (0, 0)))

    # x / out walk the row tiles; weights, scales and biases use a constant
    # block index -> DMA'd once and resident across all grid steps.
    in_specs = [pl.BlockSpec((tb, in_dim), lambda i: (i, 0))]
    args = [x]
    for l in range(1, 5):
        for key in (f"w{l}", f"s{l}", f"b{l}"):
            p = params[key]
            in_specs.append(pl.BlockSpec(p.shape, lambda i: (0, 0)))
            args.append(p)

    param_bytes = sum(int(p.size) * p.dtype.itemsize for p in params.values())
    flops = 2 * b_pad * (in_dim * 1024 + 1024 * 512 + 512 * 256
                         + 256 * out_pad)
    bytes_accessed = int(param_bytes + x.size * x.dtype.itemsize
                         + b_pad * out_pad * jnp.dtype(out_dtype).itemsize)

    flat_out = pl.pallas_call(
        point_decoder_kernel,
        grid=(b_pad // tb,),
        out_shape=jax.ShapeDtypeStruct((b_pad, out_pad), out_dtype),
        in_specs=in_specs,
        out_specs=pl.BlockSpec((tb, out_pad), lambda i: (i, 0)),
        compiler_params=pltpu.CompilerParams(
            dimension_semantics=("parallel",),   # v7x: shard rows across TCs
            vmem_limit_bytes=32 << 20),          # safe inside v7x 64 MiB VMEM
        cost_estimate=pl.CostEstimate(
            flops=int(flops),
            transcendentals=int(b_pad * out_pad),
            bytes_accessed=bytes_accessed),
    )(*args)

    # Strip row / lane padding (pure JAX glue) and reshape to the point cloud.
    return flat_out[:B, :out_dim].reshape(B, num_points, 3)


def _quantize_per_channel(w):
    """Symmetric per-output-channel int8 quantization:
    w ~= w_q.astype(f32) * scale."""
    amax = jnp.max(jnp.abs(w), axis=0, keepdims=True)
    scale = jnp.where(amax > 0, amax / 127.0, 1.0).astype(jnp.float32)
    w_q = jnp.clip(jnp.round(w / scale), -127.0, 127.0).astype(jnp.int8)
    return w_q, scale


def init_params(key, in_dim, num_points):
    """Deterministic synthetic init matching the PyTorch layer sizes.
    Weights int8 + per-channel f32 scale (cuts HBM traffic on this
    weight-streaming-bound kernel); biases f32; layer 4 lane-padded."""
    out_pad = _round_up(num_points * 3, LANE)
    dims = [(in_dim, 1024), (1024, 512), (512, 256), (256, num_points * 3)]
    params = {}
    keys = jax.random.split(key, len(dims) * 2)
    for i, (fan_in, fan_out) in enumerate(dims):
        kw, kb = keys[2 * i], keys[2 * i + 1]
        bound = 1.0 / jnp.sqrt(jnp.float32(fan_in))
        w = bound * jax.random.normal(kw, (fan_in, fan_out), jnp.float32)
        b = bound * jax.random.normal(kb, (1, fan_out), jnp.float32)
        if i == len(dims) - 1 and fan_out != out_pad:
            w = jnp.pad(w, ((0, 0), (0, out_pad - fan_out)))
            b = jnp.pad(b, ((0, 0), (0, out_pad - fan_out)))
        w_q, s = _quantize_per_channel(w)
        params[f"w{i + 1}"] = w_q
        params[f"s{i + 1}"] = s
        params[f"b{i + 1}"] = b
    return params


def reference_forward(x, params, num_points):
    """Pure-JAX reference with the same numerics as the kernel (bf16 operands,
    f32 accumulation, per-channel dequant fused next to the bias add)."""
    def layer(h, w_q, s, b):
        acc = jnp.dot(h.astype(jnp.bfloat16), w_q.astype(jnp.bfloat16),
                      preferred_element_type=jnp.float32)
        return acc * s + b

    h = _leaky_relu(layer(x, params["w1"], params["s1"], params["b1"]))
    h = _leaky_relu(layer(h, params["w2"], params["s2"], params["b2"]))
    h = _leaky_relu(layer(h, params["w3"], params["s3"], params["b3"]))
    h = jnp.tanh(layer(h, params["w4"], params["s4"], params["b4"]))
    return h[:, :num_points * 3].reshape(-1, num_points, 3)


if __name__ == "__main__":
    IN_DIM = 512        # module default
    NUM_POINTS = 1000   # module default
    BATCH = 2

    key = jax.random.PRNGKey(0)
    kx, kp = jax.random.split(key)
    x = jax.random.normal(kx, (BATCH, IN_DIM), dtype=jnp.float32)
    params = init_params(kp, IN_DIM, NUM_POINTS)

    out = jax.block_until_ready(point_decoder_forward(x, params, NUM_POINTS))
    assert out.shape == (BATCH, NUM_POINTS, 3), out.shape

    ref = reference_forward(x, params, NUM_POINTS)
    max_err = float(jnp.max(jnp.abs(out - ref)))
    assert jnp.allclose(out, ref, atol=2e-2, rtol=2e-2), f"mismatch: {max_err}"

    print("KERNEL_OK")
</pallas_src>

<mosaic_0001>
module attributes {stable_mosaic.version = 11 : i64} {
  func.func @point_decoder_kernel(%arg0: i32, %arg1: memref<2x512xbf16, #tpu.memory_space<vmem>>, %arg2: memref<512x1024xi8, #tpu.memory_space<vmem>>, %arg3: memref<1x1024xf32, #tpu.memory_space<vmem>>, %arg4: memref<1x1024xf32, #tpu.memory_space<vmem>>, %arg5: memref<1024x512xi8, #tpu.memory_space<vmem>>, %arg6: memref<1x512xf32, #tpu.memory_space<vmem>>, %arg7: memref<1x512xf32, #tpu.memory_space<vmem>>, %arg8: memref<512x256xi8, #tpu.memory_space<vmem>>, %arg9: memref<1x256xf32, #tpu.memory_space<vmem>>, %arg10: memref<1x256xf32, #tpu.memory_space<vmem>>, %arg11: memref<256x3072xi8, #tpu.memory_space<vmem>>, %arg12: memref<1x3072xf32, #tpu.memory_space<vmem>>, %arg13: memref<1x3072xf32, #tpu.memory_space<vmem>>, %arg14: memref<2x3072xf32, #tpu.memory_space<vmem>>) attributes {dimension_semantics = [#tpu.dimension_semantics<parallel>], iteration_bounds = array<i64: 1>, scalar_prefetch = 0 : i64, scratch_operands = 0 : i64, tpu.core_type = #tpu.core_type<tc>, window_params = [{transform_indices = @transform_0, window_bounds = array<i64: 2, 512>}, {pipeline_mode = #tpu.pipeline_mode<synchronous>, transform_indices = @transform_1, window_bounds = array<i64: 512, 1024>}, {pipeline_mode = #tpu.pipeline_mode<synchronous>, transform_indices = @transform_2, window_bounds = array<i64: 1, 1024>}, {pipeline_mode = #tpu.pipeline_mode<synchronous>, transform_indices = @transform_3, window_bounds = array<i64: 1, 1024>}, {pipeline_mode = #tpu.pipeline_mode<synchronous>, transform_indices = @transform_4, window_bounds = array<i64: 1024, 512>}, {pipeline_mode = #tpu.pipeline_mode<synchronous>, transform_indices = @transform_5, window_bounds = array<i64: 1, 512>}, {pipeline_mode = #tpu.pipeline_mode<synchronous>, transform_indices = @transform_6, window_bounds = array<i64: 1, 512>}, {pipeline_mode = #tpu.pipeline_mode<synchronous>, transform_indices = @transform_7, window_bounds = array<i64: 512, 256>}, {pipeline_mode = #tpu.pipeline_mode<synchronous>, transform_indices = @transform_8, window_bounds = array<i64: 1, 256>}, {pipeline_mode = #tpu.pipeline_mode<synchronous>, transform_indices = @transform_9, window_bounds = array<i64: 1, 256>}, {pipeline_mode = #tpu.pipeline_mode<synchronous>, transform_indices = @transform_10, window_bounds = array<i64: 256, 3072>}, {pipeline_mode = #tpu.pipeline_mode<synchronous>, transform_indices = @transform_11, window_bounds = array<i64: 1, 3072>}, {pipeline_mode = #tpu.pipeline_mode<synchronous>, transform_indices = @transform_12, window_bounds = array<i64: 1, 3072>}, {transform_indices = @transform_13, window_bounds = array<i64: 2, 3072>}]} {
    %c0 = arith.constant 0 : index
    %c0_0 = arith.constant 0 : index
    %0 = vector.load %arg1[%c0, %c0_0] : memref<2x512xbf16, #tpu.memory_space<vmem>>, vector<2x512xbf16>
    %c0_1 = arith.constant 0 : index
    %c0_2 = arith.constant 0 : index
    %1 = vector.load %arg2[%c0_1, %c0_2] : memref<512x1024xi8, #tpu.memory_space<vmem>>, vector<512x1024xi8>
    %2 = arith.sitofp %1 : vector<512x1024xi8> to vector<512x1024xbf16>
    %cst = arith.constant dense<0.000000e+00> : vector<2x1024xf32>
    %3 = tpu.matmul %0, %2, %cst {dimension_numbers = #tpu.dot_dimension_numbers<[1], [0], [0], [1], [0, 0, 1, 1], [], []>} : vector<2x512xbf16>, vector<512x1024xbf16>, vector<2x1024xf32> -> vector<2x1024xf32>
    %c0_3 = arith.constant 0 : index
    %c0_4 = arith.constant 0 : index
    %4 = vector.load %arg3[%c0_3, %c0_4] : memref<1x1024xf32, #tpu.memory_space<vmem>>, vector<1x1024xf32>
    %5 = vector.broadcast %4 : vector<1x1024xf32> to vector<2x1024xf32>
    %6 = arith.mulf %3, %5 : vector<2x1024xf32>
    %c0_5 = arith.constant 0 : index
    %c0_6 = arith.constant 0 : index
    %7 = vector.load %arg4[%c0_5, %c0_6] : memref<1x1024xf32, #tpu.memory_space<vmem>>, vector<1x1024xf32>
    %8 = vector.broadcast %7 : vector<1x1024xf32> to vector<2x1024xf32>
    %9 = arith.addf %6, %8 : vector<2x1024xf32>
    %cst_7 = arith.constant 0.000000e+00 : f32
    %10 = vector.broadcast %cst_7 : f32 to vector<2x1024xf32>
    %11 = arith.cmpf ogt, %9, %10 : vector<2x1024xf32>
    %cst_8 = arith.constant 0.00999999977 : f32
    %12 = vector.broadcast %cst_8 : f32 to vector<2x1024xf32>
    %13 = arith.mulf %12, %9 : vector<2x1024xf32>
    %14 = arith.select %11, %9, %13 : vector<2x1024xi1>, vector<2x1024xf32>
    %15 = arith.truncf %14 : vector<2x1024xf32> to vector<2x1024xbf16>
    %c0_9 = arith.constant 0 : index
    %c0_10 = arith.constant 0 : index
    %16 = vector.load %arg5[%c0_9, %c0_10] : memref<1024x512xi8, #tpu.memory_space<vmem>>, vector<1024x512xi8>
    %17 = arith.sitofp %16 : vector<1024x512xi8> to vector<1024x512xbf16>
    %cst_11 = arith.constant dense<0.000000e+00> : vector<2x512xf32>
    %18 = tpu.matmul %15, %17, %cst_11 {dimension_numbers = #tpu.dot_dimension_numbers<[1], [0], [0], [1], [0, 0, 1, 1], [], []>} : vector<2x1024xbf16>, vector<1024x512xbf16>, vector<2x512xf32> -> vector<2x512xf32>
    %c0_12 = arith.constant 0 : index
    %c0_13 = arith.constant 0 : index
    %19 = vector.load %arg6[%c0_12, %c0_13] : memref<1x512xf32, #tpu.memory_space<vmem>>, vector<1x512xf32>
    %20 = vector.broadcast %19 : vector<1x512xf32> to vector<2x512xf32>
    %21 = arith.mulf %18, %20 : vector<2x512xf32>
    %c0_14 = arith.constant 0 : index
    %c0_15 = arith.constant 0 : index
    %22 = vector.load %arg7[%c0_14, %c0_15] : memref<1x512xf32, #tpu.memory_space<vmem>>, vector<1x512xf32>
    %23 = vector.broadcast %22 : vector<1x512xf32> to vector<2x512xf32>
    %24 = arith.addf %21, %23 : vector<2x512xf32>
    %cst_16 = arith.constant 0.000000e+00 : f32
    %25 = vector.broadcast %cst_16 : f32 to vector<2x512xf32>
    %26 = arith.cmpf ogt, %24, %25 : vector<2x512xf32>
    %cst_17 = arith.constant 0.00999999977 : f32
    %27 = vector.broadcast %cst_17 : f32 to vector<2x512xf32>
    %28 = arith.mulf %27, %24 : vector<2x512xf32>
    %29 = arith.select %26, %24, %28 : vector<2x512xi1>, vector<2x512xf32>
    %30 = arith.truncf %29 : vector<2x512xf32> to vector<2x512xbf16>
    %c0_18 = arith.constant 0 : index
    %c0_19 = arith.constant 0 : index
    %31 = vector.load %arg8[%c0_18, %c0_19] : memref<512x256xi8, #tpu.memory_space<vmem>>, vector<512x256xi8>
    %32 = arith.sitofp %31 : vector<512x256xi8> to vector<512x256xbf16>
    %cst_20 = arith.constant dense<0.000000e+00> : vector<2x256xf32>
    %33 = tpu.matmul %30, %32, %cst_20 {dimension_numbers = #tpu.dot_dimension_numbers<[1], [0], [0], [1], [0, 0, 1, 1], [], []>} : vector<2x512xbf16>, vector<512x256xbf16>, vector<2x256xf32> -> vector<2x256xf32>
    %c0_21 = arith.constant 0 : index
    %c0_22 = arith.constant 0 : index
    %34 = vector.load %arg9[%c0_21, %c0_22] : memref<1x256xf32, #tpu.memory_space<vmem>>, vector<1x256xf32>
    %35 = vector.broadcast %34 : vector<1x256xf32> to vector<2x256xf32>
    %36 = arith.mulf %33, %35 : vector<2x256xf32>
    %c0_23 = arith.constant 0 : index
    %c0_24 = arith.constant 0 : index
    %37 = vector.load %arg10[%c0_23, %c0_24] : memref<1x256xf32, #tpu.memory_space<vmem>>, vector<1x256xf32>
    %38 = vector.broadcast %37 : vector<1x256xf32> to vector<2x256xf32>
    %39 = arith.addf %36, %38 : vector<2x256xf32>
    %cst_25 = arith.constant 0.000000e+00 : f32
    %40 = vector.broadcast %cst_25 : f32 to vector<2x256xf32>
    %41 = arith.cmpf ogt, %39, %40 : vector<2x256xf32>
    %cst_26 = arith.constant 0.00999999977 : f32
    %42 = vector.broadcast %cst_26 : f32 to vector<2x256xf32>
    %43 = arith.mulf %42, %39 : vector<2x256xf32>
    %44 = arith.select %41, %39, %43 : vector<2x256xi1>, vector<2x256xf32>
    %45 = arith.truncf %44 : vector<2x256xf32> to vector<2x256xbf16>
    %c0_27 = arith.constant 0 : index
    %c0_28 = arith.constant 0 : index
    %46 = vector.load %arg11[%c0_27, %c0_28] : memref<256x3072xi8, #tpu.memory_space<vmem>>, vector<256x3072xi8>
    %47 = arith.sitofp %46 : vector<256x3072xi8> to vector<256x3072xbf16>
    %cst_29 = arith.constant dense<0.000000e+00> : vector<2x3072xf32>
    %48 = tpu.matmul %45, %47, %cst_29 {dimension_numbers = #tpu.dot_dimension_numbers<[1], [0], [0], [1], [0, 0, 1, 1], [], []>} : vector<2x256xbf16>, vector<256x3072xbf16>, vector<2x3072xf32> -> vector<2x3072xf32>
    %c0_30 = arith.constant 0 : index
    %c0_31 = arith.constant 0 : index
    %49 = vector.load %arg12[%c0_30, %c0_31] : memref<1x3072xf32, #tpu.memory_space<vmem>>, vector<1x3072xf32>
    %50 = vector.broadcast %49 : vector<1x3072xf32> to vector<2x3072xf32>
    %51 = arith.mulf %48, %50 : vector<2x3072xf32>
    %c0_32 = arith.constant 0 : index
    %c0_33 = arith.constant 0 : index
    %52 = vector.load %arg13[%c0_32, %c0_33] : memref<1x3072xf32, #tpu.memory_space<vmem>>, vector<1x3072xf32>
    %53 = vector.broadcast %52 : vector<1x3072xf32> to vector<2x3072xf32>
    %54 = arith.addf %51, %53 : vector<2x3072xf32>
    %55 = math.tanh %54 : vector<2x3072xf32>
    %c0_34 = arith.constant 0 : index
    %c0_35 = arith.constant 0 : index
    %56 = vector.load %arg14[%c0_34, %c0_35] : memref<2x3072xf32, #tpu.memory_space<vmem>>, vector<2x3072xf32>
    tpu.vector_store %arg14[%c0_34, %c0_35], %55 {strides = array<i32>} : memref<2x3072xf32, #tpu.memory_space<vmem>>, vector<2x3072xf32>,
    return
  }
  func.func @transform_0(%arg0: i32) -> (i32, i32) {
    %c0_i32 = arith.constant 0 : i32
    %c0_i32_0 = arith.constant 0 : i32
    return %arg0, %c0_i32 : i32, i32
  }
  func.func @transform_1(%arg0: i32) -> (i32, i32) {
    %c0_i32 = arith.constant 0 : i32
    %c0_i32_0 = arith.constant 0 : i32
    %c0_i32_1 = arith.constant 0 : i32
    return %c0_i32, %c0_i32_0 : i32, i32
  }
  func.func @transform_2(%arg0: i32) -> (i32, i32) {
    %c0_i32 = arith.constant 0 : i32
    %c0_i32_0 = arith.constant 0 : i32
    %c0_i32_1 = arith.constant 0 : i32
    return %c0_i32, %c0_i32_0 : i32, i32
  }
  func.func @transform_3(%arg0: i32) -> (i32, i32) {
    %c0_i32 = arith.constant 0 : i32
    %c0_i32_0 = arith.constant 0 : i32
    %c0_i32_1 = arith.constant 0 : i32
    return %c0_i32, %c0_i32_0 : i32, i32
  }
  func.func @transform_4(%arg0: i32) -> (i32, i32) {
    %c0_i32 = arith.constant 0 : i32
    %c0_i32_0 = arith.constant 0 : i32
    %c0_i32_1 = arith.constant 0 : i32
    return %c0_i32, %c0_i32_0 : i32, i32
  }
  func.func @transform_5(%arg0: i32) -> (i32, i32) {
    %c0_i32 = arith.constant 0 : i32
    %c0_i32_0 = arith.constant 0 : i32
    %c0_i32_1 = arith.constant 0 : i32
    return %c0_i32, %c0_i32_0 : i32, i32
  }
  func.func @transform_6(%arg0: i32) -> (i32, i32) {
    %c0_i32 = arith.constant 0 : i32
    %c0_i32_0 = arith.constant 0 : i32
    %c0_i32_1 = arith.constant 0 : i32
    return %c0_i32, %c0_i32_0 : i32, i32
  }
  func.func @transform_7(%arg0: i32) -> (i32, i32) {
    %c0_i32 = arith.constant 0 : i32
    %c0_i32_0 = arith.constant 0 : i32
    %c0_i32_1 = arith.constant 0 : i32
    return %c0_i32, %c0_i32_0 : i32, i32
  }
  func.func @transform_8(%arg0: i32) -> (i32, i32) {
    %c0_i32 = arith.constant 0 : i32
    %c0_i32_0 = arith.constant 0 : i32
    %c0_i32_1 = arith.constant 0 : i32
    return %c0_i32, %c0_i32_0 : i32, i32
  }
  func.func @transform_9(%arg0: i32) -> (i32, i32) {
    %c0_i32 = arith.constant 0 : i32
    %c0_i32_0 = arith.constant 0 : i32
    %c0_i32_1 = arith.constant 0 : i32
    return %c0_i32, %c0_i32_0 : i32, i32
  }
  func.func @transform_10(%arg0: i32) -> (i32, i32) {
    %c0_i32 = arith.constant 0 : i32
    %c0_i32_0 = arith.constant 0 : i32
    %c0_i32_1 = arith.constant 0 : i32
    return %c0_i32, %c0_i32_0 : i32, i32
  }
  func.func @transform_11(%arg0: i32) -> (i32, i32) {
    %c0_i32 = arith.constant 0 : i32
    %c0_i32_0 = arith.constant 0 : i32
    %c0_i32_1 = arith.constant 0 : i32
    return %c0_i32, %c0_i32_0 : i32, i32
  }
  func.func @transform_12(%arg0: i32) -> (i32, i32) {
    %c0_i32 = arith.constant 0 : i32
    %c0_i32_0 = arith.constant 0 : i32
    %c0_i32_1 = arith.constant 0 : i32
    return %c0_i32, %c0_i32_0 : i32, i32
  }
  func.func @transform_13(%arg0: i32) -> (i32, i32) {
    %c0_i32 = arith.constant 0 : i32
    %c0_i32_0 = arith.constant 0 : i32
    return %arg0, %c0_i32 : i32, i32
  }
}

</mosaic_0001>

<llo_original>
// kernel: tpu_custom_call.1
$region0: #{tpu_custom_call.1}
  #allocation0 [shape = 'u32[]', space=smem, size = 0x4, offset = 0x4, fixed_abs, tag = 'smem constant byte address 0x4 - core index']
  #allocation1 [shape = 'u32[144,128]{1,0:T(1,128)}', space=vmem, size = 0x12000, scoped, tag = 'internal scratch']
  %s0 = inlined_call_operand.hbm [shape: bf16[2,512], index: 0, kind: input, shape index: {}]
  %s1 = inlined_call_operand.hbm [shape: s8[512,1024], index: 1, kind: input, shape index: {}]
  %s2 = inlined_call_operand.hbm [shape: f32[1,1024], index: 2, kind: input, shape index: {}]
  %s3 = inlined_call_operand.hbm [shape: f32[1,1024], index: 3, kind: input, shape index: {}]
  %s4 = inlined_call_operand.hbm [shape: s8[1024,512], index: 4, kind: input, shape index: {}]
  %s5 = inlined_call_operand.vmem [shape: f32[1,512], index: 5, kind: input, shape index: {}]
  %s6 = inlined_call_operand.vmem [shape: f32[1,512], index: 6, kind: input, shape index: {}]
  %s7 = inlined_call_operand.hbm [shape: s8[512,256], index: 7, kind: input, shape index: {}]
  %s8 = inlined_call_operand.vmem [shape: f32[1,256], index: 8, kind: input, shape index: {}]
  %s9 = inlined_call_operand.vmem [shape: f32[1,256], index: 9, kind: input, shape index: {}]
  %s10 = inlined_call_operand.hbm [shape: s8[256,3072], index: 10, kind: input, shape index: {}]
  %s11 = inlined_call_operand.hbm [shape: f32[1,3072], index: 11, kind: input, shape index: {}]
  %s12 = inlined_call_operand.hbm [shape: f32[1,3072], index: 12, kind: input, shape index: {}]
  %s13 = inlined_call_operand.hbm [shape: f32[2,3072], index: 13, kind: output, shape index: {}]
  %s14 = sld [smem:[#allocation0]]
  $region98: #{tpu_custom_call.1} parent=0
    _
  %s16 = ssub.s32 1, %s14
  %s17 = scalar_select 0, %s16, %s14
  $region1: #{tpu_custom_call.1} parent=0
    #allocation2 [shape = 'u8[2048]{0}', space=vmem, size = 0x800, scoped, tag = 'input window, operand 0, single buffered']
    #allocation3 [shape = 's32[1]{0}', space=sflag, size = 0x4, scoped, tag = 'scoped memory for tpu_custom_call.1']
    #allocation4 [shape = 's32[1]{0}', space=sflag, size = 0x4, scoped, tag = 'scoped memory for tpu_custom_call.1']
    #allocation5 [shape = 'u8[524288]{0}', space=vmem, size = 0x80000, scoped, tag = 'input window, operand 1, single buffered']
    #allocation6 [shape = 's32[1]{0}', space=sflag, size = 0x4, scoped, tag = 'scoped memory for tpu_custom_call.1']
    #allocation7 [shape = 'u8[4096]{0}', space=vmem, size = 0x1000, scoped, tag = 'input window, operand 2, single buffered']
    #allocation8 [shape = 'u8[4096]{0}', space=vmem, size = 0x1000, scoped, tag = 'input window, operand 3, single buffered']
    #allocation9 [shape = 's32[1]{0}', space=sflag, size = 0x4, scoped, tag = 'scoped memory for tpu_custom_call.1']
    #allocation10 [shape = 'u8[524288]{0}', space=vmem, size = 0x80000, scoped, tag = 'input window, operand 4, single buffered']
    #allocation11 [shape = 'u8[131072]{0}', space=vmem, size = 0x20000, scoped, tag = 'input window, operand 7, single buffered']
    #allocation12 [shape = 's32[1]{0}', space=sflag, size = 0x4, scoped, tag = 'scoped memory for tpu_custom_call.1']
    #allocation13 [shape = 'u8[786432]{0}', space=vmem, size = 0xc0000, scoped, tag = 'input window, operand 10, single buffered']
    #allocation14 [shape = 'u8[12288]{0}', space=vmem, size = 0x3000, scoped, tag = 'input window, operand 11, single buffered']
    #allocation15 [shape = 's32[1]{0}', space=sflag, size = 0x4, scoped, tag = 'scoped memory for tpu_custom_call.1']
    #allocation16 [shape = 'u8[12288]{0}', space=vmem, size = 0x3000, scoped, tag = 'input window, operand 12, single buffered']
    #allocation17 [shape = 'u8[24576]{0}', space=vmem, size = 0x6000, scoped, tag = 'output window, operand 0, single buffered']
    %18 = vsyncpa [#allocation3], 0
    %19 = vsyncpa [#allocation6], 0
    %20 = vsyncpa [#allocation9], 0
    %21 = vsyncpa [#allocation12], 0
    %22 = vsyncpa [#allocation15], 0
    %23 = vsyncpa [#allocation4], 0
    // Predicated region
    $region2: #{tpu_custom_call.1} parent=1 // pred_check
      _
    $region3: #{tpu_custom_call.1} parent=1 // pred_check_branch
      %25 = sbr.rel (0) target = $region5
    $region4: #{tpu_custom_call.1} parent=1 // pred_region
      %s27 = ssub.s32 64, 64
      %28 = vsyncadd [#allocation3], %s27
      %s30 = sshll.u32 [#allocation2], 4
      %s31 = int_to_ptr.vmem [resolvable:$true] %s30
      %33 = dma.hbm_to_vmem [thread:$0]  %s0, 64, %s31, [#allocation3]
    $region5: #{tpu_custom_call.1} parent=1 // pred_fallthru
      _
    // Predicated region
    $region6: #{tpu_custom_call.1} parent=1 // pred_check
      _
    $region7: #{tpu_custom_call.1} parent=1 // pred_check_branch
      %35 = sbr.rel (0) target = $region9
    $region8: #{tpu_custom_call.1} parent=1 // pred_region
      %s37 = ssub.s32 16384, 16384
      %38 = vsyncadd [#allocation6], %s37
      %s39 = sshll.u32 [#allocation5], 4
      %s40 = int_to_ptr.vmem [resolvable:$true] %s39
      %45 = dma.hbm_to_vmem [thread:$0]  %s1, 16384, %s40, [#allocation6], 1024, 1024, 64
    $region9: #{tpu_custom_call.1} parent=1 // pred_fallthru
      _
    // Predicated region
    $region10: #{tpu_custom_call.1} parent=1 // pred_check
      _
    $region11: #{tpu_custom_call.1} parent=1 // pred_check_branch
      %47 = sbr.rel (0) target = $region13
    $region12: #{tpu_custom_call.1} parent=1 // pred_region
      %s49 = ssub.s32 128, 128
      %50 = vsyncadd [#allocation6], %s49
      %s52 = sshll.u32 [#allocation7], 4
      %s53 = int_to_ptr.vmem [resolvable:$true] %s52
      %55 = dma.hbm_to_vmem [thread:$0]  %s2, 128, %s53, [#allocation6]
    $region13: #{tpu_custom_call.1} parent=1 // pred_fallthru
      _
    // Predicated region
    $region14: #{tpu_custom_call.1} parent=1 // pred_check
      _
    $region15: #{tpu_custom_call.1} parent=1 // pred_check_branch
      %57 = sbr.rel (0) target = $region17
    $region16: #{tpu_custom_call.1} parent=1 // pred_region
      %s59 = ssub.s32 128, 128
      %60 = vsyncadd [#allocation9], %s59
      %s62 = sshll.u32 [#allocation8], 4
      %s63 = int_to_ptr.vmem [resolvable:$true] %s62
      %65 = dma.hbm_to_vmem [thread:$0]  %s3, 128, %s63, [#allocation9]
    $region17: #{tpu_custom_call.1} parent=1 // pred_fallthru
      _
    // Predicated region
    $region18: #{tpu_custom_call.1} parent=1 // pred_check
      _
    $region19: #{tpu_custom_call.1} parent=1 // pred_check_branch
      %67 = sbr.rel (0) target = $region21
    $region20: #{tpu_custom_call.1} parent=1 // pred_region
      %s69 = ssub.s32 16384, 16384
      %70 = vsyncadd [#allocation9], %s69
      %s71 = sshll.u32 [#allocation10], 4
      %s72 = int_to_ptr.vmem [resolvable:$true] %s71
      %77 = dma.hbm_to_vmem [thread:$0]  %s4, 16384, %s72, [#allocation9], 512, 512, 32
    $region21: #{tpu_custom_call.1} parent=1 // pred_fallthru
      _
    // Predicated region
    $region22: #{tpu_custom_call.1} parent=1 // pred_check
      _
    $region23: #{tpu_custom_call.1} parent=1 // pred_check_branch
      %79 = sbr.rel (0) target = $region25
    $region24: #{tpu_custom_call.1} parent=1 // pred_region
      _
    $region25: #{tpu_custom_call.1} parent=1 // pred_fallthru
      _
    // Predicated region
    $region26: #{tpu_custom_call.1} parent=1 // pred_check
      _
    $region27: #{tpu_custom_call.1} parent=1 // pred_check_branch
      %81 = sbr.rel (0) target = $region29
    $region28: #{tpu_custom_call.1} parent=1 // pred_region
      _
    $region29: #{tpu_custom_call.1} parent=1 // pred_fallthru
      _
    // Predicated region
    $region30: #{tpu_custom_call.1} parent=1 // pred_check
      _
    $region31: #{tpu_custom_call.1} parent=1 // pred_check_branch
      %83 = sbr.rel (0) target = $region33
    $region32: #{tpu_custom_call.1} parent=1 // pred_region
      %s85 = ssub.s32 4096, 4096
      %86 = vsyncadd [#allocation12], %s85
      %s87 = sshll.u32 [#allocation11], 4
      %s88 = int_to_ptr.vmem [resolvable:$true] %s87
      %93 = dma.hbm_to_vmem [thread:$0]  %s7, 4096, %s88, [#allocation12], 256, 256, 16
    $region33: #{tpu_custom_call.1} parent=1 // pred_fallthru
      _
    // Predicated region
    $region34: #{tpu_custom_call.1} parent=1 // pred_check
      _
    $region35: #{tpu_custom_call.1} parent=1 // pred_check_branch
      %95 = sbr.rel (0) target = $region37
    $region36: #{tpu_custom_call.1} parent=1 // pred_region
      _
    $region37: #{tpu_custom_call.1} parent=1 // pred_fallthru
      _
    // Predicated region
    $region38: #{tpu_custom_call.1} parent=1 // pred_check
      _
    $region39: #{tpu_custom_call.1} parent=1 // pred_check_branch
      %97 = sbr.rel (0) target = $region41
    $region40: #{tpu_custom_call.1} parent=1 // pred_region
      _
    $region41: #{tpu_custom_call.1} parent=1 // pred_fallthru
      _
    // Predicated region
    $region42: #{tpu_custom_call.1} parent=1 // pred_check
      _
    $region43: #{tpu_custom_call.1} parent=1 // pred_check_branch
      %99 = sbr.rel (0) target = $region45
    $region44: #{tpu_custom_call.1} parent=1 // pred_region
      %s101 = ssub.s32 24576, 24576
      %102 = vsyncadd [#allocation12], %s101
      %s103 = sshll.u32 [#allocation13], 4
      %s104 = int_to_ptr.vmem [resolvable:$true] %s103
      %109 = dma.hbm_to_vmem [thread:$0]  %s10, 24576, %s104, [#allocation12], 3072, 3072, 192
    $region45: #{tpu_custom_call.1} parent=1 // pred_fallthru
      _
    // Predicated region
    $region46: #{tpu_custom_call.1} parent=1 // pred_check
      _
    $region47: #{tpu_custom_call.1} parent=1 // pred_check_branch
      %111 = sbr.rel (0) target = $region49
    $region48: #{tpu_custom_call.1} parent=1 // pred_region
      %s113 = ssub.s32 384, 384
      %114 = vsyncadd [#allocation15], %s113
      %s116 = sshll.u32 [#allocation14], 4
      %s117 = int_to_ptr.vmem [resolvable:$true] %s116
      %119 = dma.hbm_to_vmem [thread:$0]  %s11, 384, %s117, [#allocation15]
    $region49: #{tpu_custom_call.1} parent=1 // pred_fallthru
      _
    // Predicated region
    $region50: #{tpu_custom_call.1} parent=1 // pred_check
      _
    $region51: #{tpu_custom_call.1} parent=1 // pred_check_branch
      %121 = sbr.rel (0) target = $region53
    $region52: #{tpu_custom_call.1} parent=1 // pred_region
      %s123 = ssub.s32 384, 384
      %124 = vsyncadd [#allocation15], %s123
      %s126 = sshll.u32 [#allocation16], 4
      %s127 = int_to_ptr.vmem [resolvable:$true] %s126
      %129 = dma.hbm_to_vmem [thread:$0]  %s12, 384, %s127, [#allocation15]
    $region53: #{tpu_custom_call.1} parent=1 // pred_fallthru
      _
    // Predicated region
    $region54: #{tpu_custom_call.1} parent=1 // pred_check
      _
    $region55: #{tpu_custom_call.1} parent=1 // pred_check_branch
      %131 = sbr.rel (0) target = $region57
    $region56: #{tpu_custom_call.1} parent=1 // pred_region
      %132 = dma.done [#allocation3], 64
    $region57: #{tpu_custom_call.1} parent=1 // pred_fallthru
      _
    // Predicated region
    $region58: #{tpu_custom_call.1} parent=1 // pred_check
      _
    $region59: #{tpu_custom_call.1} parent=1 // pred_check_branch
      %134 = sbr.rel (0) target = $region61
    $region60: #{tpu_custom_call.1} parent=1 // pred_region
      %135 = dma.done [#allocation6], 16384
    $region61: #{tpu_custom_call.1} parent=1 // pred_fallthru
      _
    // Predicated region
    $region62: #{tpu_custom_call.1} parent=1 // pred_check
      _
    $region63: #{tpu_custom_call.1} parent=1 // pred_check_branch
      %137 = sbr.rel (0) target = $region65
    $region64: #{tpu_custom_call.1} parent=1 // pred_region
      %138 = dma.done [#allocation6], 128
    $region65: #{tpu_custom_call.1} parent=1 // pred_fallthru
      _
    // Predicated region
    $region66: #{tpu_custom_call.1} parent=1 // pred_check
      _
    $region67: #{tpu_custom_call.1} parent=1 // pred_check_branch
      %140 = sbr.rel (0) target = $region69
    $region68: #{tpu_custom_call.1} parent=1 // pred_region
      %141 = dma.done [#allocation9], 128
    $region69: #{tpu_custom_call.1} parent=1 // pred_fallthru
      _
    // Predicated region
    $region70: #{tpu_custom_call.1} parent=1 // pred_check
      _
    $region71: #{tpu_custom_call.1} parent=1 // pred_check_branch
      %143 = sbr.rel (0) target = $region73
    $region72: #{tpu_custom_call.1} parent=1 // pred_region
      %144 = dma.done [#allocation9], 16384
    $region73: #{tpu_custom_call.1} parent=1 // pred_fallthru
      _
    // Predicated region
    $region74: #{tpu_custom_call.1} parent=1 // pred_check
      _
    $region75: #{tpu_custom_call.1} parent=1 // pred_check_branch
      %146 = sbr.rel (0) target = $region77
    $region76: #{tpu_custom_call.1} parent=1 // pred_region
      %147 = dma.done [#allocation12], 4096
    $region77: #{tpu_custom_call.1} parent=1 // pred_fallthru
      _
    // Predicated region
    $region78: #{tpu_custom_call.1} parent=1 // pred_check
      _
    $region79: #{tpu_custom_call.1} parent=1 // pred_check_branch
      %149 = sbr.rel (0) target = $region81
    $region80: #{tpu_custom_call.1} parent=1 // pred_region
      %150 = dma.done [#allocation12], 24576
    $region81: #{tpu_custom_call.1} parent=1 // pred_fallthru
      _
    // Predicated region
    $region82: #{tpu_custom_call.1} parent=1 // pred_check
      _
    $region83: #{tpu_custom_call.1} parent=1 // pred_check_branch
      %152 = sbr.rel (0) target = $region85
    $region84: #{tpu_custom_call.1} parent=1 // pred_region
      %153 = dma.done [#allocation15], 384
    $region85: #{tpu_custom_call.1} parent=1 // pred_fallthru
      _
    // Predicated region
    $region86: #{tpu_custom_call.1} parent=1 // pred_check
      _
    $region87: #{tpu_custom_call.1} parent=1 // pred_check_branch
      %155 = sbr.rel (0) target = $region89
    $region88: #{tpu_custom_call.1} parent=1 // pred_region
      %156 = dma.done [#allocation15], 384
    $region89: #{tpu_custom_call.1} parent=1 // pred_fallthru
      _
    %v157 = vld [vmem:[#allocation2] sm:$0xf]
    %v158 = vld [vmem:[#allocation5] sm:$0xff]
    %v159 = vld [vmem:[#allocation5 + $0x8] sm:$0xff]
    %v160 = vld [vmem:[#allocation5 + $0x10] sm:$0xff]
    %v161 = vld [vmem:[#allocation5 + $0x18] sm:$0xff]
    %v162 = vld [vmem:[#allocation5 + $0x20] sm:$0xff]
    %v163 = vld [vmem:[#allocation5 + $0x28] sm:$0xff]
    %v164 = vld [vmem:[#allocation5 + $0x30] sm:$0xff]
    %v165 = vld [vmem:[#allocation5 + $0x38] sm:$0xff]
    %v166 = vld [vmem:[#allocation5 + $0x40] sm:$0xff]
    %v167 = vld [vmem:[#allocation5 + $0x48] sm:$0xff]
    %v168 = vld [vmem:[#allocation5 + $0x50] sm:$0xff]
    %v169 = vld [vmem:[#allocation5 + $0x58] sm:$0xff]
    %v170 = vld [vmem:[#allocation5 + $0x60] sm:$0xff]
    %v171 = vld [vmem:[#allocation5 + $0x68] sm:$0xff]
    %v172 = vld [vmem:[#allocation5 + $0x70] sm:$0xff]
    %v173 = vld [vmem:[#allocation5 + $0x78] sm:$0xff]
    %v174 = vld [vmem:[#allocation5 + $0x80] sm:$0xff]
    %v175 = vld [vmem:[#allocation5 + $0x88] sm:$0xff]
    %v176 = vld [vmem:[#allocation5 + $0x90] sm:$0xff]
    %v177 = vld [vmem:[#allocation5 + $0x98] sm:$0xff]
    %v178 = vld [vmem:[#allocation5 + $0xa0] sm:$0xff]
    %v179 = vld [vmem:[#allocation5 + $0xa8] sm:$0xff]
    %v180 = vld [vmem:[#allocation5 + $0xb0] sm:$0xff]
    %v181 = vld [vmem:[#allocation5 + $0xb8] sm:$0xff]
    %v182 = vld [vmem:[#allocation5 + $0xc0] sm:$0xff]
    %v183 = vld [vmem:[#allocation5 + $0xc8] sm:$0xff]
    %v184 = vld [vmem:[#allocation5 + $0xd0] sm:$0xff]
    %v185 = vld [vmem:[#allocation5 + $0xd8] sm:$0xff]
    %v186 = vld [vmem:[#allocation5 + $0xe0] sm:$0xff]
    %v187 = vld [vmem:[#allocation5 + $0xe8] sm:$0xff]
    %v188 = vld [vmem:[#allocation5 + $0xf0] sm:$0xff]
    %v189 = vld [vmem:[#allocation5 + $0xf8] sm:$0xff]
    %v190 = vld [vmem:[#allocation5 + $0x100] sm:$0xff]
    %v191 = vld [vmem:[#allocation5 + $0x108] sm:$0xff]
    %v192 = vld [vmem:[#allocation5 + $0x110] sm:$0xff]
    %v193 = vld [vmem:[#allocation5 + $0x118] sm:$0xff]
    %v194 = vld [vmem:[#allocation5 + $0x120] sm:$0xff]
    %v195 = vld [vmem:[#allocation5 + $0x128] sm:$0xff]
    %v196 = vld [vmem:[#allocation5 + $0x130] sm:$0xff]
    %v197 = vld [vmem:[#allocation5 + $0x138] sm:$0xff]
    %v198 = vld [vmem:[#allocation5 + $0x140] sm:$0xff]
    %v199 = vld [vmem:[#allocation5 + $0x148] sm:$0xff]
    %v200 = vld [vmem:[#allocation5 + $0x150] sm:$0xff]
    %v201 = vld [vmem:[#allocation5 + $0x158] sm:$0xff]
    %v202 = vld [vmem:[#allocation5 + $0x160] sm:$0xff]
    %v203 = vld [vmem:[#allocation5 + $0x168] sm:$0xff]
    %v204 = vld [vmem:[#allocation5 + $0x170] sm:$0xff]
    %v205 = vld [vmem:[#allocation5 + $0x178] sm:$0xff]
    %v206 = vld [vmem:[#allocation5 + $0x180] sm:$0xff]
    %v207 = vld [vmem:[#allocation5 + $0x188] sm:$0xff]
    %v208 = vld [vmem:[#allocation5 + $0x190] sm:$0xff]
    %v209 = vld [vmem:[#allocation5 + $0x198] sm:$0xff]
    %v210 = vld [vmem:[#allocation5 + $0x1a0] sm:$0xff]
    %v211 = vld [vmem:[#allocation5 + $0x1a8] sm:$0xff]
    %v212 = vld [vmem:[#allocation5 + $0x1b0] sm:$0xff]
    %v213 = vld [vmem:[#allocation5 + $0x1b8] sm:$0xff]
    %v214 = vld [vmem:[#allocation5 + $0x1c0] sm:$0xff]
    %v215 = vld [vmem:[#allocation5 + $0x1c8] sm:$0xff]
    %v216 = vld [vmem:[#allocation5 + $0x1d0] sm:$0xff]
    %v217 = vld [vmem:[#allocation5 + $0x1d8] sm:$0xff]
    %v218 = vld [vmem:[#allocation5 + $0x1e0] sm:$0xff]
    %v219 = vld [vmem:[#allocation5 + $0x1e8] sm:$0xff]
    %v220 = vld [vmem:[#allocation5 + $0x1f0] sm:$0xff]
    %v221 = vld [vmem:[#allocation5 + $0x1f8] sm:$0xff]
    %v222 = vld [vmem:[#allocation5 + $0x200] sm:$0xff]
    %v223 = vld [vmem:[#allocation5 + $0x208] sm:$0xff]
    %v224 = vld [vmem:[#allocation5 + $0x210] sm:$0xff]
    %v225 = vld [vmem:[#allocation5 + $0x218] sm:$0xff]
    %v226 = vld [vmem:[#allocation5 + $0x220] sm:$0xff]
    %v227 = vld [vmem:[#allocation5 + $0x228] sm:$0xff]
    %v228 = vld [vmem:[#allocation5 + $0x230] sm:$0xff]
    %v229 = vld [vmem:[#allocation5 + $0x238] sm:$0xff]
    %v230 = vld [vmem:[#allocation5 + $0x240] sm:$0xff]
    %v231 = vld [vmem:[#allocation5 + $0x248] sm:$0xff]
    %v232 = vld [vmem:[#allocation5 + $0x250] sm:$0xff]
    %v233 = vld [vmem:[#allocation5 + $0x258] sm:$0xff]
    %v234 = vld [vmem:[#allocation5 + $0x260] sm:$0xff]
    %v235 = vld [vmem:[#allocation5 + $0x268] sm:$0xff]
    %v236 = vld [vmem:[#allocation5 + $0x270] sm:$0xff]
    %v237 = vld [vmem:[#allocation5 + $0x278] sm:$0xff]
    %v238 = vld [vmem:[#allocation5 + $0x280] sm:$0xff]
    %v239 = vld [vmem:[#allocation5 + $0x288] sm:$0xff]
    %v240 = vld [vmem:[#allocation5 + $0x290] sm:$0xff]
    %v241 = vld [vmem:[#allocation5 + $0x298] sm:$0xff]
    %v242 = vld [vmem:[#allocation5 + $0x2a0] sm:$0xff]
    %v243 = vld [vmem:[#allocation5 + $0x2a8] sm:$0xff]
    %v244 = vld [vmem:[#allocation5 + $0x2b0] sm:$0xff]
    %v245 = vld [vmem:[#allocation5 + $0x2b8] sm:$0xff]
    %v246 = vld [vmem:[#allocation5 + $0x2c0] sm:$0xff]
    %v247 = vld [vmem:[#allocation5 + $0x2c8] sm:$0xff]
    %v248 = vld [vmem:[#allocation5 + $0x2d0] sm:$0xff]
    %v249 = vld [vmem:[#allocation5 + $0x2d8] sm:$0xff]
    %v250 = vld [vmem:[#allocation5 + $0x2e0] sm:$0xff]
    %v251 = vld [vmem:[#allocation5 + $0x2e8] sm:$0xff]
    %v252 = vld [vmem:[#allocation5 + $0x2f0] sm:$0xff]
    %v253 = vld [vmem:[#allocation5 + $0x2f8] sm:$0xff]
    %v254 = vld [vmem:[#allocation5 + $0x300] sm:$0xff]
    %v255 = vld [vmem:[#allocation5 + $0x308] sm:$0xff]
    %v256 = vld [vmem:[#allocation5 + $0x310] sm:$0xff]
    %v257 = vld [vmem:[#allocation5 + $0x318] sm:$0xff]
    %v258 = vld [vmem:[#allocation5 + $0x320] sm:$0xff]
    %v259 = vld [vmem:[#allocation5 + $0x328] sm:$0xff]
    %v260 = vld [vmem:[#allocation5 + $0x330] sm:$0xff]
    %v261 = vld [vmem:[#allocation5 + $0x338] sm:$0xff]
    %v262 = vld [vmem:[#allocation5 + $0x340] sm:$0xff]
    %v263 = vld [vmem:[#allocation5 + $0x348] sm:$0xff]
    %v264 = vld [vmem:[#allocation5 + $0x350] sm:$0xff]
    %v265 = vld [vmem:[#allocation5 + $0x358] sm:$0xff]
    %v266 = vld [vmem:[#allocation5 + $0x360] sm:$0xff]
    %v267 = vld [vmem:[#allocation5 + $0x368] sm:$0xff]
    %v268 = vld [vmem:[#allocation5 + $0x370] sm:$0xff]
    %v269 = vld [vmem:[#allocation5 + $0x378] sm:$0xff]
    %v270 = vld [vmem:[#allocation5 + $0x380] sm:$0xff]
    %v271 = vld [vmem:[#allocation5 + $0x388] sm:$0xff]
    %v272 = vld [vmem:[#allocation5 + $0x390] sm:$0xff]
    %v273 = vld [vmem:[#allocation5 + $0x398] sm:$0xff]
    %v274 = vld [vmem:[#allocation5 + $0x3a0] sm:$0xff]
    %v275 = vld [vmem:[#allocation5 + $0x3a8] sm:$0xff]
    %v276 = vld [vmem:[#allocation5 + $0x3b0] sm:$0xff]
    %v277 = vld [vmem:[#allocation5 + $0x3b8] sm:$0xff]
    %v278 = vld [vmem:[#allocation5 + $0x3c0] sm:$0xff]
    %v279 = vld [vmem:[#allocation5 + $0x3c8] sm:$0xff]
    %v280 = vld [vmem:[#allocation5 + $0x3d0] sm:$0xff]
    %v281 = vld [vmem:[#allocation5 + $0x3d8] sm:$0xff]
    %v282 = vld [vmem:[#allocation5 + $0x3e0] sm:$0xff]
    %v283 = vld [vmem:[#allocation5 + $0x3e8] sm:$0xff]
    %v284 = vld [vmem:[#allocation5 + $0x3f0] sm:$0xff]
    %v285 = vld [vmem:[#allocation5 + $0x3f8] sm:$0xff]
    %v286 = vunpack.c.l.s8.bf16 %v158
    %v287 = vunpack.c.l.s8.bf16 %v159
    %v288 = vunpack.c.l.s8.bf16 %v160
    %v289 = vunpack.c.l.s8.bf16 %v161
    %v290 = vunpack.c.l.s8.bf16 %v162
    %v291 = vunpack.c.l.s8.bf16 %v163
    %v292 = vunpack.c.l.s8.bf16 %v164
    %v293 = vunpack.c.l.s8.bf16 %v165
    %v294 = vunpack.c.h.s8.bf16 %v158
    %v295 = vunpack.c.h.s8.bf16 %v159
    %v296 = vunpack.c.h.s8.bf16 %v160
    %v297 = vunpack.c.h.s8.bf16 %v161
    %v298 = vunpack.c.h.s8.bf16 %v162
    %v299 = vunpack.c.h.s8.bf16 %v163
    %v300 = vunpack.c.h.s8.bf16 %v164
    %v301 = vunpack.c.h.s8.bf16 %v165
    %v302 = vunpack.c.l.s8.bf16 %v166
    %v303 = vunpack.c.l.s8.bf16 %v167
    %v304 = vunpack.c.l.s8.bf16 %v168
    %v305 = vunpack.c.l.s8.bf16 %v169
    %v306 = vunpack.c.l.s8.bf16 %v170
    %v307 = vunpack.c.l.s8.bf16 %v171
    %v308 = vunpack.c.l.s8.bf16 %v172
    %v309 = vunpack.c.l.s8.bf16 %v173
    %v310 = vunpack.c.h.s8.bf16 %v166
    %v311 = vunpack.c.h.s8.bf16 %v167
    %v312 = vunpack.c.h.s8.bf16 %v168
    %v313 = vunpack.c.h.s8.bf16 %v169
    %v314 = vunpack.c.h.s8.bf16 %v170
    %v315 = vunpack.c.h.s8.bf16 %v171
    %v316 = vunpack.c.h.s8.bf16 %v172
    %v317 = vunpack.c.h.s8.bf16 %v173
    %v318 = vunpack.c.l.s8.bf16 %v174
    %v319 = vunpack.c.l.s8.bf16 %v175
    %v320 = vunpack.c.l.s8.bf16 %v176
    %v321 = vunpack.c.l.s8.bf16 %v177
    %v322 = vunpack.c.l.s8.bf16 %v178
    %v323 = vunpack.c.l.s8.bf16 %v179
    %v324 = vunpack.c.l.s8.bf16 %v180
    %v325 = vunpack.c.l.s8.bf16 %v181
    %v326 = vunpack.c.h.s8.bf16 %v174
    %v327 = vunpack.c.h.s8.bf16 %v175
    %v328 = vunpack.c.h.s8.bf16 %v176
    %v329 = vunpack.c.h.s8.bf16 %v177
    %v330 = vunpack.c.h.s8.bf16 %v178
    %v331 = vunpack.c.h.s8.bf16 %v179
    %v332 = vunpack.c.h.s8.bf16 %v180
    %v333 = vunpack.c.h.s8.bf16 %v181
    %v334 = vunpack.c.l.s8.bf16 %v182
    %v335 = vunpack.c.l.s8.bf16 %v183
    %v336 = vunpack.c.l.s8.bf16 %v184
    %v337 = vunpack.c.l.s8.bf16 %v185
    %v338 = vunpack.c.l.s8.bf16 %v186
    %v339 = vunpack.c.l.s8.bf16 %v187
    %v340 = vunpack.c.l.s8.bf16 %v188
    %v341 = vunpack.c.l.s8.bf16 %v189
    %v342 = vunpack.c.h.s8.bf16 %v182
    %v343 = vunpack.c.h.s8.bf16 %v183
    %v344 = vunpack.c.h.s8.bf16 %v184
    %v345 = vunpack.c.h.s8.bf16 %v185
    %v346 = vunpack.c.h.s8.bf16 %v186
    %v347 = vunpack.c.h.s8.bf16 %v187
    %v348 = vunpack.c.h.s8.bf16 %v188
    %v349 = vunpack.c.h.s8.bf16 %v189
    %v350 = vunpack.c.l.s8.bf16 %v190
    %v351 = vunpack.c.l.s8.bf16 %v191
    %v352 = vunpack.c.l.s8.bf16 %v192
    %v353 = vunpack.c.l.s8.bf16 %v193
    %v354 = vunpack.c.l.s8.bf16 %v194
    %v355 = vunpack.c.l.s8.bf16 %v195
    %v356 = vunpack.c.l.s8.bf16 %v196
    %v357 = vunpack.c.l.s8.bf16 %v197
    %v358 = vunpack.c.h.s8.bf16 %v190
    %v359 = vunpack.c.h.s8.bf16 %v191
    %v360 = vunpack.c.h.s8.bf16 %v192
    %v361 = vunpack.c.h.s8.bf16 %v193
    %v362 = vunpack.c.h.s8.bf16 %v194
    %v363 = vunpack.c.h.s8.bf16 %v195
    %v364 = vunpack.c.h.s8.bf16 %v196
    %v365 = vunpack.c.h.s8.bf16 %v197
    %v366 = vunpack.c.l.s8.bf16 %v198
    %v367 = vunpack.c.l.s8.bf16 %v199
    %v368 = vunpack.c.l.s8.bf16 %v200
    %v369 = vunpack.c.l.s8.bf16 %v201
    %v370 = vunpack.c.l.s8.bf16 %v202
    %v371 = vunpack.c.l.s8.bf16 %v203
    %v372 = vunpack.c.l.s8.bf16 %v204
    %v373 = vunpack.c.l.s8.bf16 %v205
    %v374 = vunpack.c.h.s8.bf16 %v198
    %v375 = vunpack.c.h.s8.bf16 %v199
    %v376 = vunpack.c.h.s8.bf16 %v200
    %v377 = vunpack.c.h.s8.bf16 %v201
    %v378 = vunpack.c.h.s8.bf16 %v202
    %v379 = vunpack.c.h.s8.bf16 %v203
    %v380 = vunpack.c.h.s8.bf16 %v204
    %v381 = vunpack.c.h.s8.bf16 %v205
    %v382 = vunpack.c.l.s8.bf16 %v206
    %v383 = vunpack.c.l.s8.bf16 %v207
    %v384 = vunpack.c.l.s8.bf16 %v208
    %v385 = vunpack.c.l.s8.bf16 %v209
    %v386 = vunpack.c.l.s8.bf16 %v210
    %v387 = vunpack.c.l.s8.bf16 %v211
    %v388 = vunpack.c.l.s8.bf16 %v212
    %v389 = vunpack.c.l.s8.bf16 %v213
    %v390 = vunpack.c.h.s8.bf16 %v206
    %v391 = vunpack.c.h.s8.bf16 %v207
    %v392 = vunpack.c.h.s8.bf16 %v208
    %v393 = vunpack.c.h.s8.bf16 %v209
    %v394 = vunpack.c.h.s8.bf16 %v210
    %v395 = vunpack.c.h.s8.bf16 %v211
    %v396 = vunpack.c.h.s8.bf16 %v212
    %v397 = vunpack.c.h.s8.bf16 %v213
    %v398 = vunpack.c.l.s8.bf16 %v214
    %v399 = vunpack.c.l.s8.bf16 %v215
    %v400 = vunpack.c.l.s8.bf16 %v216
    %v401 = vunpack.c.l.s8.bf16 %v217
    %v402 = vunpack.c.l.s8.bf16 %v218
    %v403 = vunpack.c.l.s8.bf16 %v219
    %v404 = vunpack.c.l.s8.bf16 %v220
    %v405 = vunpack.c.l.s8.bf16 %v221
    %v406 = vunpack.c.h.s8.bf16 %v214
    %v407 = vunpack.c.h.s8.bf16 %v215
    %v408 = vunpack.c.h.s8.bf16 %v216
    %v409 = vunpack.c.h.s8.bf16 %v217
    %v410 = vunpack.c.h.s8.bf16 %v218
    %v411 = vunpack.c.h.s8.bf16 %v219
    %v412 = vunpack.c.h.s8.bf16 %v220
    %v413 = vunpack.c.h.s8.bf16 %v221
    %v414 = vunpack.c.l.s8.bf16 %v222
    %v415 = vunpack.c.l.s8.bf16 %v223
    %v416 = vunpack.c.l.s8.bf16 %v224
    %v417 = vunpack.c.l.s8.bf16 %v225
    %v418 = vunpack.c.l.s8.bf16 %v226
    %v419 = vunpack.c.l.s8.bf16 %v227
    %v420 = vunpack.c.l.s8.bf16 %v228
    %v421 = vunpack.c.l.s8.bf16 %v229
    %v422 = vunpack.c.h.s8.bf16 %v222
    %v423 = vunpack.c.h.s8.bf16 %v223
    %v424 = vunpack.c.h.s8.bf16 %v224
    %v425 = vunpack.c.h.s8.bf16 %v225
    %v426 = vunpack.c.h.s8.bf16 %v226
    %v427 = vunpack.c.h.s8.bf16 %v227
    %v428 = vunpack.c.h.s8.bf16 %v228
    %v429 = vunpack.c.h.s8.bf16 %v229
    %v430 = vunpack.c.l.s8.bf16 %v230
    %v431 = vunpack.c.l.s8.bf16 %v231
    %v432 = vunpack.c.l.s8.bf16 %v232
    %v433 = vunpack.c.l.s8.bf16 %v233
    %v434 = vunpack.c.l.s8.bf16 %v234
    %v435 = vunpack.c.l.s8.bf16 %v235
    %v436 = vunpack.c.l.s8.bf16 %v236
    %v437 = vunpack.c.l.s8.bf16 %v237
    %v438 = vunpack.c.h.s8.bf16 %v230
    %v439 = vunpack.c.h.s8.bf16 %v231
    %v440 = vunpack.c.h.s8.bf16 %v232
    %v441 = vunpack.c.h.s8.bf16 %v233
    %v442 = vunpack.c.h.s8.bf16 %v234
    %v443 = vunpack.c.h.s8.bf16 %v235
    %v444 = vunpack.c.h.s8.bf16 %v236
    %v445 = vunpack.c.h.s8.bf16 %v237
    %v446 = vunpack.c.l.s8.bf16 %v238
    %v447 = vunpack.c.l.s8.bf16 %v239
    %v448 = vunpack.c.l.s8.bf16 %v240
    %v449 = vunpack.c.l.s8.bf16 %v241
    %v450 = vunpack.c.l.s8.bf16 %v242
    %v451 = vunpack.c.l.s8.bf16 %v243
    %v452 = vunpack.c.l.s8.bf16 %v244
    %v453 = vunpack.c.l.s8.bf16 %v245
    %v454 = vunpack.c.h.s8.bf16 %v238
    %v455 = vunpack.c.h.s8.bf16 %v239
    %v456 = vunpack.c.h.s8.bf16 %v240
    %v457 = vunpack.c.h.s8.bf16 %v241
    %v458 = vunpack.c.h.s8.bf16 %v242
    %v459 = vunpack.c.h.s8.bf16 %v243
    %v460 = vunpack.c.h.s8.bf16 %v244
    %v461 = vunpack.c.h.s8.bf16 %v245
    %v462 = vunpack.c.l.s8.bf16 %v246
    %v463 = vunpack.c.l.s8.bf16 %v247
    %v464 = vunpack.c.l.s8.bf16 %v248
    %v465 = vunpack.c.l.s8.bf16 %v249
    %v466 = vunpack.c.l.s8.bf16 %v250
    %v467 = vunpack.c.l.s8.bf16 %v251
    %v468 = vunpack.c.l.s8.bf16 %v252
    %v469 = vunpack.c.l.s8.bf16 %v253
    %v470 = vunpack.c.h.s8.bf16 %v246
    %v471 = vunpack.c.h.s8.bf16 %v247
    %v472 = vunpack.c.h.s8.bf16 %v248
    %v473 = vunpack.c.h.s8.bf16 %v249
    %v474 = vunpack.c.h.s8.bf16 %v250
    %v475 = vunpack.c.h.s8.bf16 %v251
    %v476 = vunpack.c.h.s8.bf16 %v252
    %v477 = vunpack.c.h.s8.bf16 %v253
    %v478 = vunpack.c.l.s8.bf16 %v254
    %v479 = vunpack.c.l.s8.bf16 %v255
    %v480 = vunpack.c.l.s8.bf16 %v256
    %v481 = vunpack.c.l.s8.bf16 %v257
    %v482 = vunpack.c.l.s8.bf16 %v258
    %v483 = vunpack.c.l.s8.bf16 %v259
    %v484 = vunpack.c.l.s8.bf16 %v260
    %v485 = vunpack.c.l.s8.bf16 %v261
    %v486 = vunpack.c.h.s8.bf16 %v254
    %v487 = vunpack.c.h.s8.bf16 %v255
    %v488 = vunpack.c.h.s8.bf16 %v256
    %v489 = vunpack.c.h.s8.bf16 %v257
    %v490 = vunpack.c.h.s8.bf16 %v258
    %v491 = vunpack.c.h.s8.bf16 %v259
    %v492 = vunpack.c.h.s8.bf16 %v260
    %v493 = vunpack.c.h.s8.bf16 %v261
    %v494 = vunpack.c.l.s8.bf16 %v262
    %v495 = vunpack.c.l.s8.bf16 %v263
    %v496 = vunpack.c.l.s8.bf16 %v264
    %v497 = vunpack.c.l.s8.bf16 %v265
    %v498 = vunpack.c.l.s8.bf16 %v266
    %v499 = vunpack.c.l.s8.bf16 %v267
    %v500 = vunpack.c.l.s8.bf16 %v268
    %v501 = vunpack.c.l.s8.bf16 %v269
    %v502 = vunpack.c.h.s8.bf16 %v262
    %v503 = vunpack.c.h.s8.bf16 %v263
    %v504 = vunpack.c.h.s8.bf16 %v264
    %v505 = vunpack.c.h.s8.bf16 %v265
    %v506 = vunpack.c.h.s8.bf16 %v266
    %v507 = vunpack.c.h.s8.bf16 %v267
    %v508 = vunpack.c.h.s8.bf16 %v268
    %v509 = vunpack.c.h.s8.bf16 %v269
    %v510 = vunpack.c.l.s8.bf16 %v270
    %v511 = vunpack.c.l.s8.bf16 %v271
    %v512 = vunpack.c.l.s8.bf16 %v272
    %v513 = vunpack.c.l.s8.bf16 %v273
    %v514 = vunpack.c.l.s8.bf16 %v274
    %v515 = vunpack.c.l.s8.bf16 %v275
    %v516 = vunpack.c.l.s8.bf16 %v276
    %v517 = vunpack.c.l.s8.bf16 %v277
    %v518 = vunpack.c.h.s8.bf16 %v270
    %v519 = vunpack.c.h.s8.bf16 %v271
    %v520 = vunpack.c.h.s8.bf16 %v272
    %v521 = vunpack.c.h.s8.bf16 %v273
    %v522 = vunpack.c.h.s8.bf16 %v274
    %v523 = vunpack.c.h.s8.bf16 %v275
    %v524 = vunpack.c.h.s8.bf16 %v276
    %v525 = vunpack.c.h.s8.bf16 %v277
    %v526 = vunpack.c.l.s8.bf16 %v278
    %v527 = vunpack.c.l.s8.bf16 %v279
    %v528 = vunpack.c.l.s8.bf16 %v280
    %v529 = vunpack.c.l.s8.bf16 %v281
    %v530 = vunpack.c.l.s8.bf16 %v282
    %v531 = vunpack.c.l.s8.bf16 %v283
    %v532 = vunpack.c.l.s8.bf16 %v284
    %v533 = vunpack.c.l.s8.bf16 %v285
    %v534 = vunpack.c.h.s8.bf16 %v278
    %v535 = vunpack.c.h.s8.bf16 %v279
    %v536 = vunpack.c.h.s8.bf16 %v280
    %v537 = vunpack.c.h.s8.bf16 %v281
    %v538 = vunpack.c.h.s8.bf16 %v282
    %v539 = vunpack.c.h.s8.bf16 %v283
    %v540 = vunpack.c.h.s8.bf16 %v284
    %v541 = vunpack.c.h.s8.bf16 %v285
    %v544 = vunpack.c.l.s4 1966171168
    %v545 = vunpack.c.0.s8 %v544
    %v546 = vlaneseq
    %v547 = vshrl.u32 %v546, 7
    %v548 = vsub.s32 %v545, %v547
    %v549 = vrot.slane %v157, %v548
    %v550 = vcombine.high %v549, %v549
    %v552 = vunpack.c.l.s4 1966171168
    %v553 = vunpack.c.0.s8 %v552
    %v554 = vlaneseq
    %v555 = vshrl.u32 %v554, 7
    %v556 = vsub.s32 %v553, %v555
    %v557 = vrot.slane %v549, %v556
    %v559 = vunpack.c.l.s4 1966171168
    %v560 = vunpack.c.0.s8 %v559
    %v561 = vlaneseq
    %v562 = vshrl.u32 %v561, 7
    %v563 = vsub.s32 %v560, %v562
    %v564 = vrot.slane %v550, %v563
    %v565 = vcombine.high %v557, %v557
    %v566 = vcombine.high %v564, %v564
    %571 = vmatprep.subr.bf16.mxu0 %v343
    %572 = vmatpush1.bf16.msra.mxu0 %v342
    %573 = vmatprep.subr.bf16.mxu0 %v335
    %574 = vmatpush1.bf16.msra.mxu0 %v334
    %575 = vmatprep.subr.bf16.mxu0 %v327
    %576 = vmatpush1.bf16.msra.mxu0 %v326
    %577 = vmatprep.subr.bf16.mxu0 %v319
    %578 = vmatpush1.bf16.msra.mxu0 %v318
    %579 = vmatprep.subr.bf16.mxu0 %v311
    %580 = vmatpush1.bf16.msra.mxu0 %v310
    %581 = vmatprep.subr.bf16.mxu0 %v303
    %582 = vmatpush1.bf16.msra.mxu0 %v302
    %583 = vmatprep.subr.bf16.mxu0 %v295
    %584 = vmatpush1.bf16.msra.mxu0 %v294
    %585 = vmatprep.subr.bf16.mxu0 %v287
    %586 = vmatpush1.bf16.msra.mxu0 %v286
    %587 = vmatprep.subr.bf16.mxu0 %v407
    %588 = vmatpush2.bf16.msra.mxu0 %v406
    %589 = vmatprep.subr.bf16.mxu0 %v399
    %590 = vmatpush2.bf16.msra.mxu0 %v398
    %591 = vmatprep.subr.bf16.mxu0 %v391
    %592 = vmatpush2.bf16.msra.mxu0 %v390
    %593 = vmatprep.subr.bf16.mxu0 %v383
    %594 = vmatpush2.bf16.msra.mxu0 %v382
    %595 = vmatprep.subr.bf16.mxu0 %v375
    %596 = vmatpush2.bf16.msra.mxu0 %v374
    %597 = vmatprep.subr.bf16.mxu0 %v367
    %598 = vmatpush2.bf16.msra.mxu0 %v366
    %599 = vmatprep.subr.bf16.mxu0 %v359
    %600 = vmatpush2.bf16.msra.mxu0 %v358
    %601 = vmatprep.subr.bf16.mxu0 %v351
    %602 = vmatpush2.bf16.msra.mxu0 %v350
    %603 = vmatprep.mubr.bf16.mxu0 %v564
    %604 = vmatmul.mubr.bf16.gmra.mxu0 %v557
    %v605 = vpop.f32.mrf.mxu0
    %v606 = vadd.f32 0.0, %v605
    %v607 = vpop.f32.mrf.mxu0
    %v608 = vadd.f32 0.0, %v607
    %v609 = vpop.f32.mrf.mxu0
    %v610 = vpop.f32.mrf.mxu0
    %611 = vdwg.mxu0
    %612 = vmatprep.subr.bf16.mxu0 %v471
    %613 = vmatpush1.bf16.msra.mxu0 %v470
    %614 = vmatprep.subr.bf16.mxu0 %v463
    %615 = vmatpush1.bf16.msra.mxu0 %v462
    %616 = vmatprep.subr.bf16.mxu0 %v455
    %617 = vmatpush1.bf16.msra.mxu0 %v454
    %618 = vmatprep.subr.bf16.mxu0 %v447
    %619 = vmatpush1.bf16.msra.mxu0 %v446
    %620 = vmatprep.subr.bf16.mxu0 %v439
    %621 = vmatpush1.bf16.msra.mxu0 %v438
    %622 = vmatprep.subr.bf16.mxu0 %v431
    %623 = vmatpush1.bf16.msra.mxu0 %v430
    %624 = vmatprep.subr.bf16.mxu0 %v423
    %625 = vmatpush1.bf16.msra.mxu0 %v422
    %626 = vmatprep.subr.bf16.mxu0 %v415
    %627 = vmatpush1.bf16.msra.mxu0 %v414
    %628 = vmatprep.subr.bf16.mxu0 %v535
    %629 = vmatpush2.bf16.msra.mxu0 %v534
    %630 = vmatprep.subr.bf16.mxu0 %v527
    %631 = vmatpush2.bf16.msra.mxu0 %v526
    %632 = vmatprep.subr.bf16.mxu0 %v519
    %633 = vmatpush2.bf16.msra.mxu0 %v518
    %634 = vmatprep.subr.bf16.mxu0 %v511
    %635 = vmatpush2.bf16.msra.mxu0 %v510
    %636 = vmatprep.subr.bf16.mxu0 %v503
    %637 = vmatpush2.bf16.msra.mxu0 %v502
    %638 = vmatprep.subr.bf16.mxu0 %v495
    %639 = vmatpush2.bf16.msra.mxu0 %v494
    %640 = vmatprep.subr.bf16.mxu0 %v487
    %641 = vmatpush2.bf16.msra.mxu0 %v486
    %642 = vmatprep.subr.bf16.mxu0 %v479
    %643 = vmatpush2.bf16.msra.mxu0 %v478
    %644 = vmatprep.mubr.bf16.mxu0 %v566
    %645 = vmatmul.mubr.bf16.gmra.mxu0 %v565
    %v646 = vpop.f32.mrf.mxu0
    %v647 = vadd.f32 %v606, %v646
    %v648 = vpop.f32.mrf.mxu0
    %v649 = vadd.f32 %v608, %v648
    %v650 = vpop.f32.mrf.mxu0
    %v651 = vpop.f32.mrf.mxu0
    %652 = vdwg.mxu0
    %653 = vmatprep.subr.bf16.mxu0 %v345
    %654 = vmatpush1.bf16.msra.mxu0 %v344
    %655 = vmatprep.subr.bf16.mxu0 %v337
    %656 = vmatpush1.bf16.msra.mxu0 %v336
    %657 = vmatprep.subr.bf16.mxu0 %v329
    %658 = vmatpush1.bf16.msra.mxu0 %v328
    %659 = vmatprep.subr.bf16.mxu0 %v321
    %660 = vmatpush1.bf16.msra.mxu0 %v320
    %661 = vmatprep.subr.bf16.mxu0 %v313
    %662 = vmatpush1.bf16.msra.mxu0 %v312
    %663 = vmatprep.subr.bf16.mxu0 %v305
    %664 = vmatpush1.bf16.msra.mxu0 %v304
    %665 = vmatprep.subr.bf16.mxu0 %v297
    %666 = vmatpush1.bf16.msra.mxu0 %v296
    %667 = vmatprep.subr.bf16.mxu0 %v289
    %668 = vmatpush1.bf16.msra.mxu0 %v288
    %669 = vmatprep.subr.bf16.mxu0 %v409
    %670 = vmatpush2.bf16.msra.mxu0 %v408
    %671 = vmatprep.subr.bf16.mxu0 %v401
    %672 = vmatpush2.bf16.msra.mxu0 %v400
    %673 = vmatprep.subr.bf16.mxu0 %v393
    %674 = vmatpush2.bf16.msra.mxu0 %v392
    %675 = vmatprep.subr.bf16.mxu0 %v385
    %676 = vmatpush2.bf16.msra.mxu0 %v384
    %677 = vmatprep.subr.bf16.mxu0 %v377
    %678 = vmatpush2.bf16.msra.mxu0 %v376
    %679 = vmatprep.subr.bf16.mxu0 %v369
    %680 = vmatpush2.bf16.msra.mxu0 %v368
    %681 = vmatprep.subr.bf16.mxu0 %v361
    %682 = vmatpush2.bf16.msra.mxu0 %v360
    %683 = vmatprep.subr.bf16.mxu0 %v353
    %684 = vmatpush2.bf16.msra.mxu0 %v352
    %685 = vmatprep.mubr.bf16.mxu0 %v564
    %686 = vmatmul.mubr.bf16.gmra.mxu0 %v557
    %v687 = vpop.f32.mrf.mxu0
    %v688 = vadd.f32 0.0, %v687
    %v689 = vpop.f32.mrf.mxu0
    %v690 = vadd.f32 0.0, %v689
    %v691 = vpop.f32.mrf.mxu0
    %v692 = vpop.f32.mrf.mxu0
    %693 = vdwg.mxu0
    %694 = vmatprep.subr.bf16.mxu0 %v473
    %695 = vmatpush1.bf16.msra.mxu0 %v472
    %696 = vmatprep.subr.bf16.mxu0 %v465
    %697 = vmatpush1.bf16.msra.mxu0 %v464
    %698 = vmatprep.subr.bf16.mxu0 %v457
    %699 = vmatpush1.bf16.msra.mxu0 %v456
    %700 = vmatprep.subr.bf16.mxu0 %v449
    %701 = vmatpush1.bf16.msra.mxu0 %v448
    %702 = vmatprep.subr.bf16.mxu0 %v441
    %703 = vmatpush1.bf16.msra.mxu0 %v440
    %704 = vmatprep.subr.bf16.mxu0 %v433
    %705 = vmatpush1.bf16.msra.mxu0 %v432
    %706 = vmatprep.subr.bf16.mxu0 %v425
    %707 = vmatpush1.bf16.msra.mxu0 %v424
    %708 = vmatprep.subr.bf16.mxu0 %v417
    %709 = vmatpush1.bf16.msra.mxu0 %v416
    %710 = vmatprep.subr.bf16.mxu0 %v537
    %711 = vmatpush2.bf16.msra.mxu0 %v536
    %712 = vmatprep.subr.bf16.mxu0 %v529
    %713 = vmatpush2.bf16.msra.mxu0 %v528
    %714 = vmatprep.subr.bf16.mxu0 %v521
    %715 = vmatpush2.bf16.msra.mxu0 %v520
    %716 = vmatprep.subr.bf16.mxu0 %v513
    %717 = vmatpush2.bf16.msra.mxu0 %v512
    %718 = vmatprep.subr.bf16.mxu0 %v505
    %719 = vmatpush2.bf16.msra.mxu0 %v504
    %720 = vmatprep.subr.bf16.mxu0 %v497
    %721 = vmatpush2.bf16.msra.mxu0 %v496
    %722 = vmatprep.subr.bf16.mxu0 %v489
    %723 = vmatpush2.bf16.msra.mxu0 %v488
    %724 = vmatprep.subr.bf16.mxu0 %v481
    %725 = vmatpush2.bf16.msra.mxu0 %v480
    %726 = vmatprep.mubr.bf16.mxu0 %v566
    %727 = vmatmul.mubr.bf16.gmra.mxu0 %v565
    %v728 = vpop.f32.mrf.mxu0
    %v729 = vadd.f32 %v688, %v728
    %v730 = vpop.f32.mrf.mxu0
    %v731 = vadd.f32 %v690, %v730
    %v732 = vpop.f32.mrf.mxu0
    %v733 = vpop.f32.mrf.mxu0
    %734 = vdwg.mxu0
    %735 = vmatprep.subr.bf16.mxu0 %v347
    %736 = vmatpush1.bf16.msra.mxu0 %v346
    %737 = vmatprep.subr.bf16.mxu0 %v339
    %738 = vmatpush1.bf16.msra.mxu0 %v338
    %739 = vmatprep.subr.bf16.mxu0 %v331
    %740 = vmatpush1.bf16.msra.mxu0 %v330
    %741 = vmatprep.subr.bf16.mxu0 %v323
    %742 = vmatpush1.bf16.msra.mxu0 %v322
    %743 = vmatprep.subr.bf16.mxu0 %v315
    %744 = vmatpush1.bf16.msra.mxu0 %v314
    %745 = vmatprep.subr.bf16.mxu0 %v307
    %746 = vmatpush1.bf16.msra.mxu0 %v306
    %747 = vmatprep.subr.bf16.mxu0 %v299
    %748 = vmatpush1.bf16.msra.mxu0 %v298
    %749 = vmatprep.subr.bf16.mxu0 %v291
    %750 = vmatpush1.bf16.msra.mxu0 %v290
    %751 = vmatprep.subr.bf16.mxu0 %v411
    %752 = vmatpush2.bf16.msra.mxu0 %v410
    %753 = vmatprep.subr.bf16.mxu0 %v403
    %754 = vmatpush2.bf16.msra.mxu0 %v402
    %755 = vmatprep.subr.bf16.mxu0 %v395
    %756 = vmatpush2.bf16.msra.mxu0 %v394
    %757 = vmatprep.subr.bf16.mxu0 %v387
    %758 = vmatpush2.bf16.msra.mxu0 %v386
    %759 = vmatprep.subr.bf16.mxu0 %v379
    %760 = vmatpush2.bf16.msra.mxu0 %v378
    %761 = vmatprep.subr.bf16.mxu0 %v371
    %762 = vmatpush2.bf16.msra.mxu0 %v370
    %763 = vmatprep.subr.bf16.mxu0 %v363
    %764 = vmatpush2.bf16.msra.mxu0 %v362
    %765 = vmatprep.subr.bf16.mxu0 %v355
    %766 = vmatpush2.bf16.msra.mxu0 %v354
    %767 = vmatprep.mubr.bf16.mxu0 %v564
    %768 = vmatmul.mubr.bf16.gmra.mxu0 %v557
    %v769 = vpop.f32.mrf.mxu0
    %v770 = vadd.f32 0.0, %v769
    %v771 = vpop.f32.mrf.mxu0
    %v772 = vadd.f32 0.0, %v771
    %v773 = vpop.f32.mrf.mxu0
    %v774 = vpop.f32.mrf.mxu0
    %775 = vdwg.mxu0
    %776 = vmatprep.subr.bf16.mxu0 %v475
    %777 = vmatpush1.bf16.msra.mxu0 %v474
    %778 = vmatprep.subr.bf16.mxu0 %v467
    %779 = vmatpush1.bf16.msra.mxu0 %v466
    %780 = vmatprep.subr.bf16.mxu0 %v459
    %781 = vmatpush1.bf16.msra.mxu0 %v458
    %782 = vmatprep.subr.bf16.mxu0 %v451
    %783 = vmatpush1.bf16.msra.mxu0 %v450
    %784 = vmatprep.subr.bf16.mxu0 %v443
    %785 = vmatpush1.bf16.msra.mxu0 %v442
    %786 = vmatprep.subr.bf16.mxu0 %v435
    %787 = vmatpush1.bf16.msra.mxu0 %v434
    %788 = vmatprep.subr.bf16.mxu0 %v427
    %789 = vmatpush1.bf16.msra.mxu0 %v426
    %790 = vmatprep.subr.bf16.mxu0 %v419
    %791 = vmatpush1.bf16.msra.mxu0 %v418
    %792 = vmatprep.subr.bf16.mxu0 %v539
    %793 = vmatpush2.bf16.msra.mxu0 %v538
    %794 = vmatprep.subr.bf16.mxu0 %v531
    %795 = vmatpush2.bf16.msra.mxu0 %v530
    %796 = vmatprep.subr.bf16.mxu0 %v523
    %797 = vmatpush2.bf16.msra.mxu0 %v522
    %798 = vmatprep.subr.bf16.mxu0 %v515
    %799 = vmatpush2.bf16.msra.mxu0 %v514
    %800 = vmatprep.subr.bf16.mxu0 %v507
    %801 = vmatpush2.bf16.msra.mxu0 %v506
    %802 = vmatprep.subr.bf16.mxu0 %v499
    %803 = vmatpush2.bf16.msra.mxu0 %v498
    %804 = vmatprep.subr.bf16.mxu0 %v491
    %805 = vmatpush2.bf16.msra.mxu0 %v490
    %806 = vmatprep.subr.bf16.mxu0 %v483
    %807 = vmatpush2.bf16.msra.mxu0 %v482
    %808 = vmatprep.mubr.bf16.mxu0 %v566
    %809 = vmatmul.mubr.bf16.gmra.mxu0 %v565
    %v810 = vpop.f32.mrf.mxu0
    %v811 = vadd.f32 %v770, %v810
    %v812 = vpop.f32.mrf.mxu0
    %v813 = vadd.f32 %v772, %v812
    %v814 = vpop.f32.mrf.mxu0
    %v815 = vpop.f32.mrf.mxu0
    %816 = vdwg.mxu0
    %817 = vmatprep.subr.bf16.mxu0 %v349
    %818 = vmatpush1.bf16.msra.mxu0 %v348
    %819 = vmatprep.subr.bf16.mxu0 %v341
    %820 = vmatpush1.bf16.msra.mxu0 %v340
    %821 = vmatprep.subr.bf16.mxu0 %v333
    %822 = vmatpush1.bf16.msra.mxu0 %v332
    %823 = vmatprep.subr.bf16.mxu0 %v325
    %824 = vmatpush1.bf16.msra.mxu0 %v324
    %825 = vmatprep.subr.bf16.mxu0 %v317
    %826 = vmatpush1.bf16.msra.mxu0 %v316
    %827 = vmatprep.subr.bf16.mxu0 %v309
    %828 = vmatpush1.bf16.msra.mxu0 %v308
    %829 = vmatprep.subr.bf16.mxu0 %v301
    %830 = vmatpush1.bf16.msra.mxu0 %v300
    %831 = vmatprep.subr.bf16.mxu0 %v293
    %832 = vmatpush1.bf16.msra.mxu0 %v292
    %833 = vmatprep.subr.bf16.mxu0 %v413
    %834 = vmatpush2.bf16.msra.mxu0 %v412
    %835 = vmatprep.subr.bf16.mxu0 %v405
    %836 = vmatpush2.bf16.msra.mxu0 %v404
    %837 = vmatprep.subr.bf16.mxu0 %v397
    %838 = vmatpush2.bf16.msra.mxu0 %v396
    %839 = vmatprep.subr.bf16.mxu0 %v389
    %840 = vmatpush2.bf16.msra.mxu0 %v388
    %841 = vmatprep.subr.bf16.mxu0 %v381
    %842 = vmatpush2.bf16.msra.mxu0 %v380
    %843 = vmatprep.subr.bf16.mxu0 %v373
    %844 = vmatpush2.bf16.msra.mxu0 %v372
    %845 = vmatprep.subr.bf16.mxu0 %v365
    %846 = vmatpush2.bf16.msra.mxu0 %v364
    %847 = vmatprep.subr.bf16.mxu0 %v357
    %848 = vmatpush2.bf16.msra.mxu0 %v356
    %849 = vmatprep.mubr.bf16.mxu0 %v564
    %850 = vmatmul.mubr.bf16.gmra.mxu0 %v557
    %v851 = vpop.f32.mrf.mxu0
    %v852 = vadd.f32 0.0, %v851
    %v853 = vpop.f32.mrf.mxu0
    %v854 = vadd.f32 0.0, %v853
    %v855 = vpop.f32.mrf.mxu0
    %v856 = vpop.f32.mrf.mxu0
    %857 = vdwg.mxu0
    %858 = vmatprep.subr.bf16.mxu0 %v477
    %859 = vmatpush1.bf16.msra.mxu0 %v476
    %860 = vmatprep.subr.bf16.mxu0 %v469
    %861 = vmatpush1.bf16.msra.mxu0 %v468
    %862 = vmatprep.subr.bf16.mxu0 %v461
    %863 = vmatpush1.bf16.msra.mxu0 %v460
    %864 = vmatprep.subr.bf16.mxu0 %v453
    %865 = vmatpush1.bf16.msra.mxu0 %v452
    %866 = vmatprep.subr.bf16.mxu0 %v445
    %867 = vmatpush1.bf16.msra.mxu0 %v444
    %868 = vmatprep.subr.bf16.mxu0 %v437
    %869 = vmatpush1.bf16.msra.mxu0 %v436
    %870 = vmatprep.subr.bf16.mxu0 %v429
    %871 = vmatpush1.bf16.msra.mxu0 %v428
    %872 = vmatprep.subr.bf16.mxu0 %v421
    %873 = vmatpush1.bf16.msra.mxu0 %v420
    %874 = vmatprep.subr.bf16.mxu0 %v541
    %875 = vmatpush2.bf16.msra.mxu0 %v540
    %876 = vmatprep.subr.bf16.mxu0 %v533
    %877 = vmatpush2.bf16.msra.mxu0 %v532
    %878 = vmatprep.subr.bf16.mxu0 %v525
    %879 = vmatpush2.bf16.msra.mxu0 %v524
    %880 = vmatprep.subr.bf16.mxu0 %v517
    %881 = vmatpush2.bf16.msra.mxu0 %v516
    %882 = vmatprep.subr.bf16.mxu0 %v509
    %883 = vmatpush2.bf16.msra.mxu0 %v508
    %884 = vmatprep.subr.bf16.mxu0 %v501
    %885 = vmatpush2.bf16.msra.mxu0 %v500
    %886 = vmatprep.subr.bf16.mxu0 %v493
    %887 = vmatpush2.bf16.msra.mxu0 %v492
    %888 = vmatprep.subr.bf16.mxu0 %v485
    %889 = vmatpush2.bf16.msra.mxu0 %v484
    %890 = vmatprep.mubr.bf16.mxu0 %v566
    %891 = vmatmul.mubr.bf16.gmra.mxu0 %v565
    %v892 = vpop.f32.mrf.mxu0
    %v893 = vadd.f32 %v852, %v892
    %v894 = vpop.f32.mrf.mxu0
    %v895 = vadd.f32 %v854, %v894
    %v896 = vpop.f32.mrf.mxu0
    %v897 = vpop.f32.mrf.mxu0
    %898 = vdwg.mxu0
    %v899 = vld [vmem:[#allocation7] sm:$0xff]
    %v901 = vlaneseq
    %v902 = vshrl.u32 %v901, 7
    %v903 = vsub.s32 0, %v902
    %v904 = vrot.slane %v899, %v903
    %v905 = vlaneseq
    %v906 = vshrl.u32 %v905, 7
    %v907 = vsub.s32 1, %v906
    %v908 = vrot.slane %v899, %v907
    %v909 = vlaneseq
    %v910 = vshrl.u32 %v909, 7
    %v911 = vsub.s32 2, %v910
    %v912 = vrot.slane %v899, %v911
    %v913 = vlaneseq
    %v914 = vshrl.u32 %v913, 7
    %v915 = vsub.s32 3, %v914
    %v916 = vrot.slane %v899, %v915
    %v917 = vlaneseq
    %v918 = vshrl.u32 %v917, 7
    %v919 = vsub.s32 4, %v918
    %v920 = vrot.slane %v899, %v919
    %v921 = vlaneseq
    %v922 = vshrl.u32 %v921, 7
    %v923 = vsub.s32 5, %v922
    %v924 = vrot.slane %v899, %v923
    %v925 = vlaneseq
    %v926 = vshrl.u32 %v925, 7
    %v927 = vsub.s32 6, %v926
    %v928 = vrot.slane %v899, %v927
    %v929 = vlaneseq
    %v930 = vshrl.u32 %v929, 7
    %v931 = vsub.s32 7, %v930
    %v932 = vrot.slane %v899, %v931
    %v941 = vmul.f32 %v647, %v904
    %v942 = vmul.f32 %v649, %v908
    %v943 = vmul.f32 %v729, %v912
    %v944 = vmul.f32 %v731, %v916
    %v945 = vmul.f32 %v811, %v920
    %v946 = vmul.f32 %v813, %v924
    %v947 = vmul.f32 %v893, %v928
    %v948 = vmul.f32 %v895, %v932
    %v949 = vld [vmem:[#allocation8] sm:$0xff]
    %v951 = vlaneseq
    %v952 = vshrl.u32 %v951, 7
    %v953 = vsub.s32 0, %v952
    %v954 = vrot.slane %v949, %v953
    %v955 = vlaneseq
    %v956 = vshrl.u32 %v955, 7
    %v957 = vsub.s32 1, %v956
    %v958 = vrot.slane %v949, %v957
    %v959 = vlaneseq
    %v960 = vshrl.u32 %v959, 7
    %v961 = vsub.s32 2, %v960
    %v962 = vrot.slane %v949, %v961
    %v963 = vlaneseq
    %v964 = vshrl.u32 %v963, 7
    %v965 = vsub.s32 3, %v964
    %v966 = vrot.slane %v949, %v965
    %v967 = vlaneseq
    %v968 = vshrl.u32 %v967, 7
    %v969 = vsub.s32 4, %v968
    %v970 = vrot.slane %v949, %v969
    %v971 = vlaneseq
    %v972 = vshrl.u32 %v971, 7
    %v973 = vsub.s32 5, %v972
    %v974 = vrot.slane %v949, %v973
    %v975 = vlaneseq
    %v976 = vshrl.u32 %v975, 7
    %v977 = vsub.s32 6, %v976
    %v978 = vrot.slane %v949, %v977
    %v979 = vlaneseq
    %v980 = vshrl.u32 %v979, 7
    %v981 = vsub.s32 7, %v980
    %v982 = vrot.slane %v949, %v981
    %v991 = vadd.f32 %v941, %v954
    %v992 = vadd.f32 %v942, %v958
    %v993 = vadd.f32 %v943, %v962
    %v994 = vadd.f32 %v944, %v966
    %v995 = vadd.f32 %v945, %v970
    %v996 = vadd.f32 %v946, %v974
    %v997 = vadd.f32 %v947, %v978
    %v998 = vadd.f32 %v948, %v982
    %vm999 = vcmp.gt.f32.partialorder %v991, 0.0
    %vm1000 = vcmp.gt.f32.partialorder %v992, 0.0
    %vm1001 = vcmp.gt.f32.partialorder %v993, 0.0
    %vm1002 = vcmp.gt.f32.partialorder %v994, 0.0
    %vm1003 = vcmp.gt.f32.partialorder %v995, 0.0
    %vm1004 = vcmp.gt.f32.partialorder %v996, 0.0
    %vm1005 = vcmp.gt.f32.partialorder %v997, 0.0
    %vm1006 = vcmp.gt.f32.partialorder %v998, 0.0
    %v1007 = vmul.f32 %v991, 0.01
    %v1008 = vmul.f32 %v992, 0.01
    %v1009 = vmul.f32 %v993, 0.01
    %v1010 = vmul.f32 %v994, 0.01
    %v1011 = vmul.f32 %v995, 0.01
    %v1012 = vmul.f32 %v996, 0.01
    %v1013 = vmul.f32 %v997, 0.01
    %v1014 = vmul.f32 %v998, 0.01
    %v1015 = vsel %vm999, %v991, %v1007
    %v1016 = vsel %vm1000, %v992, %v1008
    %v1017 = vsel %vm1001, %v993, %v1009
    %v1018 = vsel %vm1002, %v994, %v1010
    %v1019 = vsel %vm1003, %v995, %v1011
    %v1020 = vsel %vm1004, %v996, %v1012
    %v1021 = vsel %vm1005, %v997, %v1013
    %v1022 = vsel %vm1006, %v998, %v1014
    %v1023 = vpack.c.bf16 %v1015, %v1015
    %v1024 = vpack.c.bf16 %v1016, %v1016
    %v1025 = vpack.c.bf16 %v1017, %v1017
    %v1026 = vpack.c.bf16 %v1018, %v1018
    %v1027 = vpack.c.bf16 %v1019, %v1019
    %v1028 = vpack.c.bf16 %v1020, %v1020
    %v1029 = vpack.c.bf16 %v1021, %v1021
    %v1030 = vpack.c.bf16 %v1022, %v1022
    %v1031 = vld [vmem:[#allocation10] sm:$0xff]
    %v1032 = vld [vmem:[#allocation10 + $0x8] sm:$0xff]
    %v1033 = vld [vmem:[#allocation10 + $0x10] sm:$0xff]
    %v1034 = vld [vmem:[#allocation10 + $0x18] sm:$0xff]
    %v1035 = vld [vmem:[#allocation10 + $0x20] sm:$0xff]
    %v1036 = vld [vmem:[#allocation10 + $0x28] sm:$0xff]
    %v1037 = vld [vmem:[#allocation10 + $0x30] sm:$0xff]
    %v1038 = vld [vmem:[#allocation10 + $0x38] sm:$0xff]
    %v1039 = vld [vmem:[#allocation10 + $0x40] sm:$0xff]
    %v1040 = vld [vmem:[#allocation10 + $0x48] sm:$0xff]
    %v1041 = vld [vmem:[#allocation10 + $0x50] sm:$0xff]
    %v1042 = vld [vmem:[#allocation10 + $0x58] sm:$0xff]
    %v1043 = vld [vmem:[#allocation10 + $0x60] sm:$0xff]
    %v1044 = vld [vmem:[#allocation10 + $0x68] sm:$0xff]
    %v1045 = vld [vmem:[#allocation10 + $0x70] sm:$0xff]
    %v1046 = vld [vmem:[#allocation10 + $0x78] sm:$0xff]
    %v1047 = vld [vmem:[#allocation10 + $0x80] sm:$0xff]
    %v1048 = vld [vmem:[#allocation10 + $0x88] sm:$0xff]
    %v1049 = vld [vmem:[#allocation10 + $0x90] sm:$0xff]
    %v1050 = vld [vmem:[#allocation10 + $0x98] sm:$0xff]
    %v1051 = vld [vmem:[#allocation10 + $0xa0] sm:$0xff]
    %v1052 = vld [vmem:[#allocation10 + $0xa8] sm:$0xff]
    %v1053 = vld [vmem:[#allocation10 + $0xb0] sm:$0xff]
    %v1054 = vld [vmem:[#allocation10 + $0xb8] sm:$0xff]
    %v1055 = vld [vmem:[#allocation10 + $0xc0] sm:$0xff]
    %v1056 = vld [vmem:[#allocation10 + $0xc8] sm:$0xff]
    %v1057 = vld [vmem:[#allocation10 + $0xd0] sm:$0xff]
    %v1058 = vld [vmem:[#allocation10 + $0xd8] sm:$0xff]
    %v1059 = vld [vmem:[#allocation10 + $0xe0] sm:$0xff]
    %v1060 = vld [vmem:[#allocation10 + $0xe8] sm:$0xff]
    %v1061 = vld [vmem:[#allocation10 + $0xf0] sm:$0xff]
    %v1062 = vld [vmem:[#allocation10 + $0xf8] sm:$0xff]
    %v1063 = vld [vmem:[#allocation10 + $0x100] sm:$0xff]
    %v1064 = vld [vmem:[#allocation10 + $0x108] sm:$0xff]
    %v1065 = vld [vmem:[#allocation10 + $0x110] sm:$0xff]
    %v1066 = vld [vmem:[#allocation10 + $0x118] sm:$0xff]
    %v1067 = vld [vmem:[#allocation10 + $0x120] sm:$0xff]
    %v1068 = vld [vmem:[#allocation10 + $0x128] sm:$0xff]
    %v1069 = vld [vmem:[#allocation10 + $0x130] sm:$0xff]
    %v1070 = vld [vmem:[#allocation10 + $0x138] sm:$0xff]
    %v1071 = vld [vmem:[#allocation10 + $0x140] sm:$0xff]
    %v1072 = vld [vmem:[#allocation10 + $0x148] sm:$0xff]
    %v1073 = vld [vmem:[#allocation10 + $0x150] sm:$0xff]
    %v1074 = vld [vmem:[#allocation10 + $0x158] sm:$0xff]
    %v1075 = vld [vmem:[#allocation10 + $0x160] sm:$0xff]
    %v1076 = vld [vmem:[#allocation10 + $0x168] sm:$0xff]
    %v1077 = vld [vmem:[#allocation10 + $0x170] sm:$0xff]
    %v1078 = vld [vmem:[#allocation10 + $0x178] sm:$0xff]
    %v1079 = vld [vmem:[#allocation10 + $0x180] sm:$0xff]
    %v1080 = vld [vmem:[#allocation10 + $0x188] sm:$0xff]
    %v1081 = vld [vmem:[#allocation10 + $0x190] sm:$0xff]
    %v1082 = vld [vmem:[#allocation10 + $0x198] sm:$0xff]
    %v1083 = vld [vmem:[#allocation10 + $0x1a0] sm:$0xff]
    %v1084 = vld [vmem:[#allocation10 + $0x1a8] sm:$0xff]
    %v1085 = vld [vmem:[#allocation10 + $0x1b0] sm:$0xff]
    %v1086 = vld [vmem:[#allocation10 + $0x1b8] sm:$0xff]
    %v1087 = vld [vmem:[#allocation10 + $0x1c0] sm:$0xff]
    %v1088 = vld [vmem:[#allocation10 + $0x1c8] sm:$0xff]
    %v1089 = vld [vmem:[#allocation10 + $0x1d0] sm:$0xff]
    %v1090 = vld [vmem:[#allocation10 + $0x1d8] sm:$0xff]
    %v1091 = vld [vmem:[#allocation10 + $0x1e0] sm:$0xff]
    %v1092 = vld [vmem:[#allocation10 + $0x1e8] sm:$0xff]
    %v1093 = vld [vmem:[#allocation10 + $0x1f0] sm:$0xff]
    %v1094 = vld [vmem:[#allocation10 + $0x1f8] sm:$0xff]
    %v1095 = vld [vmem:[#allocation10 + $0x200] sm:$0xff]
    %v1096 = vld [vmem:[#allocation10 + $0x208] sm:$0xff]
    %v1097 = vld [vmem:[#allocation10 + $0x210] sm:$0xff]
    %v1098 = vld [vmem:[#allocation10 + $0x218] sm:$0xff]
    %v1099 = vld [vmem:[#allocation10 + $0x220] sm:$0xff]
    %v1100 = vld [vmem:[#allocation10 + $0x228] sm:$0xff]
    %v1101 = vld [vmem:[#allocation10 + $0x230] sm:$0xff]
    %v1102 = vld [vmem:[#allocation10 + $0x238] sm:$0xff]
    %v1103 = vld [vmem:[#allocation10 + $0x240] sm:$0xff]
    %v1104 = vld [vmem:[#allocation10 + $0x248] sm:$0xff]
    %v1105 = vld [vmem:[#allocation10 + $0x250] sm:$0xff]
    %v1106 = vld [vmem:[#allocation10 + $0x258] sm:$0xff]
    %v1107 = vld [vmem:[#allocation10 + $0x260] sm:$0xff]
    %v1108 = vld [vmem:[#allocation10 + $0x268] sm:$0xff]
    %v1109 = vld [vmem:[#allocation10 + $0x270] sm:$0xff]
    %v1110 = vld [vmem:[#allocation10 + $0x278] sm:$0xff]
    %v1111 = vld [vmem:[#allocation10 + $0x280] sm:$0xff]
    %v1112 = vld [vmem:[#allocation10 + $0x288] sm:$0xff]
    %v1113 = vld [vmem:[#allocation10 + $0x290] sm:$0xff]
    %v1114 = vld [vmem:[#allocation10 + $0x298] sm:$0xff]
    %v1115 = vld [vmem:[#allocation10 + $0x2a0] sm:$0xff]
    %v1116 = vld [vmem:[#allocation10 + $0x2a8] sm:$0xff]
    %v1117 = vld [vmem:[#allocation10 + $0x2b0] sm:$0xff]
    %v1118 = vld [vmem:[#allocation10 + $0x2b8] sm:$0xff]
    %v1119 = vld [vmem:[#allocation10 + $0x2c0] sm:$0xff]
    %v1120 = vld [vmem:[#allocation10 + $0x2c8] sm:$0xff]
    %v1121 = vld [vmem:[#allocation10 + $0x2d0] sm:$0xff]
    %v1122 = vld [vmem:[#allocation10 + $0x2d8] sm:$0xff]
    %v1123 = vld [vmem:[#allocation10 + $0x2e0] sm:$0xff]
    %v1124 = vld [vmem:[#allocation10 + $0x2e8] sm:$0xff]
    %v1125 = vld [vmem:[#allocation10 + $0x2f0] sm:$0xff]
    %v1126 = vld [vmem:[#allocation10 + $0x2f8] sm:$0xff]
    %v1127 = vld [vmem:[#allocation10 + $0x300] sm:$0xff]
    %v1128 = vld [vmem:[#allocation10 + $0x308] sm:$0xff]
    %v1129 = vld [vmem:[#allocation10 + $0x310] sm:$0xff]
    %v1130 = vld [vmem:[#allocation10 + $0x318] sm:$0xff]
    %v1131 = vld [vmem:[#allocation10 + $0x320] sm:$0xff]
    %v1132 = vld [vmem:[#allocation10 + $0x328] sm:$0xff]
    %v1133 = vld [vmem:[#allocation10 + $0x330] sm:$0xff]
    %v1134 = vld [vmem:[#allocation10 + $0x338] sm:$0xff]
    %v1135 = vld [vmem:[#allocation10 + $0x340] sm:$0xff]
    %v1136 = vld [vmem:[#allocation10 + $0x348] sm:$0xff]
    %v1137 = vld [vmem:[#allocation10 + $0x350] sm:$0xff]
    %v1138 = vld [vmem:[#allocation10 + $0x358] sm:$0xff]
    %v1139 = vld [vmem:[#allocation10 + $0x360] sm:$0xff]
    %v1140 = vld [vmem:[#allocation10 + $0x368] sm:$0xff]
    %v1141 = vld [vmem:[#allocation10 + $0x370] sm:$0xff]
    %v1142 = vld [vmem:[#allocation10 + $0x378] sm:$0xff]
    %v1143 = vld [vmem:[#allocation10 + $0x380] sm:$0xff]
    %v1144 = vld [vmem:[#allocation10 + $0x388] sm:$0xff]
    %v1145 = vld [vmem:[#allocation10 + $0x390] sm:$0xff]
    %v1146 = vld [vmem:[#allocation10 + $0x398] sm:$0xff]
    %v1147 = vld [vmem:[#allocation10 + $0x3a0] sm:$0xff]
    %v1148 = vld [vmem:[#allocation10 + $0x3a8] sm:$0xff]
    %v1149 = vld [vmem:[#allocation10 + $0x3b0] sm:$0xff]
    %v1150 = vld [vmem:[#allocation10 + $0x3b8] sm:$0xff]
    %v1151 = vld [vmem:[#allocation10 + $0x3c0] sm:$0xff]
    %v1152 = vld [vmem:[#allocation10 + $0x3c8] sm:$0xff]
    %v1153 = vld [vmem:[#allocation10 + $0x3d0] sm:$0xff]
    %v1154 = vld [vmem:[#allocation10 + $0x3d8] sm:$0xff]
    %v1155 = vld [vmem:[#allocation10 + $0x3e0] sm:$0xff]
    %v1156 = vld [vmem:[#allocation10 + $0x3e8] sm:$0xff]
    %v1157 = vld [vmem:[#allocation10 + $0x3f0] sm:$0xff]
    %v1158 = vld [vmem:[#allocation10 + $0x3f8] sm:$0xff]
    %v1159 = vunpack.c.l.s8.bf16 %v1031
    %v1160 = vunpack.c.l.s8.bf16 %v1032
    %v1161 = vunpack.c.l.s8.bf16 %v1033
    %v1162 = vunpack.c.l.s8.bf16 %v1034
    %v1163 = vunpack.c.h.s8.bf16 %v1031
    %v1164 = vunpack.c.h.s8.bf16 %v1032
    %v1165 = vunpack.c.h.s8.bf16 %v1033
    %v1166 = vunpack.c.h.s8.bf16 %v1034
    %v1167 = vunpack.c.l.s8.bf16 %v1035
    %v1168 = vunpack.c.l.s8.bf16 %v1036
    %v1169 = vunpack.c.l.s8.bf16 %v1037
    %v1170 = vunpack.c.l.s8.bf16 %v1038
    %v1171 = vunpack.c.h.s8.bf16 %v1035
    %v1172 = vunpack.c.h.s8.bf16 %v1036
    %v1173 = vunpack.c.h.s8.bf16 %v1037
    %v1174 = vunpack.c.h.s8.bf16 %v1038
    %v1175 = vunpack.c.l.s8.bf16 %v1039
    %v1176 = vunpack.c.l.s8.bf16 %v1040
    %v1177 = vunpack.c.l.s8.bf16 %v1041
    %v1178 = vunpack.c.l.s8.bf16 %v1042
    %v1179 = vunpack.c.h.s8.bf16 %v1039
    %v1180 = vunpack.c.h.s8.bf16 %v1040
    %v1181 = vunpack.c.h.s8.bf16 %v1041
    %v1182 = vunpack.c.h.s8.bf16 %v1042
    %v1183 = vunpack.c.l.s8.bf16 %v1043
    %v1184 = vunpack.c.l.s8.bf16 %v1044
    %v1185 = vunpack.c.l.s8.bf16 %v1045
    %v1186 = vunpack.c.l.s8.bf16 %v1046
    %v1187 = vunpack.c.h.s8.bf16 %v1043
    %v1188 = vunpack.c.h.s8.bf16 %v1044
    %v1189 = vunpack.c.h.s8.bf16 %v1045
    %v1190 = vunpack.c.h.s8.bf16 %v1046
    %v1191 = vunpack.c.l.s8.bf16 %v1047
    %v1192 = vunpack.c.l.s8.bf16 %v1048
    %v1193 = vunpack.c.l.s8.bf16 %v1049
    %v1194 = vunpack.c.l.s8.bf16 %v1050
    %v1195 = vunpack.c.h.s8.bf16 %v1047
    %v1196 = vunpack.c.h.s8.bf16 %v1048
    %v1197 = vunpack.c.h.s8.bf16 %v1049
    %v1198 = vunpack.c.h.s8.bf16 %v1050
    %v1199 = vunpack.c.l.s8.bf16 %v1051
    %v1200 = vunpack.c.l.s8.bf16 %v1052
    %v1201 = vunpack.c.l.s8.bf16 %v1053
    %v1202 = vunpack.c.l.s8.bf16 %v1054
    %v1203 = vunpack.c.h.s8.bf16 %v1051
    %v1204 = vunpack.c.h.s8.bf16 %v1052
    %v1205 = vunpack.c.h.s8.bf16 %v1053
    %v1206 = vunpack.c.h.s8.bf16 %v1054
    %v1207 = vunpack.c.l.s8.bf16 %v1055
    %v1208 = vunpack.c.l.s8.bf16 %v1056
    %v1209 = vunpack.c.l.s8.bf16 %v1057
    %v1210 = vunpack.c.l.s8.bf16 %v1058
    %v1211 = vunpack.c.h.s8.bf16 %v1055
    %v1212 = vunpack.c.h.s8.bf16 %v1056
    %v1213 = vunpack.c.h.s8.bf16 %v1057
    %v1214 = vunpack.c.h.s8.bf16 %v1058
    %v1215 = vunpack.c.l.s8.bf16 %v1059
    %v1216 = vunpack.c.l.s8.bf16 %v1060
    %v1217 = vunpack.c.l.s8.bf16 %v1061
    %v1218 = vunpack.c.l.s8.bf16 %v1062
    %v1219 = vunpack.c.h.s8.bf16 %v1059
    %v1220 = vunpack.c.h.s8.bf16 %v1060
    %v1221 = vunpack.c.h.s8.bf16 %v1061
    %v1222 = vunpack.c.h.s8.bf16 %v1062
    %v1223 = vunpack.c.l.s8.bf16 %v1063
    %v1224 = vunpack.c.l.s8.bf16 %v1064
    %v1225 = vunpack.c.l.s8.bf16 %v1065
    %v1226 = vunpack.c.l.s8.bf16 %v1066
    %v1227 = vunpack.c.h.s8.bf16 %v1063
    %v1228 = vunpack.c.h.s8.bf16 %v1064
    %v1229 = vunpack.c.h.s8.bf16 %v1065
    %v1230 = vunpack.c.h.s8.bf16 %v1066
    %v1231 = vunpack.c.l.s8.bf16 %v1067
    %v1232 = vunpack.c.l.s8.bf16 %v1068
    %v1233 = vunpack.c.l.s8.bf16 %v1069
    %v1234 = vunpack.c.l.s8.bf16 %v1070
    %v1235 = vunpack.c.h.s8.bf16 %v1067
    %v1236 = vunpack.c.h.s8.bf16 %v1068
    %v1237 = vunpack.c.h.s8.bf16 %v1069
    %v1238 = vunpack.c.h.s8.bf16 %v1070
    %v1239 = vunpack.c.l.s8.bf16 %v1071
    %v1240 = vunpack.c.l.s8.bf16 %v1072
    %v1241 = vunpack.c.l.s8.bf16 %v1073
    %v1242 = vunpack.c.l.s8.bf16 %v1074
    %v1243 = vunpack.c.h.s8.bf16 %v1071
    %v1244 = vunpack.c.h.s8.bf16 %v1072
    %v1245 = vunpack.c.h.s8.bf16 %v1073
    %v1246 = vunpack.c.h.s8.bf16 %v1074
    %v1247 = vunpack.c.l.s8.bf16 %v1075
    %v1248 = vunpack.c.l.s8.bf16 %v1076
    %v1249 = vunpack.c.l.s8.bf16 %v1077
    %v1250 = vunpack.c.l.s8.bf16 %v1078
    %v1251 = vunpack.c.h.s8.bf16 %v1075
    %v1252 = vunpack.c.h.s8.bf16 %v1076
    %v1253 = vunpack.c.h.s8.bf16 %v1077
    %v1254 = vunpack.c.h.s8.bf16 %v1078
    %v1255 = vunpack.c.l.s8.bf16 %v1079
    %v1256 = vunpack.c.l.s8.bf16 %v1080
    %v1257 = vunpack.c.l.s8.bf16 %v1081
    %v1258 = vunpack.c.l.s8.bf16 %v1082
    %v1259 = vunpack.c.h.s8.bf16 %v1079
    %v1260 = vunpack.c.h.s8.bf16 %v1080
    %v1261 = vunpack.c.h.s8.bf16 %v1081
    %v1262 = vunpack.c.h.s8.bf16 %v1082
    %v1263 = vunpack.c.l.s8.bf16 %v1083
    %v1264 = vunpack.c.l.s8.bf16 %v1084
    %v1265 = vunpack.c.l.s8.bf16 %v1085
    %v1266 = vunpack.c.l.s8.bf16 %v1086
    %v1267 = vunpack.c.h.s8.bf16 %v1083
    %v1268 = vunpack.c.h.s8.bf16 %v1084
    %v1269 = vunpack.c.h.s8.bf16 %v1085
    %v1270 = vunpack.c.h.s8.bf16 %v1086
    %v1271 = vunpack.c.l.s8.bf16 %v1087
    %v1272 = vunpack.c.l.s8.bf16 %v1088
    %v1273 = vunpack.c.l.s8.bf16 %v1089
    %v1274 = vunpack.c.l.s8.bf16 %v1090
    %v1275 = vunpack.c.h.s8.bf16 %v1087
    %v1276 = vunpack.c.h.s8.bf16 %v1088
    %v1277 = vunpack.c.h.s8.bf16 %v1089
    %v1278 = vunpack.c.h.s8.bf16 %v1090
    %v1279 = vunpack.c.l.s8.bf16 %v1091
    %v1280 = vunpack.c.l.s8.bf16 %v1092
    %v1281 = vunpack.c.l.s8.bf16 %v1093
    %v1282 = vunpack.c.l.s8.bf16 %v1094
    %v1283 = vunpack.c.h.s8.bf16 %v1091
    %v1284 = vunpack.c.h.s8.bf16 %v1092
    %v1285 = vunpack.c.h.s8.bf16 %v1093
    %v1286 = vunpack.c.h.s8.bf16 %v1094
    %v1287 = vunpack.c.l.s8.bf16 %v1095
    %v1288 = vunpack.c.l.s8.bf16 %v1096
    %v1289 = vunpack.c.l.s8.bf16 %v1097
    %v1290 = vunpack.c.l.s8.bf16 %v1098
    %v1291 = vunpack.c.h.s8.bf16 %v1095
    %v1292 = vunpack.c.h.s8.bf16 %v1096
    %v1293 = vunpack.c.h.s8.bf16 %v1097
    %v1294 = vunpack.c.h.s8.bf16 %v1098
    %v1295 = vunpack.c.l.s8.bf16 %v1099
    %v1296 = vunpack.c.l.s8.bf16 %v1100
    %v1297 = vunpack.c.l.s8.bf16 %v1101
    %v1298 = vunpack.c.l.s8.bf16 %v1102
    %v1299 = vunpack.c.h.s8.bf16 %v1099
    %v1300 = vunpack.c.h.s8.bf16 %v1100
    %v1301 = vunpack.c.h.s8.bf16 %v1101
    %v1302 = vunpack.c.h.s8.bf16 %v1102
    %v1303 = vunpack.c.l.s8.bf16 %v1103
    %v1304 = vunpack.c.l.s8.bf16 %v1104
    %v1305 = vunpack.c.l.s8.bf16 %v1105
    %v1306 = vunpack.c.l.s8.bf16 %v1106
    %v1307 = vunpack.c.h.s8.bf16 %v1103
    %v1308 = vunpack.c.h.s8.bf16 %v1104
    %v1309 = vunpack.c.h.s8.bf16 %v1105
    %v1310 = vunpack.c.h.s8.bf16 %v1106
    %v1311 = vunpack.c.l.s8.bf16 %v1107
    %v1312 = vunpack.c.l.s8.bf16 %v1108
    %v1313 = vunpack.c.l.s8.bf16 %v1109
    %v1314 = vunpack.c.l.s8.bf16 %v1110
    %v1315 = vunpack.c.h.s8.bf16 %v1107
    %v1316 = vunpack.c.h.s8.bf16 %v1108
    %v1317 = vunpack.c.h.s8.bf16 %v1109
    %v1318 = vunpack.c.h.s8.bf16 %v1110
    %v1319 = vunpack.c.l.s8.bf16 %v1111
    %v1320 = vunpack.c.l.s8.bf16 %v1112
    %v1321 = vunpack.c.l.s8.bf16 %v1113
    %v1322 = vunpack.c.l.s8.bf16 %v1114
    %v1323 = vunpack.c.h.s8.bf16 %v1111
    %v1324 = vunpack.c.h.s8.bf16 %v1112
    %v1325 = vunpack.c.h.s8.bf16 %v1113
    %v1326 = vunpack.c.h.s8.bf16 %v1114
    %v1327 = vunpack.c.l.s8.bf16 %v1115
    %v1328 = vunpack.c.l.s8.bf16 %v1116
    %v1329 = vunpack.c.l.s8.bf16 %v1117
    %v1330 = vunpack.c.l.s8.bf16 %v1118
    %v1331 = vunpack.c.h.s8.bf16 %v1115
    %v1332 = vunpack.c.h.s8.bf16 %v1116
    %v1333 = vunpack.c.h.s8.bf16 %v1117
    %v1334 = vunpack.c.h.s8.bf16 %v1118
    %v1335 = vunpack.c.l.s8.bf16 %v1119
    %v1336 = vunpack.c.l.s8.bf16 %v1120
    %v1337 = vunpack.c.l.s8.bf16 %v1121
    %v1338 = vunpack.c.l.s8.bf16 %v1122
    %v1339 = vunpack.c.h.s8.bf16 %v1119
    %v1340 = vunpack.c.h.s8.bf16 %v1120
    %v1341 = vunpack.c.h.s8.bf16 %v1121
    %v1342 = vunpack.c.h.s8.bf16 %v1122
    %v1343 = vunpack.c.l.s8.bf16 %v1123
    %v1344 = vunpack.c.l.s8.bf16 %v1124
    %v1345 = vunpack.c.l.s8.bf16 %v1125
    %v1346 = vunpack.c.l.s8.bf16 %v1126
    %v1347 = vunpack.c.h.s8.bf16 %v1123
    %v1348 = vunpack.c.h.s8.bf16 %v1124
    %v1349 = vunpack.c.h.s8.bf16 %v1125
    %v1350 = vunpack.c.h.s8.bf16 %v1126
    %v1351 = vunpack.c.l.s8.bf16 %v1127
    %v1352 = vunpack.c.l.s8.bf16 %v1128
    %v1353 = vunpack.c.l.s8.bf16 %v1129
    %v1354 = vunpack.c.l.s8.bf16 %v1130
    %v1355 = vunpack.c.h.s8.bf16 %v1127
    %v1356 = vunpack.c.h.s8.bf16 %v1128
    %v1357 = vunpack.c.h.s8.bf16 %v1129
    %v1358 = vunpack.c.h.s8.bf16 %v1130
    %v1359 = vunpack.c.l.s8.bf16 %v1131
    %v1360 = vunpack.c.l.s8.bf16 %v1132
    %v1361 = vunpack.c.l.s8.bf16 %v1133
    %v1362 = vunpack.c.l.s8.bf16 %v1134
    %v1363 = vunpack.c.h.s8.bf16 %v1131
    %v1364 = vunpack.c.h.s8.bf16 %v1132
    %v1365 = vunpack.c.h.s8.bf16 %v1133
    %v1366 = vunpack.c.h.s8.bf16 %v1134
    %v1367 = vunpack.c.l.s8.bf16 %v1135
    %v1368 = vunpack.c.l.s8.bf16 %v1136
    %v1369 = vunpack.c.l.s8.bf16 %v1137
    %v1370 = vunpack.c.l.s8.bf16 %v1138
    %v1371 = vunpack.c.h.s8.bf16 %v1135
    %v1372 = vunpack.c.h.s8.bf16 %v1136
    %v1373 = vunpack.c.h.s8.bf16 %v1137
    %v1374 = vunpack.c.h.s8.bf16 %v1138
    %v1375 = vunpack.c.l.s8.bf16 %v1139
    %v1376 = vunpack.c.l.s8.bf16 %v1140
    %v1377 = vunpack.c.l.s8.bf16 %v1141
    %v1378 = vunpack.c.l.s8.bf16 %v1142
    %v1379 = vunpack.c.h.s8.bf16 %v1139
    %v1380 = vunpack.c.h.s8.bf16 %v1140
    %v1381 = vunpack.c.h.s8.bf16 %v1141
    %v1382 = vunpack.c.h.s8.bf16 %v1142
    %v1383 = vunpack.c.l.s8.bf16 %v1143
    %v1384 = vunpack.c.l.s8.bf16 %v1144
    %v1385 = vunpack.c.l.s8.bf16 %v1145
    %v1386 = vunpack.c.l.s8.bf16 %v1146
    %v1387 = vunpack.c.h.s8.bf16 %v1143
    %v1388 = vunpack.c.h.s8.bf16 %v1144
    %v1389 = vunpack.c.h.s8.bf16 %v1145
    %v1390 = vunpack.c.h.s8.bf16 %v1146
    %v1391 = vunpack.c.l.s8.bf16 %v1147
    %v1392 = vunpack.c.l.s8.bf16 %v1148
    %v1393 = vunpack.c.l.s8.bf16 %v1149
    %v1394 = vunpack.c.l.s8.bf16 %v1150
    %v1395 = vunpack.c.h.s8.bf16 %v1147
    %v1396 = vunpack.c.h.s8.bf16 %v1148
    %v1397 = vunpack.c.h.s8.bf16 %v1149
    %v1398 = vunpack.c.h.s8.bf16 %v1150
    %v1399 = vunpack.c.l.s8.bf16 %v1151
    %v1400 = vunpack.c.l.s8.bf16 %v1152
    %v1401 = vunpack.c.l.s8.bf16 %v1153
    %v1402 = vunpack.c.l.s8.bf16 %v1154
    %v1403 = vunpack.c.h.s8.bf16 %v1151
    %v1404 = vunpack.c.h.s8.bf16 %v1152
    %v1405 = vunpack.c.h.s8.bf16 %v1153
    %v1406 = vunpack.c.h.s8.bf16 %v1154
    %v1407 = vunpack.c.l.s8.bf16 %v1155
    %v1408 = vunpack.c.l.s8.bf16 %v1156
    %v1409 = vunpack.c.l.s8.bf16 %v1157
    %v1410 = vunpack.c.l.s8.bf16 %v1158
    %v1411 = vunpack.c.h.s8.bf16 %v1155
    %v1412 = vunpack.c.h.s8.bf16 %v1156
    %v1413 = vunpack.c.h.s8.bf16 %v1157
    %v1414 = vunpack.c.h.s8.bf16 %v1158
    %1415 = vmatprep.subr.bf16.mxu0 %v1188
    %1416 = vmatpush1.bf16.msra.mxu0 %v1187
    %1417 = vmatprep.subr.bf16.mxu0 %v1184
    %1418 = vmatpush1.bf16.msra.mxu0 %v1183
    %1419 = vmatprep.subr.bf16.mxu0 %v1180
    %1420 = vmatpush1.bf16.msra.mxu0 %v1179
    %1421 = vmatprep.subr.bf16.mxu0 %v1176
    %1422 = vmatpush1.bf16.msra.mxu0 %v1175
    %1423 = vmatprep.subr.bf16.mxu0 %v1172
    %1424 = vmatpush1.bf16.msra.mxu0 %v1171
    %1425 = vmatprep.subr.bf16.mxu0 %v1168
    %1426 = vmatpush1.bf16.msra.mxu0 %v1167
    %1427 = vmatprep.subr.bf16.mxu0 %v1164
    %1428 = vmatpush1.bf16.msra.mxu0 %v1163
    %1429 = vmatprep.subr.bf16.mxu0 %v1160
    %1430 = vmatpush1.bf16.msra.mxu0 %v1159
    %1431 = vmatprep.subr.bf16.mxu0 %v1220
    %1432 = vmatpush2.bf16.msra.mxu0 %v1219
    %1433 = vmatprep.subr.bf16.mxu0 %v1216
    %1434 = vmatpush2.bf16.msra.mxu0 %v1215
    %1435 = vmatprep.subr.bf16.mxu0 %v1212
    %1436 = vmatpush2.bf16.msra.mxu0 %v1211
    %1437 = vmatprep.subr.bf16.mxu0 %v1208
    %1438 = vmatpush2.bf16.msra.mxu0 %v1207
    %1439 = vmatprep.subr.bf16.mxu0 %v1204
    %1440 = vmatpush2.bf16.msra.mxu0 %v1203
    %1441 = vmatprep.subr.bf16.mxu0 %v1200
    %1442 = vmatpush2.bf16.msra.mxu0 %v1199
    %1443 = vmatprep.subr.bf16.mxu0 %v1196
    %1444 = vmatpush2.bf16.msra.mxu0 %v1195
    %1445 = vmatprep.subr.bf16.mxu0 %v1192
    %1446 = vmatpush2.bf16.msra.mxu0 %v1191
    %1447 = vmatprep.mubr.bf16.mxu0 %v1024
    %1448 = vmatmul.mubr.bf16.gmra.mxu0 %v1023
    %v1449 = vpop.f32.mrf.mxu0
    %v1450 = vadd.f32 0.0, %v1449
    %v1451 = vpop.f32.mrf.mxu0
    %v1452 = vadd.f32 0.0, %v1451
    %v1453 = vpop.f32.mrf.mxu0
    %v1454 = vpop.f32.mrf.mxu0
    %1455 = vdwg.mxu0
    %1456 = vmatprep.subr.bf16.mxu0 %v1252
    %1457 = vmatpush1.bf16.msra.mxu0 %v1251
    %1458 = vmatprep.subr.bf16.mxu0 %v1248
    %1459 = vmatpush1.bf16.msra.mxu0 %v1247
    %1460 = vmatprep.subr.bf16.mxu0 %v1244
    %1461 = vmatpush1.bf16.msra.mxu0 %v1243
    %1462 = vmatprep.subr.bf16.mxu0 %v1240
    %1463 = vmatpush1.bf16.msra.mxu0 %v1239
    %1464 = vmatprep.subr.bf16.mxu0 %v1236
    %1465 = vmatpush1.bf16.msra.mxu0 %v1235
    %1466 = vmatprep.subr.bf16.mxu0 %v1232
    %1467 = vmatpush1.bf16.msra.mxu0 %v1231
    %1468 = vmatprep.subr.bf16.mxu0 %v1228
    %1469 = vmatpush1.bf16.msra.mxu0 %v1227
    %1470 = vmatprep.subr.bf16.mxu0 %v1224
    %1471 = vmatpush1.bf16.msra.mxu0 %v1223
    %1472 = vmatprep.subr.bf16.mxu0 %v1284
    %1473 = vmatpush2.bf16.msra.mxu0 %v1283
    %1474 = vmatprep.subr.bf16.mxu0 %v1280
    %1475 = vmatpush2.bf16.msra.mxu0 %v1279
    %1476 = vmatprep.subr.bf16.mxu0 %v1276
    %1477 = vmatpush2.bf16.msra.mxu0 %v1275
    %1478 = vmatprep.subr.bf16.mxu0 %v1272
    %1479 = vmatpush2.bf16.msra.mxu0 %v1271
    %1480 = vmatprep.subr.bf16.mxu0 %v1268
    %1481 = vmatpush2.bf16.msra.mxu0 %v1267
    %1482 = vmatprep.subr.bf16.mxu0 %v1264
    %1483 = vmatpush2.bf16.msra.mxu0 %v1263
    %1484 = vmatprep.subr.bf16.mxu0 %v1260
    %1485 = vmatpush2.bf16.msra.mxu0 %v1259
    %1486 = vmatprep.subr.bf16.mxu0 %v1256
    %1487 = vmatpush2.bf16.msra.mxu0 %v1255
    %1488 = vmatprep.mubr.bf16.mxu0 %v1026
    %1489 = vmatmul.mubr.bf16.gmra.mxu0 %v1025
    %v1490 = vpop.f32.mrf.mxu0
    %v1491 = vadd.f32 %v1450, %v1490
    %v1492 = vpop.f32.mrf.mxu0
    %v1493 = vadd.f32 %v1452, %v1492
    %v1494 = vpop.f32.mrf.mxu0
    %v1495 = vpop.f32.mrf.mxu0
    %1496 = vdwg.mxu0
    %1497 = vmatprep.subr.bf16.mxu0 %v1316
    %1498 = vmatpush1.bf16.msra.mxu0 %v1315
    %1499 = vmatprep.subr.bf16.mxu0 %v1312
    %1500 = vmatpush1.bf16.msra.mxu0 %v1311
    %1501 = vmatprep.subr.bf16.mxu0 %v1308
    %1502 = vmatpush1.bf16.msra.mxu0 %v1307
    %1503 = vmatprep.subr.bf16.mxu0 %v1304
    %1504 = vmatpush1.bf16.msra.mxu0 %v1303
    %1505 = vmatprep.subr.bf16.mxu0 %v1300
    %1506 = vmatpush1.bf16.msra.mxu0 %v1299
    %1507 = vmatprep.subr.bf16.mxu0 %v1296
    %1508 = vmatpush1.bf16.msra.mxu0 %v1295
    %1509 = vmatprep.subr.bf16.mxu0 %v1292
    %1510 = vmatpush1.bf16.msra.mxu0 %v1291
    %1511 = vmatprep.subr.bf16.mxu0 %v1288
    %1512 = vmatpush1.bf16.msra.mxu0 %v1287
    %1513 = vmatprep.subr.bf16.mxu0 %v1348
    %1514 = vmatpush2.bf16.msra.mxu0 %v1347
    %1515 = vmatprep.subr.bf16.mxu0 %v1344
    %1516 = vmatpush2.bf16.msra.mxu0 %v1343
    %1517 = vmatprep.subr.bf16.mxu0 %v1340
    %1518 = vmatpush2.bf16.msra.mxu0 %v1339
    %1519 = vmatprep.subr.bf16.mxu0 %v1336
    %1520 = vmatpush2.bf16.msra.mxu0 %v1335
    %1521 = vmatprep.subr.bf16.mxu0 %v1332
    %1522 = vmatpush2.bf16.msra.mxu0 %v1331
    %1523 = vmatprep.subr.bf16.mxu0 %v1328
    %1524 = vmatpush2.bf16.msra.mxu0 %v1327
    %1525 = vmatprep.subr.bf16.mxu0 %v1324
    %1526 = vmatpush2.bf16.msra.mxu0 %v1323
    %1527 = vmatprep.subr.bf16.mxu0 %v1320
    %1528 = vmatpush2.bf16.msra.mxu0 %v1319
    %1529 = vmatprep.mubr.bf16.mxu0 %v1028
    %1530 = vmatmul.mubr.bf16.gmra.mxu0 %v1027
    %v1531 = vpop.f32.mrf.mxu0
    %v1532 = vadd.f32 %v1491, %v1531
    %v1533 = vpop.f32.mrf.mxu0
    %v1534 = vadd.f32 %v1493, %v1533
    %v1535 = vpop.f32.mrf.mxu0
    %v1536 = vpop.f32.mrf.mxu0
    %1537 = vdwg.mxu0
    %1538 = vmatprep.subr.bf16.mxu0 %v1380
    %1539 = vmatpush1.bf16.msra.mxu0 %v1379
    %1540 = vmatprep.subr.bf16.mxu0 %v1376
    %1541 = vmatpush1.bf16.msra.mxu0 %v1375
    %1542 = vmatprep.subr.bf16.mxu0 %v1372
    %1543 = vmatpush1.bf16.msra.mxu0 %v1371
    %1544 = vmatprep.subr.bf16.mxu0 %v1368
    %1545 = vmatpush1.bf16.msra.mxu0 %v1367
    %1546 = vmatprep.subr.bf16.mxu0 %v1364
    %1547 = vmatpush1.bf16.msra.mxu0 %v1363
    %1548 = vmatprep.subr.bf16.mxu0 %v1360
    %1549 = vmatpush1.bf16.msra.mxu0 %v1359
    %1550 = vmatprep.subr.bf16.mxu0 %v1356
    %1551 = vmatpush1.bf16.msra.mxu0 %v1355
    %1552 = vmatprep.subr.bf16.mxu0 %v1352
    %1553 = vmatpush1.bf16.msra.mxu0 %v1351
    %1554 = vmatprep.subr.bf16.mxu0 %v1412
    %1555 = vmatpush2.bf16.msra.mxu0 %v1411
    %1556 = vmatprep.subr.bf16.mxu0 %v1408
    %1557 = vmatpush2.bf16.msra.mxu0 %v1407
    %1558 = vmatprep.subr.bf16.mxu0 %v1404
    %1559 = vmatpush2.bf16.msra.mxu0 %v1403
    %1560 = vmatprep.subr.bf16.mxu0 %v1400
    %1561 = vmatpush2.bf16.msra.mxu0 %v1399
    %1562 = vmatprep.subr.bf16.mxu0 %v1396
    %1563 = vmatpush2.bf16.msra.mxu0 %v1395
    %1564 = vmatprep.subr.bf16.mxu0 %v1392
    %1565 = vmatpush2.bf16.msra.mxu0 %v1391
    %1566 = vmatprep.subr.bf16.mxu0 %v1388
    %1567 = vmatpush2.bf16.msra.mxu0 %v1387
    %1568 = vmatprep.subr.bf16.mxu0 %v1384
    %1569 = vmatpush2.bf16.msra.mxu0 %v1383
    %1570 = vmatprep.mubr.bf16.mxu0 %v1030
    %1571 = vmatmul.mubr.bf16.gmra.mxu0 %v1029
    %v1572 = vpop.f32.mrf.mxu0
    %v1573 = vadd.f32 %v1532, %v1572
    %v1574 = vpop.f32.mrf.mxu0
    %v1575 = vadd.f32 %v1534, %v1574
    %v1576 = vpop.f32.mrf.mxu0
    %v1577 = vpop.f32.mrf.mxu0
    %1578 = vdwg.mxu0
    %1579 = vmatprep.subr.bf16.mxu0 %v1190
    %1580 = vmatpush1.bf16.msra.mxu0 %v1189
    %1581 = vmatprep.subr.bf16.mxu0 %v1186
    %1582 = vmatpush1.bf16.msra.mxu0 %v1185
    %1583 = vmatprep.subr.bf16.mxu0 %v1182
    %1584 = vmatpush1.bf16.msra.mxu0 %v1181
    %1585 = vmatprep.subr.bf16.mxu0 %v1178
    %1586 = vmatpush1.bf16.msra.mxu0 %v1177
    %1587 = vmatprep.subr.bf16.mxu0 %v1174
    %1588 = vmatpush1.bf16.msra.mxu0 %v1173
    %1589 = vmatprep.subr.bf16.mxu0 %v1170
    %1590 = vmatpush1.bf16.msra.mxu0 %v1169
    %1591 = vmatprep.subr.bf16.mxu0 %v1166
    %1592 = vmatpush1.bf16.msra.mxu0 %v1165
    %1593 = vmatprep.subr.bf16.mxu0 %v1162
    %1594 = vmatpush1.bf16.msra.mxu0 %v1161
    %1595 = vmatprep.subr.bf16.mxu0 %v1222
    %1596 = vmatpush2.bf16.msra.mxu0 %v1221
    %1597 = vmatprep.subr.bf16.mxu0 %v1218
    %1598 = vmatpush2.bf16.msra.mxu0 %v1217
    %1599 = vmatprep.subr.bf16.mxu0 %v1214
    %1600 = vmatpush2.bf16.msra.mxu0 %v1213
    %1601 = vmatprep.subr.bf16.mxu0 %v1210
    %1602 = vmatpush2.bf16.msra.mxu0 %v1209
    %1603 = vmatprep.subr.bf16.mxu0 %v1206
    %1604 = vmatpush2.bf16.msra.mxu0 %v1205
    %1605 = vmatprep.subr.bf16.mxu0 %v1202
    %1606 = vmatpush2.bf16.msra.mxu0 %v1201
    %1607 = vmatprep.subr.bf16.mxu0 %v1198
    %1608 = vmatpush2.bf16.msra.mxu0 %v1197
    %1609 = vmatprep.subr.bf16.mxu0 %v1194
    %1610 = vmatpush2.bf16.msra.mxu0 %v1193
    %1611 = vmatprep.mubr.bf16.mxu0 %v1024
    %1612 = vmatmul.mubr.bf16.gmra.mxu0 %v1023
    %v1613 = vpop.f32.mrf.mxu0
    %v1614 = vadd.f32 0.0, %v1613
    %v1615 = vpop.f32.mrf.mxu0
    %v1616 = vadd.f32 0.0, %v1615
    %v1617 = vpop.f32.mrf.mxu0
    %v1618 = vpop.f32.mrf.mxu0
    %1619 = vdwg.mxu0
    %1620 = vmatprep.subr.bf16.mxu0 %v1254
    %1621 = vmatpush1.bf16.msra.mxu0 %v1253
    %1622 = vmatprep.subr.bf16.mxu0 %v1250
    %1623 = vmatpush1.bf16.msra.mxu0 %v1249
    %1624 = vmatprep.subr.bf16.mxu0 %v1246
    %1625 = vmatpush1.bf16.msra.mxu0 %v1245
    %1626 = vmatprep.subr.bf16.mxu0 %v1242
    %1627 = vmatpush1.bf16.msra.mxu0 %v1241
    %1628 = vmatprep.subr.bf16.mxu0 %v1238
    %1629 = vmatpush1.bf16.msra.mxu0 %v1237
    %1630 = vmatprep.subr.bf16.mxu0 %v1234
    %1631 = vmatpush1.bf16.msra.mxu0 %v1233
    %1632 = vmatprep.subr.bf16.mxu0 %v1230
    %1633 = vmatpush1.bf16.msra.mxu0 %v1229
    %1634 = vmatprep.subr.bf16.mxu0 %v1226
    %1635 = vmatpush1.bf16.msra.mxu0 %v1225
    %1636 = vmatprep.subr.bf16.mxu0 %v1286
    %1637 = vmatpush2.bf16.msra.mxu0 %v1285
    %1638 = vmatprep.subr.bf16.mxu0 %v1282
    %1639 = vmatpush2.bf16.msra.mxu0 %v1281
    %1640 = vmatprep.subr.bf16.mxu0 %v1278
    %1641 = vmatpush2.bf16.msra.mxu0 %v1277
    %1642 = vmatprep.subr.bf16.mxu0 %v1274
    %1643 = vmatpush2.bf16.msra.mxu0 %v1273
    %1644 = vmatprep.subr.bf16.mxu0 %v1270
    %1645 = vmatpush2.bf16.msra.mxu0 %v1269
    %1646 = vmatprep.subr.bf16.mxu0 %v1266
    %1647 = vmatpush2.bf16.msra.mxu0 %v1265
    %1648 = vmatprep.subr.bf16.mxu0 %v1262
    %1649 = vmatpush2.bf16.msra.mxu0 %v1261
    %1650 = vmatprep.subr.bf16.mxu0 %v1258
    %1651 = vmatpush2.bf16.msra.mxu0 %v1257
    %1652 = vmatprep.mubr.bf16.mxu0 %v1026
    %1653 = vmatmul.mubr.bf16.gmra.mxu0 %v1025
    %v1654 = vpop.f32.mrf.mxu0
    %v1655 = vadd.f32 %v1614, %v1654
    %v1656 = vpop.f32.mrf.mxu0
    %v1657 = vadd.f32 %v1616, %v1656
    %v1658 = vpop.f32.mrf.mxu0
    %v1659 = vpop.f32.mrf.mxu0
    %1660 = vdwg.mxu0
    %1661 = vmatprep.subr.bf16.mxu0 %v1318
    %1662 = vmatpush1.bf16.msra.mxu0 %v1317
    %1663 = vmatprep.subr.bf16.mxu0 %v1314
    %1664 = vmatpush1.bf16.msra.mxu0 %v1313
    %1665 = vmatprep.subr.bf16.mxu0 %v1310
    %1666 = vmatpush1.bf16.msra.mxu0 %v1309
    %1667 = vmatprep.subr.bf16.mxu0 %v1306
    %1668 = vmatpush1.bf16.msra.mxu0 %v1305
    %1669 = vmatprep.subr.bf16.mxu0 %v1302
    %1670 = vmatpush1.bf16.msra.mxu0 %v1301
    %1671 = vmatprep.subr.bf16.mxu0 %v1298
    %1672 = vmatpush1.bf16.msra.mxu0 %v1297
    %1673 = vmatprep.subr.bf16.mxu0 %v1294
    %1674 = vmatpush1.bf16.msra.mxu0 %v1293
    %1675 = vmatprep.subr.bf16.mxu0 %v1290
    %1676 = vmatpush1.bf16.msra.mxu0 %v1289
    %1677 = vmatprep.subr.bf16.mxu0 %v1350
    %1678 = vmatpush2.bf16.msra.mxu0 %v1349
    %1679 = vmatprep.subr.bf16.mxu0 %v1346
    %1680 = vmatpush2.bf16.msra.mxu0 %v1345
    %1681 = vmatprep.subr.bf16.mxu0 %v1342
    %1682 = vmatpush2.bf16.msra.mxu0 %v1341
    %1683 = vmatprep.subr.bf16.mxu0 %v1338
    %1684 = vmatpush2.bf16.msra.mxu0 %v1337
    %1685 = vmatprep.subr.bf16.mxu0 %v1334
    %1686 = vmatpush2.bf16.msra.mxu0 %v1333
    %1687 = vmatprep.subr.bf16.mxu0 %v1330
    %1688 = vmatpush2.bf16.msra.mxu0 %v1329
    %1689 = vmatprep.subr.bf16.mxu0 %v1326
    %1690 = vmatpush2.bf16.msra.mxu0 %v1325
    %1691 = vmatprep.subr.bf16.mxu0 %v1322
    %1692 = vmatpush2.bf16.msra.mxu0 %v1321
    %1693 = vmatprep.mubr.bf16.mxu0 %v1028
    %1694 = vmatmul.mubr.bf16.gmra.mxu0 %v1027
    %v1695 = vpop.f32.mrf.mxu0
    %v1696 = vadd.f32 %v1655, %v1695
    %v1697 = vpop.f32.mrf.mxu0
    %v1698 = vadd.f32 %v1657, %v1697
    %v1699 = vpop.f32.mrf.mxu0
    %v1700 = vpop.f32.mrf.mxu0
    %1701 = vdwg.mxu0
    %1702 = vmatprep.subr.bf16.mxu0 %v1382
    %1703 = vmatpush1.bf16.msra.mxu0 %v1381
    %1704 = vmatprep.subr.bf16.mxu0 %v1378
    %1705 = vmatpush1.bf16.msra.mxu0 %v1377
    %1706 = vmatprep.subr.bf16.mxu0 %v1374
    %1707 = vmatpush1.bf16.msra.mxu0 %v1373
    %1708 = vmatprep.subr.bf16.mxu0 %v1370
    %1709 = vmatpush1.bf16.msra.mxu0 %v1369
    %1710 = vmatprep.subr.bf16.mxu0 %v1366
    %1711 = vmatpush1.bf16.msra.mxu0 %v1365
    %1712 = vmatprep.subr.bf16.mxu0 %v1362
    %1713 = vmatpush1.bf16.msra.mxu0 %v1361
    %1714 = vmatprep.subr.bf16.mxu0 %v1358
    %1715 = vmatpush1.bf16.msra.mxu0 %v1357
    %1716 = vmatprep.subr.bf16.mxu0 %v1354
    %1717 = vmatpush1.bf16.msra.mxu0 %v1353
    %1718 = vmatprep.subr.bf16.mxu0 %v1414
    %1719 = vmatpush2.bf16.msra.mxu0 %v1413
    %1720 = vmatprep.subr.bf16.mxu0 %v1410
    %1721 = vmatpush2.bf16.msra.mxu0 %v1409
    %1722 = vmatprep.subr.bf16.mxu0 %v1406
    %1723 = vmatpush2.bf16.msra.mxu0 %v1405
    %1724 = vmatprep.subr.bf16.mxu0 %v1402
    %1725 = vmatpush2.bf16.msra.mxu0 %v1401
    %1726 = vmatprep.subr.bf16.mxu0 %v1398
    %1727 = vmatpush2.bf16.msra.mxu0 %v1397
    %1728 = vmatprep.subr.bf16.mxu0 %v1394
    %1729 = vmatpush2.bf16.msra.mxu0 %v1393
    %1730 = vmatprep.subr.bf16.mxu0 %v1390
    %1731 = vmatpush2.bf16.msra.mxu0 %v1389
    %1732 = vmatprep.subr.bf16.mxu0 %v1386
    %1733 = vmatpush2.bf16.msra.mxu0 %v1385
    %1734 = vmatprep.mubr.bf16.mxu0 %v1030
    %1735 = vmatmul.mubr.bf16.gmra.mxu0 %v1029
    %v1736 = vpop.f32.mrf.mxu0
    %v1737 = vadd.f32 %v1696, %v1736
    %v1738 = vpop.f32.mrf.mxu0
    %v1739 = vadd.f32 %v1698, %v1738
    %v1740 = vpop.f32.mrf.mxu0
    %v1741 = vpop.f32.mrf.mxu0
    %1742 = vdwg.mxu0
    %v1743 = vld [vmem:[%s5] sm:$0xf]
    %v1745 = vlaneseq
    %v1746 = vshrl.u32 %v1745, 7
    %v1747 = vsub.s32 0, %v1746
    %v1748 = vrot.slane %v1743, %v1747
    %v1749 = vlaneseq
    %v1750 = vshrl.u32 %v1749, 7
    %v1751 = vsub.s32 1, %v1750
    %v1752 = vrot.slane %v1743, %v1751
    %v1753 = vlaneseq
    %v1754 = vshrl.u32 %v1753, 7
    %v1755 = vsub.s32 2, %v1754
    %v1756 = vrot.slane %v1743, %v1755
    %v1757 = vlaneseq
    %v1758 = vshrl.u32 %v1757, 7
    %v1759 = vsub.s32 3, %v1758
    %v1760 = vrot.slane %v1743, %v1759
    %v1765 = vmul.f32 %v1573, %v1748
    %v1766 = vmul.f32 %v1575, %v1752
    %v1767 = vmul.f32 %v1737, %v1756
    %v1768 = vmul.f32 %v1739, %v1760
    %v1769 = vld [vmem:[%s6] sm:$0xf]
    %v1771 = vlaneseq
    %v1772 = vshrl.u32 %v1771, 7
    %v1773 = vsub.s32 0, %v1772
    %v1774 = vrot.slane %v1769, %v1773
    %v1775 = vlaneseq
    %v1776 = vshrl.u32 %v1775, 7
    %v1777 = vsub.s32 1, %v1776
    %v1778 = vrot.slane %v1769, %v1777
    %v1779 = vlaneseq
    %v1780 = vshrl.u32 %v1779, 7
    %v1781 = vsub.s32 2, %v1780
    %v1782 = vrot.slane %v1769, %v1781
    %v1783 = vlaneseq
    %v1784 = vshrl.u32 %v1783, 7
    %v1785 = vsub.s32 3, %v1784
    %v1786 = vrot.slane %v1769, %v1785
    %v1791 = vadd.f32 %v1765, %v1774
    %v1792 = vadd.f32 %v1766, %v1778
    %v1793 = vadd.f32 %v1767, %v1782
    %v1794 = vadd.f32 %v1768, %v1786
    %vm1795 = vcmp.gt.f32.partialorder %v1791, 0.0
    %vm1796 = vcmp.gt.f32.partialorder %v1792, 0.0
    %vm1797 = vcmp.gt.f32.partialorder %v1793, 0.0
    %vm1798 = vcmp.gt.f32.partialorder %v1794, 0.0
    %v1799 = vmul.f32 %v1791, 0.01
    %v1800 = vmul.f32 %v1792, 0.01
    %v1801 = vmul.f32 %v1793, 0.01
    %v1802 = vmul.f32 %v1794, 0.01
    %v1803 = vsel %vm1795, %v1791, %v1799
    %v1804 = vsel %vm1796, %v1792, %v1800
    %v1805 = vsel %vm1797, %v1793, %v1801
    %v1806 = vsel %vm1798, %v1794, %v1802
    %v1807 = vpack.c.bf16 %v1803, %v1803
    %v1808 = vpack.c.bf16 %v1804, %v1804
    %v1809 = vpack.c.bf16 %v1805, %v1805
    %v1810 = vpack.c.bf16 %v1806, %v1806
    %v1811 = vld [vmem:[#allocation11] sm:$0xff]
    %v1812 = vld [vmem:[#allocation11 + $0x8] sm:$0xff]
    %v1813 = vld [vmem:[#allocation11 + $0x10] sm:$0xff]
    %v1814 = vld [vmem:[#allocation11 + $0x18] sm:$0xff]
    %v1815 = vld [vmem:[#allocation11 + $0x20] sm:$0xff]
    %v1816 = vld [vmem:[#allocation11 + $0x28] sm:$0xff]
    %v1817 = vld [vmem:[#allocation11 + $0x30] sm:$0xff]
    %v1818 = vld [vmem:[#allocation11 + $0x38] sm:$0xff]
    %v1819 = vld [vmem:[#allocation11 + $0x40] sm:$0xff]
    %v1820 = vld [vmem:[#allocation11 + $0x48] sm:$0xff]
    %v1821 = vld [vmem:[#allocation11 + $0x50] sm:$0xff]
    %v1822 = vld [vmem:[#allocation11 + $0x58] sm:$0xff]
    %v1823 = vld [vmem:[#allocation11 + $0x60] sm:$0xff]
    %v1824 = vld [vmem:[#allocation11 + $0x68] sm:$0xff]
    %v1825 = vld [vmem:[#allocation11 + $0x70] sm:$0xff]
    %v1826 = vld [vmem:[#allocation11 + $0x78] sm:$0xff]
    %v1827 = vld [vmem:[#allocation11 + $0x80] sm:$0xff]
    %v1828 = vld [vmem:[#allocation11 + $0x88] sm:$0xff]
    %v1829 = vld [vmem:[#allocation11 + $0x90] sm:$0xff]
    %v1830 = vld [vmem:[#allocation11 + $0x98] sm:$0xff]
    %v1831 = vld [vmem:[#allocation11 + $0xa0] sm:$0xff]
    %v1832 = vld [vmem:[#allocation11 + $0xa8] sm:$0xff]
    %v1833 = vld [vmem:[#allocation11 + $0xb0] sm:$0xff]
    %v1834 = vld [vmem:[#allocation11 + $0xb8] sm:$0xff]
    %v1835 = vld [vmem:[#allocation11 + $0xc0] sm:$0xff]
    %v1836 = vld [vmem:[#allocation11 + $0xc8] sm:$0xff]
    %v1837 = vld [vmem:[#allocation11 + $0xd0] sm:$0xff]
    %v1838 = vld [vmem:[#allocation11 + $0xd8] sm:$0xff]
    %v1839 = vld [vmem:[#allocation11 + $0xe0] sm:$0xff]
    %v1840 = vld [vmem:[#allocation11 + $0xe8] sm:$0xff]
    %v1841 = vld [vmem:[#allocation11 + $0xf0] sm:$0xff]
    %v1842 = vld [vmem:[#allocation11 + $0xf8] sm:$0xff]
    %v1843 = vunpack.c.l.s8.bf16 %v1811
    %v1844 = vunpack.c.l.s8.bf16 %v1812
    %v1845 = vunpack.c.h.s8.bf16 %v1811
    %v1846 = vunpack.c.h.s8.bf16 %v1812
    %v1847 = vunpack.c.l.s8.bf16 %v1813
    %v1848 = vunpack.c.l.s8.bf16 %v1814
    %v1849 = vunpack.c.h.s8.bf16 %v1813
    %v1850 = vunpack.c.h.s8.bf16 %v1814
    %v1851 = vunpack.c.l.s8.bf16 %v1815
    %v1852 = vunpack.c.l.s8.bf16 %v1816
    %v1853 = vunpack.c.h.s8.bf16 %v1815
    %v1854 = vunpack.c.h.s8.bf16 %v1816
    %v1855 = vunpack.c.l.s8.bf16 %v1817
    %v1856 = vunpack.c.l.s8.bf16 %v1818
    %v1857 = vunpack.c.h.s8.bf16 %v1817
    %v1858 = vunpack.c.h.s8.bf16 %v1818
    %v1859 = vunpack.c.l.s8.bf16 %v1819
    %v1860 = vunpack.c.l.s8.bf16 %v1820
    %v1861 = vunpack.c.h.s8.bf16 %v1819
    %v1862 = vunpack.c.h.s8.bf16 %v1820
    %v1863 = vunpack.c.l.s8.bf16 %v1821
    %v1864 = vunpack.c.l.s8.bf16 %v1822
    %v1865 = vunpack.c.h.s8.bf16 %v1821
    %v1866 = vunpack.c.h.s8.bf16 %v1822
    %v1867 = vunpack.c.l.s8.bf16 %v1823
    %v1868 = vunpack.c.l.s8.bf16 %v1824
    %v1869 = vunpack.c.h.s8.bf16 %v1823
    %v1870 = vunpack.c.h.s8.bf16 %v1824
    %v1871 = vunpack.c.l.s8.bf16 %v1825
    %v1872 = vunpack.c.l.s8.bf16 %v1826
    %v1873 = vunpack.c.h.s8.bf16 %v1825
    %v1874 = vunpack.c.h.s8.bf16 %v1826
    %v1875 = vunpack.c.l.s8.bf16 %v1827
    %v1876 = vunpack.c.l.s8.bf16 %v1828
    %v1877 = vunpack.c.h.s8.bf16 %v1827
    %v1878 = vunpack.c.h.s8.bf16 %v1828
    %v1879 = vunpack.c.l.s8.bf16 %v1829
    %v1880 = vunpack.c.l.s8.bf16 %v1830
    %v1881 = vunpack.c.h.s8.bf16 %v1829
    %v1882 = vunpack.c.h.s8.bf16 %v1830
    %v1883 = vunpack.c.l.s8.bf16 %v1831
    %v1884 = vunpack.c.l.s8.bf16 %v1832
    %v1885 = vunpack.c.h.s8.bf16 %v1831
    %v1886 = vunpack.c.h.s8.bf16 %v1832
    %v1887 = vunpack.c.l.s8.bf16 %v1833
    %v1888 = vunpack.c.l.s8.bf16 %v1834
    %v1889 = vunpack.c.h.s8.bf16 %v1833
    %v1890 = vunpack.c.h.s8.bf16 %v1834
    %v1891 = vunpack.c.l.s8.bf16 %v1835
    %v1892 = vunpack.c.l.s8.bf16 %v1836
    %v1893 = vunpack.c.h.s8.bf16 %v1835
    %v1894 = vunpack.c.h.s8.bf16 %v1836
    %v1895 = vunpack.c.l.s8.bf16 %v1837
    %v1896 = vunpack.c.l.s8.bf16 %v1838
    %v1897 = vunpack.c.h.s8.bf16 %v1837
    %v1898 = vunpack.c.h.s8.bf16 %v1838
    %v1899 = vunpack.c.l.s8.bf16 %v1839
    %v1900 = vunpack.c.l.s8.bf16 %v1840
    %v1901 = vunpack.c.h.s8.bf16 %v1839
    %v1902 = vunpack.c.h.s8.bf16 %v1840
    %v1903 = vunpack.c.l.s8.bf16 %v1841
    %v1904 = vunpack.c.l.s8.bf16 %v1842
    %v1905 = vunpack.c.h.s8.bf16 %v1841
    %v1906 = vunpack.c.h.s8.bf16 %v1842
    %1907 = vmatprep.subr.bf16.mxu0 %v1858
    %1908 = vmatpush1.bf16.msra.mxu0 %v1857
    %1909 = vmatprep.subr.bf16.mxu0 %v1856
    %1910 = vmatpush1.bf16.msra.mxu0 %v1855
    %1911 = vmatprep.subr.bf16.mxu0 %v1854
    %1912 = vmatpush1.bf16.msra.mxu0 %v1853
    %1913 = vmatprep.subr.bf16.mxu0 %v1852
    %1914 = vmatpush1.bf16.msra.mxu0 %v1851
    %1915 = vmatprep.subr.bf16.mxu0 %v1850
    %1916 = vmatpush1.bf16.msra.mxu0 %v1849
    %1917 = vmatprep.subr.bf16.mxu0 %v1848
    %1918 = vmatpush1.bf16.msra.mxu0 %v1847
    %1919 = vmatprep.subr.bf16.mxu0 %v1846
    %1920 = vmatpush1.bf16.msra.mxu0 %v1845
    %1921 = vmatprep.subr.bf16.mxu0 %v1844
    %1922 = vmatpush1.bf16.msra.mxu0 %v1843
    %1923 = vmatprep.subr.bf16.mxu0 %v1874
    %1924 = vmatpush2.bf16.msra.mxu0 %v1873
    %1925 = vmatprep.subr.bf16.mxu0 %v1872
    %1926 = vmatpush2.bf16.msra.mxu0 %v1871
    %1927 = vmatprep.subr.bf16.mxu0 %v1870
    %1928 = vmatpush2.bf16.msra.mxu0 %v1869
    %1929 = vmatprep.subr.bf16.mxu0 %v1868
    %1930 = vmatpush2.bf16.msra.mxu0 %v1867
    %1931 = vmatprep.subr.bf16.mxu0 %v1866
    %1932 = vmatpush2.bf16.msra.mxu0 %v1865
    %1933 = vmatprep.subr.bf16.mxu0 %v1864
    %1934 = vmatpush2.bf16.msra.mxu0 %v1863
    %1935 = vmatprep.subr.bf16.mxu0 %v1862
    %1936 = vmatpush2.bf16.msra.mxu0 %v1861
    %1937 = vmatprep.subr.bf16.mxu0 %v1860
    %1938 = vmatpush2.bf16.msra.mxu0 %v1859
    %1939 = vmatprep.mubr.bf16.mxu0 %v1808
    %1940 = vmatmul.mubr.bf16.gmra.mxu0 %v1807
    %v1941 = vpop.f32.mrf.mxu0
    %v1942 = vadd.f32 0.0, %v1941
    %v1943 = vpop.f32.mrf.mxu0
    %v1944 = vadd.f32 0.0, %v1943
    %v1945 = vpop.f32.mrf.mxu0
    %v1946 = vpop.f32.mrf.mxu0
    %1947 = vdwg.mxu0
    %1948 = vmatprep.subr.bf16.mxu0 %v1890
    %1949 = vmatpush1.bf16.msra.mxu0 %v1889
    %1950 = vmatprep.subr.bf16.mxu0 %v1888
    %1951 = vmatpush1.bf16.msra.mxu0 %v1887
    %1952 = vmatprep.subr.bf16.mxu0 %v1886
    %1953 = vmatpush1.bf16.msra.mxu0 %v1885
    %1954 = vmatprep.subr.bf16.mxu0 %v1884
    %1955 = vmatpush1.bf16.msra.mxu0 %v1883
    %1956 = vmatprep.subr.bf16.mxu0 %v1882
    %1957 = vmatpush1.bf16.msra.mxu0 %v1881
    %1958 = vmatprep.subr.bf16.mxu0 %v1880
    %1959 = vmatpush1.bf16.msra.mxu0 %v1879
    %1960 = vmatprep.subr.bf16.mxu0 %v1878
    %1961 = vmatpush1.bf16.msra.mxu0 %v1877
    %1962 = vmatprep.subr.bf16.mxu0 %v1876
    %1963 = vmatpush1.bf16.msra.mxu0 %v1875
    %1964 = vmatprep.subr.bf16.mxu0 %v1906
    %1965 = vmatpush2.bf16.msra.mxu0 %v1905
    %1966 = vmatprep.subr.bf16.mxu0 %v1904
    %1967 = vmatpush2.bf16.msra.mxu0 %v1903
    %1968 = vmatprep.subr.bf16.mxu0 %v1902
    %1969 = vmatpush2.bf16.msra.mxu0 %v1901
    %1970 = vmatprep.subr.bf16.mxu0 %v1900
    %1971 = vmatpush2.bf16.msra.mxu0 %v1899
    %1972 = vmatprep.subr.bf16.mxu0 %v1898
    %1973 = vmatpush2.bf16.msra.mxu0 %v1897
    %1974 = vmatprep.subr.bf16.mxu0 %v1896
    %1975 = vmatpush2.bf16.msra.mxu0 %v1895
    %1976 = vmatprep.subr.bf16.mxu0 %v1894
    %1977 = vmatpush2.bf16.msra.mxu0 %v1893
    %1978 = vmatprep.subr.bf16.mxu0 %v1892
    %1979 = vmatpush2.bf16.msra.mxu0 %v1891
    %1980 = vmatprep.mubr.bf16.mxu0 %v1810
    %1981 = vmatmul.mubr.bf16.gmra.mxu0 %v1809
    %v1982 = vpop.f32.mrf.mxu0
    %v1983 = vadd.f32 %v1942, %v1982
    %v1984 = vpop.f32.mrf.mxu0
    %v1985 = vadd.f32 %v1944, %v1984
    %v1986 = vpop.f32.mrf.mxu0
    %v1987 = vpop.f32.mrf.mxu0
    %1988 = vdwg.mxu0
    %v1989 = vld [vmem:[%s8] sm:$0x3]
    %v1991 = vlaneseq
    %v1992 = vshrl.u32 %v1991, 7
    %v1993 = vsub.s32 0, %v1992
    %v1994 = vrot.slane %v1989, %v1993
    %v1995 = vlaneseq
    %v1996 = vshrl.u32 %v1995, 7
    %v1997 = vsub.s32 1, %v1996
    %v1998 = vrot.slane %v1989, %v1997
    %v2001 = vmul.f32 %v1983, %v1994
    %v2002 = vmul.f32 %v1985, %v1998
    %v2003 = vld [vmem:[%s9] sm:$0x3]
    %v2005 = vlaneseq
    %v2006 = vshrl.u32 %v2005, 7
    %v2007 = vsub.s32 0, %v2006
    %v2008 = vrot.slane %v2003, %v2007
    %v2009 = vlaneseq
    %v2010 = vshrl.u32 %v2009, 7
    %v2011 = vsub.s32 1, %v2010
    %v2012 = vrot.slane %v2003, %v2011
    %v2015 = vadd.f32 %v2001, %v2008
    %v2016 = vadd.f32 %v2002, %v2012
    %vm2017 = vcmp.gt.f32.partialorder %v2015, 0.0
    %vm2018 = vcmp.gt.f32.partialorder %v2016, 0.0
    %v2019 = vmul.f32 %v2015, 0.01
    %v2020 = vmul.f32 %v2016, 0.01
    %v2021 = vsel %vm2017, %v2015, %v2019
    %v2022 = vsel %vm2018, %v2016, %v2020
    %v2023 = vpack.c.bf16 %v2021, %v2021
    %v2024 = vpack.c.bf16 %v2022, %v2022
    %v2025 = vld [vmem:[#allocation13] sm:$0xff]
    %v2026 = vld [vmem:[#allocation13 + $0x8] sm:$0xff]
    %v2027 = vld [vmem:[#allocation13 + $0x10] sm:$0xff]
    %v2028 = vld [vmem:[#allocation13 + $0x18] sm:$0xff]
    %v2029 = vld [vmem:[#allocation13 + $0x20] sm:$0xff]
    %v2030 = vld [vmem:[#allocation13 + $0x28] sm:$0xff]
    %v2031 = vld [vmem:[#allocation13 + $0x30] sm:$0xff]
    %v2032 = vld [vmem:[#allocation13 + $0x38] sm:$0xff]
    %v2033 = vld [vmem:[#allocation13 + $0x40] sm:$0xff]
    %v2034 = vld [vmem:[#allocation13 + $0x48] sm:$0xff]
    %v2035 = vld [vmem:[#allocation13 + $0x50] sm:$0xff]
    %v2036 = vld [vmem:[#allocation13 + $0x58] sm:$0xff]
    %v2037 = vld [vmem:[#allocation13 + $0x60] sm:$0xff]
    %v2038 = vld [vmem:[#allocation13 + $0x68] sm:$0xff]
    %v2039 = vld [vmem:[#allocation13 + $0x70] sm:$0xff]
    %v2040 = vld [vmem:[#allocation13 + $0x78] sm:$0xff]
    %v2041 = vld [vmem:[#allocation13 + $0x80] sm:$0xff]
    %v2042 = vld [vmem:[#allocation13 + $0x88] sm:$0xff]
    %v2043 = vld [vmem:[#allocation13 + $0x90] sm:$0xff]
    %v2044 = vld [vmem:[#allocation13 + $0x98] sm:$0xff]
    %v2045 = vld [vmem:[#allocation13 + $0xa0] sm:$0xff]
    %v2046 = vld [vmem:[#allocation13 + $0xa8] sm:$0xff]
    %v2047 = vld [vmem:[#allocation13 + $0xb0] sm:$0xff]
    %v2048 = vld [vmem:[#allocation13 + $0xb8] sm:$0xff]
    %v2049 = vld [vmem:[#allocation13 + $0xc0] sm:$0xff]
    %v2050 = vld [vmem:[#allocation13 + $0xc8] sm:$0xff]
    %v2051 = vld [vmem:[#allocation13 + $0xd0] sm:$0xff]
    %v2052 = vld [vmem:[#allocation13 + $0xd8] sm:$0xff]
    %v2053 = vld [vmem:[#allocation13 + $0xe0] sm:$0xff]
    %v2054 = vld [vmem:[#allocation13 + $0xe8] sm:$0xff]
    %v2055 = vld [vmem:[#allocation13 + $0xf0] sm:$0xff]
    %v2056 = vld [vmem:[#allocation13 + $0xf8] sm:$0xff]
    %v2057 = vld [vmem:[#allocation13 + $0x100] sm:$0xff]
    %v2058 = vld [vmem:[#allocation13 + $0x108] sm:$0xff]
    %v2059 = vld [vmem:[#allocation13 + $0x110] sm:$0xff]
    %v2060 = vld [vmem:[#allocation13 + $0x118] sm:$0xff]
    %v2061 = vld [vmem:[#allocation13 + $0x120] sm:$0xff]
    %v2062 = vld [vmem:[#allocation13 + $0x128] sm:$0xff]
    %v2063 = vld [vmem:[#allocation13 + $0x130] sm:$0xff]
    %v2064 = vld [vmem:[#allocation13 + $0x138] sm:$0xff]
    %v2065 = vld [vmem:[#allocation13 + $0x140] sm:$0xff]
    %v2066 = vld [vmem:[#allocation13 + $0x148] sm:$0xff]
    %v2067 = vld [vmem:[#allocation13 + $0x150] sm:$0xff]
    %v2068 = vld [vmem:[#allocation13 + $0x158] sm:$0xff]
    %v2069 = vld [vmem:[#allocation13 + $0x160] sm:$0xff]
    %v2070 = vld [vmem:[#allocation13 + $0x168] sm:$0xff]
    %v2071 = vld [vmem:[#allocation13 + $0x170] sm:$0xff]
    %v2072 = vld [vmem:[#allocation13 + $0x178] sm:$0xff]
    %v2073 = vld [vmem:[#allocation13 + $0x180] sm:$0xff]
    %v2074 = vld [vmem:[#allocation13 + $0x188] sm:$0xff]
    %v2075 = vld [vmem:[#allocation13 + $0x190] sm:$0xff]
    %v2076 = vld [vmem:[#allocation13 + $0x198] sm:$0xff]
    %v2077 = vld [vmem:[#allocation13 + $0x1a0] sm:$0xff]
    %v2078 = vld [vmem:[#allocation13 + $0x1a8] sm:$0xff]
    %v2079 = vld [vmem:[#allocation13 + $0x1b0] sm:$0xff]
    %v2080 = vld [vmem:[#allocation13 + $0x1b8] sm:$0xff]
    %v2081 = vld [vmem:[#allocation13 + $0x1c0] sm:$0xff]
    %v2082 = vld [vmem:[#allocation13 + $0x1c8] sm:$0xff]
    %v2083 = vld [vmem:[#allocation13 + $0x1d0] sm:$0xff]
    %v2084 = vld [vmem:[#allocation13 + $0x1d8] sm:$0xff]
    %v2085 = vld [vmem:[#allocation13 + $0x1e0] sm:$0xff]
    %v2086 = vld [vmem:[#allocation13 + $0x1e8] sm:$0xff]
    %v2087 = vld [vmem:[#allocation13 + $0x1f0] sm:$0xff]
    %v2088 = vld [vmem:[#allocation13 + $0x1f8] sm:$0xff]
    %v2089 = vld [vmem:[#allocation13 + $0x200] sm:$0xff]
    %v2090 = vld [vmem:[#allocation13 + $0x208] sm:$0xff]
    %v2091 = vld [vmem:[#allocation13 + $0x210] sm:$0xff]
    %v2092 = vld [vmem:[#allocation13 + $0x218] sm:$0xff]
    %v2093 = vld [vmem:[#allocation13 + $0x220] sm:$0xff]
    %v2094 = vld [vmem:[#allocation13 + $0x228] sm:$0xff]
    %v2095 = vld [vmem:[#allocation13 + $0x230] sm:$0xff]
    %v2096 = vld [vmem:[#allocation13 + $0x238] sm:$0xff]
    %v2097 = vld [vmem:[#allocation13 + $0x240] sm:$0xff]
    %v2098 = vld [vmem:[#allocation13 + $0x248] sm:$0xff]
    %v2099 = vld [vmem:[#allocation13 + $0x250] sm:$0xff]
    %v2100 = vld [vmem:[#allocation13 + $0x258] sm:$0xff]
    %v2101 = vld [vmem:[#allocation13 + $0x260] sm:$0xff]
    %v2102 = vld [vmem:[#allocation13 + $0x268] sm:$0xff]
    %v2103 = vld [vmem:[#allocation13 + $0x270] sm:$0xff]
    %v2104 = vld [vmem:[#allocation13 + $0x278] sm:$0xff]
    %v2105 = vld [vmem:[#allocation13 + $0x280] sm:$0xff]
    %v2106 = vld [vmem:[#allocation13 + $0x288] sm:$0xff]
    %v2107 = vld [vmem:[#allocation13 + $0x290] sm:$0xff]
    %v2108 = vld [vmem:[#allocation13 + $0x298] sm:$0xff]
    %v2109 = vld [vmem:[#allocation13 + $0x2a0] sm:$0xff]
    %v2110 = vld [vmem:[#allocation13 + $0x2a8] sm:$0xff]
    %v2111 = vld [vmem:[#allocation13 + $0x2b0] sm:$0xff]
    %v2112 = vld [vmem:[#allocation13 + $0x2b8] sm:$0xff]
    %v2113 = vld [vmem:[#allocation13 + $0x2c0] sm:$0xff]
    %v2114 = vld [vmem:[#allocation13 + $0x2c8] sm:$0xff]
    %v2115 = vld [vmem:[#allocation13 + $0x2d0] sm:$0xff]
    %v2116 = vld [vmem:[#allocation13 + $0x2d8] sm:$0xff]
    %v2117 = vld [vmem:[#allocation13 + $0x2e0] sm:$0xff]
    %v2118 = vld [vmem:[#allocation13 + $0x2e8] sm:$0xff]
    %v2119 = vld [vmem:[#allocation13 + $0x2f0] sm:$0xff]
    %v2120 = vld [vmem:[#allocation13 + $0x2f8] sm:$0xff]
    %v2121 = vld [vmem:[#allocation13 + $0x300] sm:$0xff]
    %v2122 = vld [vmem:[#allocation13 + $0x308] sm:$0xff]
    %v2123 = vld [vmem:[#allocation13 + $0x310] sm:$0xff]
    %v2124 = vld [vmem:[#allocation13 + $0x318] sm:$0xff]
    %v2125 = vld [vmem:[#allocation13 + $0x320] sm:$0xff]
    %v2126 = vld [vmem:[#allocation13 + $0x328] sm:$0xff]
    %v2127 = vld [vmem:[#allocation13 + $0x330] sm:$0xff]
    %v2128 = vld [vmem:[#allocation13 + $0x338] sm:$0xff]
    %v2129 = vld [vmem:[#allocation13 + $0x340] sm:$0xff]
    %v2130 = vld [vmem:[#allocation13 + $0x348] sm:$0xff]
    %v2131 = vld [vmem:[#allocation13 + $0x350] sm:$0xff]
    %v2132 = vld [vmem:[#allocation13 + $0x358] sm:$0xff]
    %v2133 = vld [vmem:[#allocation13 + $0x360] sm:$0xff]
    %v2134 = vld [vmem:[#allocation13 + $0x368] sm:$0xff]
    %v2135 = vld [vmem:[#allocation13 + $0x370] sm:$0xff]
    %v2136 = vld [vmem:[#allocation13 + $0x378] sm:$0xff]
    %v2137 = vld [vmem:[#allocation13 + $0x380] sm:$0xff]
    %v2138 = vld [vmem:[#allocation13 + $0x388] sm:$0xff]
    %v2139 = vld [vmem:[#allocation13 + $0x390] sm:$0xff]
    %v2140 = vld [vmem:[#allocation13 + $0x398] sm:$0xff]
    %v2141 = vld [vmem:[#allocation13 + $0x3a0] sm:$0xff]
    %v2142 = vld [vmem:[#allocation13 + $0x3a8] sm:$0xff]
    %v2143 = vld [vmem:[#allocation13 + $0x3b0] sm:$0xff]
    %v2144 = vld [vmem:[#allocation13 + $0x3b8] sm:$0xff]
    %v2145 = vld [vmem:[#allocation13 + $0x3c0] sm:$0xff]
    %v2146 = vld [vmem:[#allocation13 + $0x3c8] sm:$0xff]
    %v2147 = vld [vmem:[#allocation13 + $0x3d0] sm:$0xff]
    %v2148 = vld [vmem:[#allocation13 + $0x3d8] sm:$0xff]
    %v2149 = vld [vmem:[#allocation13 + $0x3e0] sm:$0xff]
    %v2150 = vld [vmem:[#allocation13 + $0x3e8] sm:$0xff]
    %v2151 = vld [vmem:[#allocation13 + $0x3f0] sm:$0xff]
    %v2152 = vld [vmem:[#allocation13 + $0x3f8] sm:$0xff]
    %v2153 = vld [vmem:[#allocation13 + $0x400] sm:$0xff]
    %v2154 = vld [vmem:[#allocation13 + $0x408] sm:$0xff]
    %v2155 = vld [vmem:[#allocation13 + $0x410] sm:$0xff]
    %v2156 = vld [vmem:[#allocation13 + $0x418] sm:$0xff]
    %v2157 = vld [vmem:[#allocation13 + $0x420] sm:$0xff]
    %v2158 = vld [vmem:[#allocation13 + $0x428] sm:$0xff]
    %v2159 = vld [vmem:[#allocation13 + $0x430] sm:$0xff]
    %v2160 = vld [vmem:[#allocation13 + $0x438] sm:$0xff]
    %v2161 = vld [vmem:[#allocation13 + $0x440] sm:$0xff]
    %v2162 = vld [vmem:[#allocation13 + $0x448] sm:$0xff]
    %v2163 = vld [vmem:[#allocation13 + $0x450] sm:$0xff]
    %v2164 = vld [vmem:[#allocation13 + $0x458] sm:$0xff]
    %v2165 = vld [vmem:[#allocation13 + $0x460] sm:$0xff]
    %v2166 = vld [vmem:[#allocation13 + $0x468] sm:$0xff]
    %v2167 = vld [vmem:[#allocation13 + $0x470] sm:$0xff]
    %v2168 = vld [vmem:[#allocation13 + $0x478] sm:$0xff]
    %v2169 = vld [vmem:[#allocation13 + $0x480] sm:$0xff]
    %v2170 = vld [vmem:[#allocation13 + $0x488] sm:$0xff]
    %v2171 = vld [vmem:[#allocation13 + $0x490] sm:$0xff]
    %v2172 = vld [vmem:[#allocation13 + $0x498] sm:$0xff]
    %v2173 = vld [vmem:[#allocation13 + $0x4a0] sm:$0xff]
    %v2174 = vld [vmem:[#allocation13 + $0x4a8] sm:$0xff]
    %v2175 = vld [vmem:[#allocation13 + $0x4b0] sm:$0xff]
    %v2176 = vld [vmem:[#allocation13 + $0x4b8] sm:$0xff]
    %v2177 = vld [vmem:[#allocation13 + $0x4c0] sm:$0xff]
    %v2178 = vld [vmem:[#allocation13 + $0x4c8] sm:$0xff]
    %v2179 = vld [vmem:[#allocation13 + $0x4d0] sm:$0xff]
    %v2180 = vld [vmem:[#allocation13 + $0x4d8] sm:$0xff]
    %v2181 = vld [vmem:[#allocation13 + $0x4e0] sm:$0xff]
    %v2182 = vld [vmem:[#allocation13 + $0x4e8] sm:$0xff]
    %v2183 = vld [vmem:[#allocation13 + $0x4f0] sm:$0xff]
    %v2184 = vld [vmem:[#allocation13 + $0x4f8] sm:$0xff]
    %v2185 = vld [vmem:[#allocation13 + $0x500] sm:$0xff]
    %v2186 = vld [vmem:[#allocation13 + $0x508] sm:$0xff]
    %v2187 = vld [vmem:[#allocation13 + $0x510] sm:$0xff]
    %v2188 = vld [vmem:[#allocation13 + $0x518] sm:$0xff]
    %v2189 = vld [vmem:[#allocation13 + $0x520] sm:$0xff]
    %v2190 = vld [vmem:[#allocation13 + $0x528] sm:$0xff]
    %v2191 = vld [vmem:[#allocation13 + $0x530] sm:$0xff]
    %v2192 = vld [vmem:[#allocation13 + $0x538] sm:$0xff]
    %v2193 = vld [vmem:[#allocation13 + $0x540] sm:$0xff]
    %v2194 = vld [vmem:[#allocation13 + $0x548] sm:$0xff]
    %v2195 = vld [vmem:[#allocation13 + $0x550] sm:$0xff]
    %v2196 = vld [vmem:[#allocation13 + $0x558] sm:$0xff]
    %v2197 = vld [vmem:[#allocation13 + $0x560] sm:$0xff]
    %v2198 = vld [vmem:[#allocation13 + $0x568] sm:$0xff]
    %v2199 = vld [vmem:[#allocation13 + $0x570] sm:$0xff]
    %v2200 = vld [vmem:[#allocation13 + $0x578] sm:$0xff]
    %v2201 = vld [vmem:[#allocation13 + $0x580] sm:$0xff]
    %v2202 = vld [vmem:[#allocation13 + $0x588] sm:$0xff]
    %v2203 = vld [vmem:[#allocation13 + $0x590] sm:$0xff]
    %v2204 = vld [vmem:[#allocation13 + $0x598] sm:$0xff]
    %v2205 = vld [vmem:[#allocation13 + $0x5a0] sm:$0xff]
    %v2206 = vld [vmem:[#allocation13 + $0x5a8] sm:$0xff]
    %v2207 = vld [vmem:[#allocation13 + $0x5b0] sm:$0xff]
    %v2208 = vld [vmem:[#allocation13 + $0x5b8] sm:$0xff]
    %v2209 = vld [vmem:[#allocation13 + $0x5c0] sm:$0xff]
    %v2210 = vld [vmem:[#allocation13 + $0x5c8] sm:$0xff]
    %v2211 = vld [vmem:[#allocation13 + $0x5d0] sm:$0xff]
    %v2212 = vld [vmem:[#allocation13 + $0x5d8] sm:$0xff]
    %v2213 = vld [vmem:[#allocation13 + $0x5e0] sm:$0xff]
    %v2214 = vld [vmem:[#allocation13 + $0x5e8] sm:$0xff]
    %v2215 = vld [vmem:[#allocation13 + $0x5f0] sm:$0xff]
    %v2216 = vld [vmem:[#allocation13 + $0x5f8] sm:$0xff]
    %v2217 = vunpack.c.l.s8.bf16 %v2025
    %v2218 = vunpack.c.l.s8.bf16 %v2026
    %v2219 = vunpack.c.l.s8.bf16 %v2027
    %v2220 = vunpack.c.l.s8.bf16 %v2028
    %v2221 = vunpack.c.l.s8.bf16 %v2029
    %v2222 = vunpack.c.l.s8.bf16 %v2030
    %v2223 = vunpack.c.l.s8.bf16 %v2031
    %v2224 = vunpack.c.l.s8.bf16 %v2032
    %v2225 = vunpack.c.l.s8.bf16 %v2033
    %v2226 = vunpack.c.l.s8.bf16 %v2034
    %v2227 = vunpack.c.l.s8.bf16 %v2035
    %v2228 = vunpack.c.l.s8.bf16 %v2036
    %v2229 = vunpack.c.l.s8.bf16 %v2037
    %v2230 = vunpack.c.l.s8.bf16 %v2038
    %v2231 = vunpack.c.l.s8.bf16 %v2039
    %v2232 = vunpack.c.l.s8.bf16 %v2040
    %v2233 = vunpack.c.l.s8.bf16 %v2041
    %v2234 = vunpack.c.l.s8.bf16 %v2042
    %v2235 = vunpack.c.l.s8.bf16 %v2043
    %v2236 = vunpack.c.l.s8.bf16 %v2044
    %v2237 = vunpack.c.l.s8.bf16 %v2045
    %v2238 = vunpack.c.l.s8.bf16 %v2046
    %v2239 = vunpack.c.l.s8.bf16 %v2047
    %v2240 = vunpack.c.l.s8.bf16 %v2048
    %v2241 = vunpack.c.h.s8.bf16 %v2025
    %v2242 = vunpack.c.h.s8.bf16 %v2026
    %v2243 = vunpack.c.h.s8.bf16 %v2027
    %v2244 = vunpack.c.h.s8.bf16 %v2028
    %v2245 = vunpack.c.h.s8.bf16 %v2029
    %v2246 = vunpack.c.h.s8.bf16 %v2030
    %v2247 = vunpack.c.h.s8.bf16 %v2031
    %v2248 = vunpack.c.h.s8.bf16 %v2032
    %v2249 = vunpack.c.h.s8.bf16 %v2033
    %v2250 = vunpack.c.h.s8.bf16 %v2034
    %v2251 = vunpack.c.h.s8.bf16 %v2035
    %v2252 = vunpack.c.h.s8.bf16 %v2036
    %v2253 = vunpack.c.h.s8.bf16 %v2037
    %v2254 = vunpack.c.h.s8.bf16 %v2038
    %v2255 = vunpack.c.h.s8.bf16 %v2039
    %v2256 = vunpack.c.h.s8.bf16 %v2040
    %v2257 = vunpack.c.h.s8.bf16 %v2041
    %v2258 = vunpack.c.h.s8.bf16 %v2042
    %v2259 = vunpack.c.h.s8.bf16 %v2043
    %v2260 = vunpack.c.h.s8.bf16 %v2044
    %v2261 = vunpack.c.h.s8.bf16 %v2045
    %v2262 = vunpack.c.h.s8.bf16 %v2046
    %v2263 = vunpack.c.h.s8.bf16 %v2047
    %v2264 = vunpack.c.h.s8.bf16 %v2048
    %v2265 = vunpack.c.l.s8.bf16 %v2049
    %v2266 = vunpack.c.l.s8.bf16 %v2050
    %v2267 = vunpack.c.l.s8.bf16 %v2051
    %v2268 = vunpack.c.l.s8.bf16 %v2052
    %v2269 = vunpack.c.l.s8.bf16 %v2053
    %v2270 = vunpack.c.l.s8.bf16 %v2054
    %v2271 = vunpack.c.l.s8.bf16 %v2055
    %v2272 = vunpack.c.l.s8.bf16 %v2056
    %v2273 = vunpack.c.l.s8.bf16 %v2057
    %v2274 = vunpack.c.l.s8.bf16 %v2058
    %v2275 = vunpack.c.l.s8.bf16 %v2059
    %v2276 = vunpack.c.l.s8.bf16 %v2060
    %v2277 = vunpack.c.l.s8.bf16 %v2061
    %v2278 = vunpack.c.l.s8.bf16 %v2062
    %v2279 = vunpack.c.l.s8.bf16 %v2063
    %v2280 = vunpack.c.l.s8.bf16 %v2064
    %v2281 = vunpack.c.l.s8.bf16 %v2065
    %v2282 = vunpack.c.l.s8.bf16 %v2066
    %v2283 = vunpack.c.l.s8.bf16 %v2067
    %v2284 = vunpack.c.l.s8.bf16 %v2068
    %v2285 = vunpack.c.l.s8.bf16 %v2069
    %v2286 = vunpack.c.l.s8.bf16 %v2070
    %v2287 = vunpack.c.l.s8.bf16 %v2071
    %v2288 = vunpack.c.l.s8.bf16 %v2072
    %v2289 = vunpack.c.h.s8.bf16 %v2049
    %v2290 = vunpack.c.h.s8.bf16 %v2050
    %v2291 = vunpack.c.h.s8.bf16 %v2051
    %v2292 = vunpack.c.h.s8.bf16 %v2052
    %v2293 = vunpack.c.h.s8.bf16 %v2053
    %v2294 = vunpack.c.h.s8.bf16 %v2054
    %v2295 = vunpack.c.h.s8.bf16 %v2055
    %v2296 = vunpack.c.h.s8.bf16 %v2056
    %v2297 = vunpack.c.h.s8.bf16 %v2057
    %v2298 = vunpack.c.h.s8.bf16 %v2058
    %v2299 = vunpack.c.h.s8.bf16 %v2059
    %v2300 = vunpack.c.h.s8.bf16 %v2060
    %v2301 = vunpack.c.h.s8.bf16 %v2061
    %v2302 = vunpack.c.h.s8.bf16 %v2062
    %v2303 = vunpack.c.h.s8.bf16 %v2063
    %v2304 = vunpack.c.h.s8.bf16 %v2064
    %v2305 = vunpack.c.h.s8.bf16 %v2065
    %v2306 = vunpack.c.h.s8.bf16 %v2066
    %v2307 = vunpack.c.h.s8.bf16 %v2067
    %v2308 = vunpack.c.h.s8.bf16 %v2068
    %v2309 = vunpack.c.h.s8.bf16 %v2069
    %v2310 = vunpack.c.h.s8.bf16 %v2070
    %v2311 = vunpack.c.h.s8.bf16 %v2071
    %v2312 = vunpack.c.h.s8.bf16 %v2072
    %v2313 = vunpack.c.l.s8.bf16 %v2073
    %v2314 = vunpack.c.l.s8.bf16 %v2074
    %v2315 = vunpack.c.l.s8.bf16 %v2075
    %v2316 = vunpack.c.l.s8.bf16 %v2076
    %v2317 = vunpack.c.l.s8.bf16 %v2077
    %v2318 = vunpack.c.l.s8.bf16 %v2078
    %v2319 = vunpack.c.l.s8.bf16 %v2079
    %v2320 = vunpack.c.l.s8.bf16 %v2080
    %v2321 = vunpack.c.l.s8.bf16 %v2081
    %v2322 = vunpack.c.l.s8.bf16 %v2082
    %v2323 = vunpack.c.l.s8.bf16 %v2083
    %v2324 = vunpack.c.l.s8.bf16 %v2084
    %v2325 = vunpack.c.l.s8.bf16 %v2085
    %v2326 = vunpack.c.l.s8.bf16 %v2086
    %v2327 = vunpack.c.l.s8.bf16 %v2087
    %v2328 = vunpack.c.l.s8.bf16 %v2088
    %v2329 = vunpack.c.l.s8.bf16 %v2089
    %v2330 = vunpack.c.l.s8.bf16 %v2090
    %v2331 = vunpack.c.l.s8.bf16 %v2091
    %v2332 = vunpack.c.l.s8.bf16 %v2092
    %v2333 = vunpack.c.l.s8.bf16 %v2093
    %v2334 = vunpack.c.l.s8.bf16 %v2094
    %v2335 = vunpack.c.l.s8.bf16 %v2095
    %v2336 = vunpack.c.l.s8.bf16 %v2096
    %v2337 = vunpack.c.h.s8.bf16 %v2073
    %v2338 = vunpack.c.h.s8.bf16 %v2074
    %v2339 = vunpack.c.h.s8.bf16 %v2075
    %v2340 = vunpack.c.h.s8.bf16 %v2076
    %v2341 = vunpack.c.h.s8.bf16 %v2077
    %v2342 = vunpack.c.h.s8.bf16 %v2078
    %v2343 = vunpack.c.h.s8.bf16 %v2079
    %v2344 = vunpack.c.h.s8.bf16 %v2080
    %v2345 = vunpack.c.h.s8.bf16 %v2081
    %v2346 = vunpack.c.h.s8.bf16 %v2082
    %v2347 = vunpack.c.h.s8.bf16 %v2083
    %v2348 = vunpack.c.h.s8.bf16 %v2084
    %v2349 = vunpack.c.h.s8.bf16 %v2085
    %v2350 = vunpack.c.h.s8.bf16 %v2086
    %v2351 = vunpack.c.h.s8.bf16 %v2087
    %v2352 = vunpack.c.h.s8.bf16 %v2088
    %v2353 = vunpack.c.h.s8.bf16 %v2089
    %v2354 = vunpack.c.h.s8.bf16 %v2090
    %v2355 = vunpack.c.h.s8.bf16 %v2091
    %v2356 = vunpack.c.h.s8.bf16 %v2092
    %v2357 = vunpack.c.h.s8.bf16 %v2093
    %v2358 = vunpack.c.h.s8.bf16 %v2094
    %v2359 = vunpack.c.h.s8.bf16 %v2095
    %v2360 = vunpack.c.h.s8.bf16 %v2096
    %v2361 = vunpack.c.l.s8.bf16 %v2097
    %v2362 = vunpack.c.l.s8.bf16 %v2098
    %v2363 = vunpack.c.l.s8.bf16 %v2099
    %v2364 = vunpack.c.l.s8.bf16 %v2100
    %v2365 = vunpack.c.l.s8.bf16 %v2101
    %v2366 = vunpack.c.l.s8.bf16 %v2102
    %v2367 = vunpack.c.l.s8.bf16 %v2103
    %v2368 = vunpack.c.l.s8.bf16 %v2104
    %v2369 = vunpack.c.l.s8.bf16 %v2105
    %v2370 = vunpack.c.l.s8.bf16 %v2106
    %v2371 = vunpack.c.l.s8.bf16 %v2107
    %v2372 = vunpack.c.l.s8.bf16 %v2108
    %v2373 = vunpack.c.l.s8.bf16 %v2109
    %v2374 = vunpack.c.l.s8.bf16 %v2110
    %v2375 = vunpack.c.l.s8.bf16 %v2111
    %v2376 = vunpack.c.l.s8.bf16 %v2112
    %v2377 = vunpack.c.l.s8.bf16 %v2113
    %v2378 = vunpack.c.l.s8.bf16 %v2114
    %v2379 = vunpack.c.l.s8.bf16 %v2115
    %v2380 = vunpack.c.l.s8.bf16 %v2116
    %v2381 = vunpack.c.l.s8.bf16 %v2117
    %v2382 = vunpack.c.l.s8.bf16 %v2118
    %v2383 = vunpack.c.l.s8.bf16 %v2119
    %v2384 = vunpack.c.l.s8.bf16 %v2120
    %v2385 = vunpack.c.h.s8.bf16 %v2097
    %v2386 = vunpack.c.h.s8.bf16 %v2098
    %v2387 = vunpack.c.h.s8.bf16 %v2099
    %v2388 = vunpack.c.h.s8.bf16 %v2100
    %v2389 = vunpack.c.h.s8.bf16 %v2101
    %v2390 = vunpack.c.h.s8.bf16 %v2102
    %v2391 = vunpack.c.h.s8.bf16 %v2103
    %v2392 = vunpack.c.h.s8.bf16 %v2104
    %v2393 = vunpack.c.h.s8.bf16 %v2105
    %v2394 = vunpack.c.h.s8.bf16 %v2106
    %v2395 = vunpack.c.h.s8.bf16 %v2107
    %v2396 = vunpack.c.h.s8.bf16 %v2108
    %v2397 = vunpack.c.h.s8.bf16 %v2109
    %v2398 = vunpack.c.h.s8.bf16 %v2110
    %v2399 = vunpack.c.h.s8.bf16 %v2111
    %v2400 = vunpack.c.h.s8.bf16 %v2112
    %v2401 = vunpack.c.h.s8.bf16 %v2113
    %v2402 = vunpack.c.h.s8.bf16 %v2114
    %v2403 = vunpack.c.h.s8.bf16 %v2115
    %v2404 = vunpack.c.h.s8.bf16 %v2116
    %v2405 = vunpack.c.h.s8.bf16 %v2117
    %v2406 = vunpack.c.h.s8.bf16 %v2118
    %v2407 = vunpack.c.h.s8.bf16 %v2119
    %v2408 = vunpack.c.h.s8.bf16 %v2120
    %v2409 = vunpack.c.l.s8.bf16 %v2121
    %v2410 = vunpack.c.l.s8.bf16 %v2122
    %v2411 = vunpack.c.l.s8.bf16 %v2123
    %v2412 = vunpack.c.l.s8.bf16 %v2124
    %v2413 = vunpack.c.l.s8.bf16 %v2125
    %v2414 = vunpack.c.l.s8.bf16 %v2126
    %v2415 = vunpack.c.l.s8.bf16 %v2127
    %v2416 = vunpack.c.l.s8.bf16 %v2128
    %v2417 = vunpack.c.l.s8.bf16 %v2129
    %v2418 = vunpack.c.l.s8.bf16 %v2130
    %v2419 = vunpack.c.l.s8.bf16 %v2131
    %v2420 = vunpack.c.l.s8.bf16 %v2132
    %v2421 = vunpack.c.l.s8.bf16 %v2133
    %v2422 = vunpack.c.l.s8.bf16 %v2134
    %v2423 = vunpack.c.l.s8.bf16 %v2135
    %v2424 = vunpack.c.l.s8.bf16 %v2136
    %v2425 = vunpack.c.l.s8.bf16 %v2137
    %v2426 = vunpack.c.l.s8.bf16 %v2138
    %v2427 = vunpack.c.l.s8.bf16 %v2139
    %v2428 = vunpack.c.l.s8.bf16 %v2140
    %v2429 = vunpack.c.l.s8.bf16 %v2141
    %v2430 = vunpack.c.l.s8.bf16 %v2142
    %v2431 = vunpack.c.l.s8.bf16 %v2143
    %v2432 = vunpack.c.l.s8.bf16 %v2144
    %v2433 = vunpack.c.h.s8.bf16 %v2121
    %v2434 = vunpack.c.h.s8.bf16 %v2122
    %v2435 = vunpack.c.h.s8.bf16 %v2123
    %v2436 = vunpack.c.h.s8.bf16 %v2124
    %v2437 = vunpack.c.h.s8.bf16 %v2125
    %v2438 = vunpack.c.h.s8.bf16 %v2126
    %v2439 = vunpack.c.h.s8.bf16 %v2127
    %v2440 = vunpack.c.h.s8.bf16 %v2128
    %v2441 = vunpack.c.h.s8.bf16 %v2129
    %v2442 = vunpack.c.h.s8.bf16 %v2130
    %v2443 = vunpack.c.h.s8.bf16 %v2131
    %v2444 = vunpack.c.h.s8.bf16 %v2132
    %v2445 = vunpack.c.h.s8.bf16 %v2133
    %v2446 = vunpack.c.h.s8.bf16 %v2134
    %v2447 = vunpack.c.h.s8.bf16 %v2135
    %v2448 = vunpack.c.h.s8.bf16 %v2136
    %v2449 = vunpack.c.h.s8.bf16 %v2137
    %v2450 = vunpack.c.h.s8.bf16 %v2138
    %v2451 = vunpack.c.h.s8.bf16 %v2139
    %v2452 = vunpack.c.h.s8.bf16 %v2140
    %v2453 = vunpack.c.h.s8.bf16 %v2141
    %v2454 = vunpack.c.h.s8.bf16 %v2142
    %v2455 = vunpack.c.h.s8.bf16 %v2143
    %v2456 = vunpack.c.h.s8.bf16 %v2144
    %v2457 = vunpack.c.l.s8.bf16 %v2145
    %v2458 = vunpack.c.l.s8.bf16 %v2146
    %v2459 = vunpack.c.l.s8.bf16 %v2147
    %v2460 = vunpack.c.l.s8.bf16 %v2148
    %v2461 = vunpack.c.l.s8.bf16 %v2149
    %v2462 = vunpack.c.l.s8.bf16 %v2150
    %v2463 = vunpack.c.l.s8.bf16 %v2151
    %v2464 = vunpack.c.l.s8.bf16 %v2152
    %v2465 = vunpack.c.l.s8.bf16 %v2153
    %v2466 = vunpack.c.l.s8.bf16 %v2154
    %v2467 = vunpack.c.l.s8.bf16 %v2155
    %v2468 = vunpack.c.l.s8.bf16 %v2156
    %v2469 = vunpack.c.l.s8.bf16 %v2157
    %v2470 = vunpack.c.l.s8.bf16 %v2158
    %v2471 = vunpack.c.l.s8.bf16 %v2159
    %v2472 = vunpack.c.l.s8.bf16 %v2160
    %v2473 = vunpack.c.l.s8.bf16 %v2161
    %v2474 = vunpack.c.l.s8.bf16 %v2162
    %v2475 = vunpack.c.l.s8.bf16 %v2163
    %v2476 = vunpack.c.l.s8.bf16 %v2164
    %v2477 = vunpack.c.l.s8.bf16 %v2165
    %v2478 = vunpack.c.l.s8.bf16 %v2166
    %v2479 = vunpack.c.l.s8.bf16 %v2167
    %v2480 = vunpack.c.l.s8.bf16 %v2168
    %v2481 = vunpack.c.h.s8.bf16 %v2145
    %v2482 = vunpack.c.h.s8.bf16 %v2146
    %v2483 = vunpack.c.h.s8.bf16 %v2147
    %v2484 = vunpack.c.h.s8.bf16 %v2148
    %v2485 = vunpack.c.h.s8.bf16 %v2149
    %v2486 = vunpack.c.h.s8.bf16 %v2150
    %v2487 = vunpack.c.h.s8.bf16 %v2151
    %v2488 = vunpack.c.h.s8.bf16 %v2152
    %v2489 = vunpack.c.h.s8.bf16 %v2153
    %v2490 = vunpack.c.h.s8.bf16 %v2154
    %v2491 = vunpack.c.h.s8.bf16 %v2155
    %v2492 = vunpack.c.h.s8.bf16 %v2156
    %v2493 = vunpack.c.h.s8.bf16 %v2157
    %v2494 = vunpack.c.h.s8.bf16 %v2158
    %v2495 = vunpack.c.h.s8.bf16 %v2159
    %v2496 = vunpack.c.h.s8.bf16 %v2160
    %v2497 = vunpack.c.h.s8.bf16 %v2161
    %v2498 = vunpack.c.h.s8.bf16 %v2162
    %v2499 = vunpack.c.h.s8.bf16 %v2163
    %v2500 = vunpack.c.h.s8.bf16 %v2164
    %v2501 = vunpack.c.h.s8.bf16 %v2165
    %v2502 = vunpack.c.h.s8.bf16 %v2166
    %v2503 = vunpack.c.h.s8.bf16 %v2167
    %v2504 = vunpack.c.h.s8.bf16 %v2168
    %v2505 = vunpack.c.l.s8.bf16 %v2169
    %v2506 = vunpack.c.l.s8.bf16 %v2170
    %v2507 = vunpack.c.l.s8.bf16 %v2171
    %v2508 = vunpack.c.l.s8.bf16 %v2172
    %v2509 = vunpack.c.l.s8.bf16 %v2173
    %v2510 = vunpack.c.l.s8.bf16 %v2174
    %v2511 = vunpack.c.l.s8.bf16 %v2175
    %v2512 = vunpack.c.l.s8.bf16 %v2176
    %v2513 = vunpack.c.l.s8.bf16 %v2177
    %v2514 = vunpack.c.l.s8.bf16 %v2178
    %v2515 = vunpack.c.l.s8.bf16 %v2179
    %v2516 = vunpack.c.l.s8.bf16 %v2180
    %v2517 = vunpack.c.l.s8.bf16 %v2181
    %v2518 = vunpack.c.l.s8.bf16 %v2182
    %v2519 = vunpack.c.l.s8.bf16 %v2183
    %v2520 = vunpack.c.l.s8.bf16 %v2184
    %v2521 = vunpack.c.l.s8.bf16 %v2185
    %v2522 = vunpack.c.l.s8.bf16 %v2186
    %v2523 = vunpack.c.l.s8.bf16 %v2187
    %v2524 = vunpack.c.l.s8.bf16 %v2188
    %v2525 = vunpack.c.l.s8.bf16 %v2189
    %v2526 = vunpack.c.l.s8.bf16 %v2190
    %v2527 = vunpack.c.l.s8.bf16 %v2191
    %v2528 = vunpack.c.l.s8.bf16 %v2192
    %v2529 = vunpack.c.h.s8.bf16 %v2169
    %v2530 = vunpack.c.h.s8.bf16 %v2170
    %v2531 = vunpack.c.h.s8.bf16 %v2171
    %v2532 = vunpack.c.h.s8.bf16 %v2172
    %v2533 = vunpack.c.h.s8.bf16 %v2173
    %v2534 = vunpack.c.h.s8.bf16 %v2174
    %v2535 = vunpack.c.h.s8.bf16 %v2175
    %v2536 = vunpack.c.h.s8.bf16 %v2176
    %v2537 = vunpack.c.h.s8.bf16 %v2177
    %v2538 = vunpack.c.h.s8.bf16 %v2178
    %v2539 = vunpack.c.h.s8.bf16 %v2179
    %v2540 = vunpack.c.h.s8.bf16 %v2180
    %v2541 = vunpack.c.h.s8.bf16 %v2181
    %v2542 = vunpack.c.h.s8.bf16 %v2182
    %v2543 = vunpack.c.h.s8.bf16 %v2183
    %v2544 = vunpack.c.h.s8.bf16 %v2184
    %v2545 = vunpack.c.h.s8.bf16 %v2185
    %v2546 = vunpack.c.h.s8.bf16 %v2186
    %v2547 = vunpack.c.h.s8.bf16 %v2187
    %v2548 = vunpack.c.h.s8.bf16 %v2188
    %v2549 = vunpack.c.h.s8.bf16 %v2189
    %v2550 = vunpack.c.h.s8.bf16 %v2190
    %v2551 = vunpack.c.h.s8.bf16 %v2191
    %v2552 = vunpack.c.h.s8.bf16 %v2192
    %v2553 = vunpack.c.l.s8.bf16 %v2193
    %v2554 = vunpack.c.l.s8.bf16 %v2194
    %v2555 = vunpack.c.l.s8.bf16 %v2195
    %v2556 = vunpack.c.l.s8.bf16 %v2196
    %v2557 = vunpack.c.l.s8.bf16 %v2197
    %v2558 = vunpack.c.l.s8.bf16 %v2198
    %v2559 = vunpack.c.l.s8.bf16 %v2199
    %v2560 = vunpack.c.l.s8.bf16 %v2200
    %v2561 = vunpack.c.l.s8.bf16 %v2201
    %v2562 = vunpack.c.l.s8.bf16 %v2202
    %v2563 = vunpack.c.l.s8.bf16 %v2203
    %v2564 = vunpack.c.l.s8.bf16 %v2204
    %v2565 = vunpack.c.l.s8.bf16 %v2205
    %v2566 = vunpack.c.l.s8.bf16 %v2206
    %v2567 = vunpack.c.l.s8.bf16 %v2207
    %v2568 = vunpack.c.l.s8.bf16 %v2208
    %v2569 = vunpack.c.l.s8.bf16 %v2209
    %v2570 = vunpack.c.l.s8.bf16 %v2210
    %v2571 = vunpack.c.l.s8.bf16 %v2211
    %v2572 = vunpack.c.l.s8.bf16 %v2212
    %v2573 = vunpack.c.l.s8.bf16 %v2213
    %v2574 = vunpack.c.l.s8.bf16 %v2214
    %v2575 = vunpack.c.l.s8.bf16 %v2215
    %v2576 = vunpack.c.l.s8.bf16 %v2216
    %v2577 = vunpack.c.h.s8.bf16 %v2193
    %v2578 = vunpack.c.h.s8.bf16 %v2194
    %v2579 = vunpack.c.h.s8.bf16 %v2195
    %v2580 = vunpack.c.h.s8.bf16 %v2196
    %v2581 = vunpack.c.h.s8.bf16 %v2197
    %v2582 = vunpack.c.h.s8.bf16 %v2198
    %v2583 = vunpack.c.h.s8.bf16 %v2199
    %v2584 = vunpack.c.h.s8.bf16 %v2200
    %v2585 = vunpack.c.h.s8.bf16 %v2201
    %v2586 = vunpack.c.h.s8.bf16 %v2202
    %v2587 = vunpack.c.h.s8.bf16 %v2203
    %v2588 = vunpack.c.h.s8.bf16 %v2204
    %v2589 = vunpack.c.h.s8.bf16 %v2205
    %v2590 = vunpack.c.h.s8.bf16 %v2206
    %v2591 = vunpack.c.h.s8.bf16 %v2207
    %v2592 = vunpack.c.h.s8.bf16 %v2208
    %v2593 = vunpack.c.h.s8.bf16 %v2209
    %v2594 = vunpack.c.h.s8.bf16 %v2210
    %v2595 = vunpack.c.h.s8.bf16 %v2211
    %v2596 = vunpack.c.h.s8.bf16 %v2212
    %v2597 = vunpack.c.h.s8.bf16 %v2213
    %v2598 = vunpack.c.h.s8.bf16 %v2214
    %v2599 = vunpack.c.h.s8.bf16 %v2215
    %v2600 = vunpack.c.h.s8.bf16 %v2216
    %2601 = vmatprep.subr.bf16.mxu0 %v2386
    %2602 = vmatpush1.bf16.msra.mxu0 %v2385
    %2603 = vmatprep.subr.bf16.mxu0 %v2362
    %2604 = vmatpush1.bf16.msra.mxu0 %v2361
    %2605 = vmatprep.subr.bf16.mxu0 %v2338
    %2606 = vmatpush1.bf16.msra.mxu0 %v2337
    %2607 = vmatprep.subr.bf16.mxu0 %v2314
    %2608 = vmatpush1.bf16.msra.mxu0 %v2313
    %2609 = vmatprep.subr.bf16.mxu0 %v2290
    %2610 = vmatpush1.bf16.msra.mxu0 %v2289
    %2611 = vmatprep.subr.bf16.mxu0 %v2266
    %2612 = vmatpush1.bf16.msra.mxu0 %v2265
    %2613 = vmatprep.subr.bf16.mxu0 %v2242
    %2614 = vmatpush1.bf16.msra.mxu0 %v2241
    %2615 = vmatprep.subr.bf16.mxu0 %v2218
    %2616 = vmatpush1.bf16.msra.mxu0 %v2217
    %2617 = vmatprep.subr.bf16.mxu0 %v2578
    %2618 = vmatpush2.bf16.msra.mxu0 %v2577
    %2619 = vmatprep.subr.bf16.mxu0 %v2554
    %2620 = vmatpush2.bf16.msra.mxu0 %v2553
    %2621 = vmatprep.subr.bf16.mxu0 %v2530
    %2622 = vmatpush2.bf16.msra.mxu0 %v2529
    %2623 = vmatprep.subr.bf16.mxu0 %v2506
    %2624 = vmatpush2.bf16.msra.mxu0 %v2505
    %2625 = vmatprep.subr.bf16.mxu0 %v2482
    %2626 = vmatpush2.bf16.msra.mxu0 %v2481
    %2627 = vmatprep.subr.bf16.mxu0 %v2458
    %2628 = vmatpush2.bf16.msra.mxu0 %v2457
    %2629 = vmatprep.subr.bf16.mxu0 %v2434
    %2630 = vmatpush2.bf16.msra.mxu0 %v2433
    %2631 = vmatprep.subr.bf16.mxu0 %v2410
    %2632 = vmatpush2.bf16.msra.mxu0 %v2409
    %2633 = vmatprep.mubr.bf16.mxu0 %v2024
    %2634 = vmatmul.mubr.bf16.gmra.mxu0 %v2023
    %v2635 = vpop.f32.mrf.mxu0
    %v2636 = vadd.f32 0.0, %v2635
    %v2637 = vpop.f32.mrf.mxu0
    %v2638 = vadd.f32 0.0, %v2637
    %v2639 = vpop.f32.mrf.mxu0
    %v2640 = vpop.f32.mrf.mxu0
    %2641 = vdwg.mxu0
    %2642 = vmatprep.subr.bf16.mxu0 %v2388
    %2643 = vmatpush1.bf16.msra.mxu0 %v2387
    %2644 = vmatprep.subr.bf16.mxu0 %v2364
    %2645 = vmatpush1.bf16.msra.mxu0 %v2363
    %2646 = vmatprep.subr.bf16.mxu0 %v2340
    %2647 = vmatpush1.bf16.msra.mxu0 %v2339
    %2648 = vmatprep.subr.bf16.mxu0 %v2316
    %2649 = vmatpush1.bf16.msra.mxu0 %v2315
    %2650 = vmatprep.subr.bf16.mxu0 %v2292
    %2651 = vmatpush1.bf16.msra.mxu0 %v2291
    %2652 = vmatprep.subr.bf16.mxu0 %v2268
    %2653 = vmatpush1.bf16.msra.mxu0 %v2267
    %2654 = vmatprep.subr.bf16.mxu0 %v2244
    %2655 = vmatpush1.bf16.msra.mxu0 %v2243
    %2656 = vmatprep.subr.bf16.mxu0 %v2220
    %2657 = vmatpush1.bf16.msra.mxu0 %v2219
    %2658 = vmatprep.subr.bf16.mxu0 %v2580
    %2659 = vmatpush2.bf16.msra.mxu0 %v2579
    %2660 = vmatprep.subr.bf16.mxu0 %v2556
    %2661 = vmatpush2.bf16.msra.mxu0 %v2555
    %2662 = vmatprep.subr.bf16.mxu0 %v2532
    %2663 = vmatpush2.bf16.msra.mxu0 %v2531
    %2664 = vmatprep.subr.bf16.mxu0 %v2508
    %2665 = vmatpush2.bf16.msra.mxu0 %v2507
    %2666 = vmatprep.subr.bf16.mxu0 %v2484
    %2667 = vmatpush2.bf16.msra.mxu0 %v2483
    %2668 = vmatprep.subr.bf16.mxu0 %v2460
    %2669 = vmatpush2.bf16.msra.mxu0 %v2459
    %2670 = vmatprep.subr.bf16.mxu0 %v2436
    %2671 = vmatpush2.bf16.msra.mxu0 %v2435
    %2672 = vmatprep.subr.bf16.mxu0 %v2412
    %2673 = vmatpush2.bf16.msra.mxu0 %v2411
    %2674 = vmatprep.mubr.bf16.mxu0 %v2024
    %2675 = vmatmul.mubr.bf16.gmra.mxu0 %v2023
    %v2676 = vpop.f32.mrf.mxu0
    %v2677 = vadd.f32 0.0, %v2676
    %v2678 = vpop.f32.mrf.mxu0
    %v2679 = vadd.f32 0.0, %v2678
    %v2680 = vpop.f32.mrf.mxu0
    %v2681 = vpop.f32.mrf.mxu0
    %2682 = vdwg.mxu0
    %2683 = vmatprep.subr.bf16.mxu0 %v2390
    %2684 = vmatpush1.bf16.msra.mxu0 %v2389
    %2685 = vmatprep.subr.bf16.mxu0 %v2366
    %2686 = vmatpush1.bf16.msra.mxu0 %v2365
    %2687 = vmatprep.subr.bf16.mxu0 %v2342
    %2688 = vmatpush1.bf16.msra.mxu0 %v2341
    %2689 = vmatprep.subr.bf16.mxu0 %v2318
    %2690 = vmatpush1.bf16.msra.mxu0 %v2317
    %2691 = vmatprep.subr.bf16.mxu0 %v2294
    %2692 = vmatpush1.bf16.msra.mxu0 %v2293
    %2693 = vmatprep.subr.bf16.mxu0 %v2270
    %2694 = vmatpush1.bf16.msra.mxu0 %v2269
    %2695 = vmatprep.subr.bf16.mxu0 %v2246
    %2696 = vmatpush1.bf16.msra.mxu0 %v2245
    %2697 = vmatprep.subr.bf16.mxu0 %v2222
    %2698 = vmatpush1.bf16.msra.mxu0 %v2221
    %2699 = vmatprep.subr.bf16.mxu0 %v2582
    %2700 = vmatpush2.bf16.msra.mxu0 %v2581
    %2701 = vmatprep.subr.bf16.mxu0 %v2558
    %2702 = vmatpush2.bf16.msra.mxu0 %v2557
    %2703 = vmatprep.subr.bf16.mxu0 %v2534
    %2704 = vmatpush2.bf16.msra.mxu0 %v2533
    %2705 = vmatprep.subr.bf16.mxu0 %v2510
    %2706 = vmatpush2.bf16.msra.mxu0 %v2509
    %2707 = vmatprep.subr.bf16.mxu0 %v2486
    %2708 = vmatpush2.bf16.msra.mxu0 %v2485
    %2709 = vmatprep.subr.bf16.mxu0 %v2462
    %2710 = vmatpush2.bf16.msra.mxu0 %v2461
    %2711 = vmatprep.subr.bf16.mxu0 %v2438
    %2712 = vmatpush2.bf16.msra.mxu0 %v2437
    %2713 = vmatprep.subr.bf16.mxu0 %v2414
    %2714 = vmatpush2.bf16.msra.mxu0 %v2413
    %2715 = vmatprep.mubr.bf16.mxu0 %v2024
    %2716 = vmatmul.mubr.bf16.gmra.mxu0 %v2023
    %v2717 = vpop.f32.mrf.mxu0
    %v2718 = vadd.f32 0.0, %v2717
    %v2719 = vpop.f32.mrf.mxu0
    %v2720 = vadd.f32 0.0, %v2719
    %v2721 = vpop.f32.mrf.mxu0
    %v2722 = vpop.f32.mrf.mxu0
    %2723 = vdwg.mxu0
    %2724 = vmatprep.subr.bf16.mxu0 %v2392
    %2725 = vmatpush1.bf16.msra.mxu0 %v2391
    %2726 = vmatprep.subr.bf16.mxu0 %v2368
    %2727 = vmatpush1.bf16.msra.mxu0 %v2367
    %2728 = vmatprep.subr.bf16.mxu0 %v2344
    %2729 = vmatpush1.bf16.msra.mxu0 %v2343
    %2730 = vmatprep.subr.bf16.mxu0 %v2320
    %2731 = vmatpush1.bf16.msra.mxu0 %v2319
    %2732 = vmatprep.subr.bf16.mxu0 %v2296
    %2733 = vmatpush1.bf16.msra.mxu0 %v2295
    %2734 = vmatprep.subr.bf16.mxu0 %v2272
    %2735 = vmatpush1.bf16.msra.mxu0 %v2271
    %2736 = vmatprep.subr.bf16.mxu0 %v2248
    %2737 = vmatpush1.bf16.msra.mxu0 %v2247
    %2738 = vmatprep.subr.bf16.mxu0 %v2224
    %2739 = vmatpush1.bf16.msra.mxu0 %v2223
    %2740 = vmatprep.subr.bf16.mxu0 %v2584
    %2741 = vmatpush2.bf16.msra.mxu0 %v2583
    %2742 = vmatprep.subr.bf16.mxu0 %v2560
    %2743 = vmatpush2.bf16.msra.mxu0 %v2559
    %2744 = vmatprep.subr.bf16.mxu0 %v2536
    %2745 = vmatpush2.bf16.msra.mxu0 %v2535
    %2746 = vmatprep.subr.bf16.mxu0 %v2512
    %2747 = vmatpush2.bf16.msra.mxu0 %v2511
    %2748 = vmatprep.subr.bf16.mxu0 %v2488
    %2749 = vmatpush2.bf16.msra.mxu0 %v2487
    %2750 = vmatprep.subr.bf16.mxu0 %v2464
    %2751 = vmatpush2.bf16.msra.mxu0 %v2463
    %2752 = vmatprep.subr.bf16.mxu0 %v2440
    %2753 = vmatpush2.bf16.msra.mxu0 %v2439
    %2754 = vmatprep.subr.bf16.mxu0 %v2416
    %2755 = vmatpush2.bf16.msra.mxu0 %v2415
    %2756 = vmatprep.mubr.bf16.mxu0 %v2024
    %2757 = vmatmul.mubr.bf16.gmra.mxu0 %v2023
    %v2758 = vpop.f32.mrf.mxu0
    %v2759 = vadd.f32 0.0, %v2758
    %v2760 = vpop.f32.mrf.mxu0
    %v2761 = vadd.f32 0.0, %v2760
    %v2762 = vpop.f32.mrf.mxu0
    %v2763 = vpop.f32.mrf.mxu0
    %2764 = vdwg.mxu0
    %2765 = vmatprep.subr.bf16.mxu0 %v2394
    %2766 = vmatpush1.bf16.msra.mxu0 %v2393
    %2767 = vmatprep.subr.bf16.mxu0 %v2370
    %2768 = vmatpush1.bf16.msra.mxu0 %v2369
    %2769 = vmatprep.subr.bf16.mxu0 %v2346
    %2770 = vmatpush1.bf16.msra.mxu0 %v2345
    %2771 = vmatprep.subr.bf16.mxu0 %v2322
    %2772 = vmatpush1.bf16.msra.mxu0 %v2321
    %2773 = vmatprep.subr.bf16.mxu0 %v2298
    %2774 = vmatpush1.bf16.msra.mxu0 %v2297
    %2775 = vmatprep.subr.bf16.mxu0 %v2274
    %2776 = vmatpush1.bf16.msra.mxu0 %v2273
    %2777 = vmatprep.subr.bf16.mxu0 %v2250
    %2778 = vmatpush1.bf16.msra.mxu0 %v2249
    %2779 = vmatprep.subr.bf16.mxu0 %v2226
    %2780 = vmatpush1.bf16.msra.mxu0 %v2225
    %2781 = vmatprep.subr.bf16.mxu0 %v2586
    %2782 = vmatpush2.bf16.msra.mxu0 %v2585
    %2783 = vmatprep.subr.bf16.mxu0 %v2562
    %2784 = vmatpush2.bf16.msra.mxu0 %v2561
    %2785 = vmatprep.subr.bf16.mxu0 %v2538
    %2786 = vmatpush2.bf16.msra.mxu0 %v2537
    %2787 = vmatprep.subr.bf16.mxu0 %v2514
    %2788 = vmatpush2.bf16.msra.mxu0 %v2513
    %2789 = vmatprep.subr.bf16.mxu0 %v2490
    %2790 = vmatpush2.bf16.msra.mxu0 %v2489
    %2791 = vmatprep.subr.bf16.mxu0 %v2466
    %2792 = vmatpush2.bf16.msra.mxu0 %v2465
    %2793 = vmatprep.subr.bf16.mxu0 %v2442
    %2794 = vmatpush2.bf16.msra.mxu0 %v2441
    %2795 = vmatprep.subr.bf16.mxu0 %v2418
    %2796 = vmatpush2.bf16.msra.mxu0 %v2417
    %2797 = vmatprep.mubr.bf16.mxu0 %v2024
    %2798 = vmatmul.mubr.bf16.gmra.mxu0 %v2023
    %v2799 = vpop.f32.mrf.mxu0
    %v2800 = vadd.f32 0.0, %v2799
    %v2801 = vpop.f32.mrf.mxu0
    %v2802 = vadd.f32 0.0, %v2801
    %v2803 = vpop.f32.mrf.mxu0
    %v2804 = vpop.f32.mrf.mxu0
    %2805 = vdwg.mxu0
    %2806 = vmatprep.subr.bf16.mxu0 %v2396
    %2807 = vmatpush1.bf16.msra.mxu0 %v2395
    %2808 = vmatprep.subr.bf16.mxu0 %v2372
    %2809 = vmatpush1.bf16.msra.mxu0 %v2371
    %2810 = vmatprep.subr.bf16.mxu0 %v2348
    %2811 = vmatpush1.bf16.msra.mxu0 %v2347
    %2812 = vmatprep.subr.bf16.mxu0 %v2324
    %2813 = vmatpush1.bf16.msra.mxu0 %v2323
    %2814 = vmatprep.subr.bf16.mxu0 %v2300
    %2815 = vmatpush1.bf16.msra.mxu0 %v2299
    %2816 = vmatprep.subr.bf16.mxu0 %v2276
    %2817 = vmatpush1.bf16.msra.mxu0 %v2275
    %2818 = vmatprep.subr.bf16.mxu0 %v2252
    %2819 = vmatpush1.bf16.msra.mxu0 %v2251
    %2820 = vmatprep.subr.bf16.mxu0 %v2228
    %2821 = vmatpush1.bf16.msra.mxu0 %v2227
    %2822 = vmatprep.subr.bf16.mxu0 %v2588
    %2823 = vmatpush2.bf16.msra.mxu0 %v2587
    %2824 = vmatprep.subr.bf16.mxu0 %v2564
    %2825 = vmatpush2.bf16.msra.mxu0 %v2563
    %2826 = vmatprep.subr.bf16.mxu0 %v2540
    %2827 = vmatpush2.bf16.msra.mxu0 %v2539
    %2828 = vmatprep.subr.bf16.mxu0 %v2516
    %2829 = vmatpush2.bf16.msra.mxu0 %v2515
    %2830 = vmatprep.subr.bf16.mxu0 %v2492
    %2831 = vmatpush2.bf16.msra.mxu0 %v2491
    %2832 = vmatprep.subr.bf16.mxu0 %v2468
    %2833 = vmatpush2.bf16.msra.mxu0 %v2467
    %2834 = vmatprep.subr.bf16.mxu0 %v2444
    %2835 = vmatpush2.bf16.msra.mxu0 %v2443
    %2836 = vmatprep.subr.bf16.mxu0 %v2420
    %2837 = vmatpush2.bf16.msra.mxu0 %v2419
    %2838 = vmatprep.mubr.bf16.mxu0 %v2024
    %2839 = vmatmul.mubr.bf16.gmra.mxu0 %v2023
    %v2840 = vpop.f32.mrf.mxu0
    %v2841 = vadd.f32 0.0, %v2840
    %v2842 = vpop.f32.mrf.mxu0
    %v2843 = vadd.f32 0.0, %v2842
    %v2844 = vpop.f32.mrf.mxu0
    %v2845 = vpop.f32.mrf.mxu0
    %2846 = vdwg.mxu0
    %2847 = vmatprep.subr.bf16.mxu0 %v2398
    %2848 = vmatpush1.bf16.msra.mxu0 %v2397
    %2849 = vmatprep.subr.bf16.mxu0 %v2374
    %2850 = vmatpush1.bf16.msra.mxu0 %v2373
    %2851 = vmatprep.subr.bf16.mxu0 %v2350
    %2852 = vmatpush1.bf16.msra.mxu0 %v2349
    %2853 = vmatprep.subr.bf16.mxu0 %v2326
    %2854 = vmatpush1.bf16.msra.mxu0 %v2325
    %2855 = vmatprep.subr.bf16.mxu0 %v2302
    %2856 = vmatpush1.bf16.msra.mxu0 %v2301
    %2857 = vmatprep.subr.bf16.mxu0 %v2278
    %2858 = vmatpush1.bf16.msra.mxu0 %v2277
    %2859 = vmatprep.subr.bf16.mxu0 %v2254
    %2860 = vmatpush1.bf16.msra.mxu0 %v2253
    %2861 = vmatprep.subr.bf16.mxu0 %v2230
    %2862 = vmatpush1.bf16.msra.mxu0 %v2229
    %2863 = vmatprep.subr.bf16.mxu0 %v2590
    %2864 = vmatpush2.bf16.msra.mxu0 %v2589
    %2865 = vmatprep.subr.bf16.mxu0 %v2566
    %2866 = vmatpush2.bf16.msra.mxu0 %v2565
    %2867 = vmatprep.subr.bf16.mxu0 %v2542
    %2868 = vmatpush2.bf16.msra.mxu0 %v2541
    %2869 = vmatprep.subr.bf16.mxu0 %v2518
    %2870 = vmatpush2.bf16.msra.mxu0 %v2517
    %2871 = vmatprep.subr.bf16.mxu0 %v2494
    %2872 = vmatpush2.bf16.msra.mxu0 %v2493
    %2873 = vmatprep.subr.bf16.mxu0 %v2470
    %2874 = vmatpush2.bf16.msra.mxu0 %v2469
    %2875 = vmatprep.subr.bf16.mxu0 %v2446
    %2876 = vmatpush2.bf16.msra.mxu0 %v2445
    %2877 = vmatprep.subr.bf16.mxu0 %v2422
    %2878 = vmatpush2.bf16.msra.mxu0 %v2421
    %2879 = vmatprep.mubr.bf16.mxu0 %v2024
    %2880 = vmatmul.mubr.bf16.gmra.mxu0 %v2023
    %v2881 = vpop.f32.mrf.mxu0
    %v2882 = vadd.f32 0.0, %v2881
    %v2883 = vpop.f32.mrf.mxu0
    %v2884 = vadd.f32 0.0, %v2883
    %v2885 = vpop.f32.mrf.mxu0
    %v2886 = vpop.f32.mrf.mxu0
    %2887 = vdwg.mxu0
    %2888 = vmatprep.subr.bf16.mxu0 %v2400
    %2889 = vmatpush1.bf16.msra.mxu0 %v2399
    %2890 = vmatprep.subr.bf16.mxu0 %v2376
    %2891 = vmatpush1.bf16.msra.mxu0 %v2375
    %2892 = vmatprep.subr.bf16.mxu0 %v2352
    %2893 = vmatpush1.bf16.msra.mxu0 %v2351
    %2894 = vmatprep.subr.bf16.mxu0 %v2328
    %2895 = vmatpush1.bf16.msra.mxu0 %v2327
    %2896 = vmatprep.subr.bf16.mxu0 %v2304
    %2897 = vmatpush1.bf16.msra.mxu0 %v2303
    %2898 = vmatprep.subr.bf16.mxu0 %v2280
    %2899 = vmatpush1.bf16.msra.mxu0 %v2279
    %2900 = vmatprep.subr.bf16.mxu0 %v2256
    %2901 = vmatpush1.bf16.msra.mxu0 %v2255
    %2902 = vmatprep.subr.bf16.mxu0 %v2232
    %2903 = vmatpush1.bf16.msra.mxu0 %v2231
    %2904 = vmatprep.subr.bf16.mxu0 %v2592
    %2905 = vmatpush2.bf16.msra.mxu0 %v2591
    %2906 = vmatprep.subr.bf16.mxu0 %v2568
    %2907 = vmatpush2.bf16.msra.mxu0 %v2567
    %2908 = vmatprep.subr.bf16.mxu0 %v2544
    %2909 = vmatpush2.bf16.msra.mxu0 %v2543
    %2910 = vmatprep.subr.bf16.mxu0 %v2520
    %2911 = vmatpush2.bf16.msra.mxu0 %v2519
    %2912 = vmatprep.subr.bf16.mxu0 %v2496
    %2913 = vmatpush2.bf16.msra.mxu0 %v2495
    %2914 = vmatprep.subr.bf16.mxu0 %v2472
    %2915 = vmatpush2.bf16.msra.mxu0 %v2471
    %2916 = vmatprep.subr.bf16.mxu0 %v2448
    %2917 = vmatpush2.bf16.msra.mxu0 %v2447
    %2918 = vmatprep.subr.bf16.mxu0 %v2424
    %2919 = vmatpush2.bf16.msra.mxu0 %v2423
    %2920 = vmatprep.mubr.bf16.mxu0 %v2024
    %2921 = vmatmul.mubr.bf16.gmra.mxu0 %v2023
    %v2922 = vpop.f32.mrf.mxu0
    %v2923 = vadd.f32 0.0, %v2922
    %v2924 = vpop.f32.mrf.mxu0
    %v2925 = vadd.f32 0.0, %v2924
    %v2926 = vpop.f32.mrf.mxu0
    %v2927 = vpop.f32.mrf.mxu0
    %2928 = vdwg.mxu0
    %2929 = vmatprep.subr.bf16.mxu0 %v2402
    %2930 = vmatpush1.bf16.msra.mxu0 %v2401
    %2931 = vmatprep.subr.bf16.mxu0 %v2378
    %2932 = vmatpush1.bf16.msra.mxu0 %v2377
    %2933 = vmatprep.subr.bf16.mxu0 %v2354
    %2934 = vmatpush1.bf16.msra.mxu0 %v2353
    %2935 = vmatprep.subr.bf16.mxu0 %v2330
    %2936 = vmatpush1.bf16.msra.mxu0 %v2329
    %2937 = vmatprep.subr.bf16.mxu0 %v2306
    %2938 = vmatpush1.bf16.msra.mxu0 %v2305
    %2939 = vmatprep.subr.bf16.mxu0 %v2282
    %2940 = vmatpush1.bf16.msra.mxu0 %v2281
    %2941 = vmatprep.subr.bf16.mxu0 %v2258
    %2942 = vmatpush1.bf16.msra.mxu0 %v2257
    %2943 = vmatprep.subr.bf16.mxu0 %v2234
    %2944 = vmatpush1.bf16.msra.mxu0 %v2233
    %2945 = vmatprep.subr.bf16.mxu0 %v2594
    %2946 = vmatpush2.bf16.msra.mxu0 %v2593
    %2947 = vmatprep.subr.bf16.mxu0 %v2570
    %2948 = vmatpush2.bf16.msra.mxu0 %v2569
    %2949 = vmatprep.subr.bf16.mxu0 %v2546
    %2950 = vmatpush2.bf16.msra.mxu0 %v2545
    %2951 = vmatprep.subr.bf16.mxu0 %v2522
    %2952 = vmatpush2.bf16.msra.mxu0 %v2521
    %2953 = vmatprep.subr.bf16.mxu0 %v2498
    %2954 = vmatpush2.bf16.msra.mxu0 %v2497
    %2955 = vmatprep.subr.bf16.mxu0 %v2474
    %2956 = vmatpush2.bf16.msra.mxu0 %v2473
    %2957 = vmatprep.subr.bf16.mxu0 %v2450
    %2958 = vmatpush2.bf16.msra.mxu0 %v2449
    %2959 = vmatprep.subr.bf16.mxu0 %v2426
    %2960 = vmatpush2.bf16.msra.mxu0 %v2425
    %2961 = vmatprep.mubr.bf16.mxu0 %v2024
    %2962 = vmatmul.mubr.bf16.gmra.mxu0 %v2023
    %v2963 = vpop.f32.mrf.mxu0
    %v2964 = vadd.f32 0.0, %v2963
    %v2965 = vpop.f32.mrf.mxu0
    %v2966 = vadd.f32 0.0, %v2965
    %v2967 = vpop.f32.mrf.mxu0
    %v2968 = vpop.f32.mrf.mxu0
    %2969 = vdwg.mxu0
    %2970 = vmatprep.subr.bf16.mxu0 %v2404
    %2971 = vmatpush1.bf16.msra.mxu0 %v2403
    %2972 = vmatprep.subr.bf16.mxu0 %v2380
    %2973 = vmatpush1.bf16.msra.mxu0 %v2379
    %2974 = vmatprep.subr.bf16.mxu0 %v2356
    %2975 = vmatpush1.bf16.msra.mxu0 %v2355
    %2976 = vmatprep.subr.bf16.mxu0 %v2332
    %2977 = vmatpush1.bf16.msra.mxu0 %v2331
    %2978 = vmatprep.subr.bf16.mxu0 %v2308
    %2979 = vmatpush1.bf16.msra.mxu0 %v2307
    %2980 = vmatprep.subr.bf16.mxu0 %v2284
    %2981 = vmatpush1.bf16.msra.mxu0 %v2283
    %2982 = vmatprep.subr.bf16.mxu0 %v2260
    %2983 = vmatpush1.bf16.msra.mxu0 %v2259
    %2984 = vmatprep.subr.bf16.mxu0 %v2236
    %2985 = vmatpush1.bf16.msra.mxu0 %v2235
    %2986 = vmatprep.subr.bf16.mxu0 %v2596
    %2987 = vmatpush2.bf16.msra.mxu0 %v2595
    %2988 = vmatprep.subr.bf16.mxu0 %v2572
    %2989 = vmatpush2.bf16.msra.mxu0 %v2571
    %2990 = vmatprep.subr.bf16.mxu0 %v2548
    %2991 = vmatpush2.bf16.msra.mxu0 %v2547
    %2992 = vmatprep.subr.bf16.mxu0 %v2524
    %2993 = vmatpush2.bf16.msra.mxu0 %v2523
    %2994 = vmatprep.subr.bf16.mxu0 %v2500
    %2995 = vmatpush2.bf16.msra.mxu0 %v2499
    %2996 = vmatprep.subr.bf16.mxu0 %v2476
    %2997 = vmatpush2.bf16.msra.mxu0 %v2475
    %2998 = vmatprep.subr.bf16.mxu0 %v2452
    %2999 = vmatpush2.bf16.msra.mxu0 %v2451
    %3000 = vmatprep.subr.bf16.mxu0 %v2428
    %3001 = vmatpush2.bf16.msra.mxu0 %v2427
    %3002 = vmatprep.mubr.bf16.mxu0 %v2024
    %3003 = vmatmul.mubr.bf16.gmra.mxu0 %v2023
    %v3004 = vpop.f32.mrf.mxu0
    %v3005 = vadd.f32 0.0, %v3004
    %v3006 = vpop.f32.mrf.mxu0
    %v3007 = vadd.f32 0.0, %v3006
    %v3008 = vpop.f32.mrf.mxu0
    %v3009 = vpop.f32.mrf.mxu0
    %3010 = vdwg.mxu0
    %3011 = vmatprep.subr.bf16.mxu0 %v2406
    %3012 = vmatpush1.bf16.msra.mxu0 %v2405
    %3013 = vmatprep.subr.bf16.mxu0 %v2382
    %3014 = vmatpush1.bf16.msra.mxu0 %v2381
    %3015 = vmatprep.subr.bf16.mxu0 %v2358
    %3016 = vmatpush1.bf16.msra.mxu0 %v2357
    %3017 = vmatprep.subr.bf16.mxu0 %v2334
    %3018 = vmatpush1.bf16.msra.mxu0 %v2333
    %3019 = vmatprep.subr.bf16.mxu0 %v2310
    %3020 = vmatpush1.bf16.msra.mxu0 %v2309
    %3021 = vmatprep.subr.bf16.mxu0 %v2286
    %3022 = vmatpush1.bf16.msra.mxu0 %v2285
    %3023 = vmatprep.subr.bf16.mxu0 %v2262
    %3024 = vmatpush1.bf16.msra.mxu0 %v2261
    %3025 = vmatprep.subr.bf16.mxu0 %v2238
    %3026 = vmatpush1.bf16.msra.mxu0 %v2237
    %3027 = vmatprep.subr.bf16.mxu0 %v2598
    %3028 = vmatpush2.bf16.msra.mxu0 %v2597
    %3029 = vmatprep.subr.bf16.mxu0 %v2574
    %3030 = vmatpush2.bf16.msra.mxu0 %v2573
    %3031 = vmatprep.subr.bf16.mxu0 %v2550
    %3032 = vmatpush2.bf16.msra.mxu0 %v2549
    %3033 = vmatprep.subr.bf16.mxu0 %v2526
    %3034 = vmatpush2.bf16.msra.mxu0 %v2525
    %3035 = vmatprep.subr.bf16.mxu0 %v2502
    %3036 = vmatpush2.bf16.msra.mxu0 %v2501
    %3037 = vmatprep.subr.bf16.mxu0 %v2478
    %3038 = vmatpush2.bf16.msra.mxu0 %v2477
    %3039 = vmatprep.subr.bf16.mxu0 %v2454
    %3040 = vmatpush2.bf16.msra.mxu0 %v2453
    %3041 = vmatprep.subr.bf16.mxu0 %v2430
    %3042 = vmatpush2.bf16.msra.mxu0 %v2429
    %3043 = vmatprep.mubr.bf16.mxu0 %v2024
    %3044 = vmatmul.mubr.bf16.gmra.mxu0 %v2023
    %v3045 = vpop.f32.mrf.mxu0
    %v3046 = vadd.f32 0.0, %v3045
    %v3047 = vpop.f32.mrf.mxu0
    %v3048 = vadd.f32 0.0, %v3047
    %v3049 = vpop.f32.mrf.mxu0
    %v3050 = vpop.f32.mrf.mxu0
    %3051 = vdwg.mxu0
    %3052 = vmatprep.subr.bf16.mxu0 %v2408
    %3053 = vmatpush1.bf16.msra.mxu0 %v2407
    %3054 = vmatprep.subr.bf16.mxu0 %v2384
    %3055 = vmatpush1.bf16.msra.mxu0 %v2383
    %3056 = vmatprep.subr.bf16.mxu0 %v2360
    %3057 = vmatpush1.bf16.msra.mxu0 %v2359
    %3058 = vmatprep.subr.bf16.mxu0 %v2336
    %3059 = vmatpush1.bf16.msra.mxu0 %v2335
    %3060 = vmatprep.subr.bf16.mxu0 %v2312
    %3061 = vmatpush1.bf16.msra.mxu0 %v2311
    %3062 = vmatprep.subr.bf16.mxu0 %v2288
    %3063 = vmatpush1.bf16.msra.mxu0 %v2287
    %3064 = vmatprep.subr.bf16.mxu0 %v2264
    %3065 = vmatpush1.bf16.msra.mxu0 %v2263
    %3066 = vmatprep.subr.bf16.mxu0 %v2240
    %3067 = vmatpush1.bf16.msra.mxu0 %v2239
    %3068 = vmatprep.subr.bf16.mxu0 %v2600
    %3069 = vmatpush2.bf16.msra.mxu0 %v2599
    %3070 = vmatprep.subr.bf16.mxu0 %v2576
    %3071 = vmatpush2.bf16.msra.mxu0 %v2575
    %3072 = vmatprep.subr.bf16.mxu0 %v2552
    %3073 = vmatpush2.bf16.msra.mxu0 %v2551
    %3074 = vmatprep.subr.bf16.mxu0 %v2528
    %3075 = vmatpush2.bf16.msra.mxu0 %v2527
    %3076 = vmatprep.subr.bf16.mxu0 %v2504
    %3077 = vmatpush2.bf16.msra.mxu0 %v2503
    %3078 = vmatprep.subr.bf16.mxu0 %v2480
    %3079 = vmatpush2.bf16.msra.mxu0 %v2479
    %3080 = vmatprep.subr.bf16.mxu0 %v2456
    %3081 = vmatpush2.bf16.msra.mxu0 %v2455
    %3082 = vmatprep.subr.bf16.mxu0 %v2432
    %3083 = vmatpush2.bf16.msra.mxu0 %v2431
    %3084 = vmatprep.mubr.bf16.mxu0 %v2024
    %3085 = vmatmul.mubr.bf16.gmra.mxu0 %v2023
    %v3086 = vpop.f32.mrf.mxu0
    %v3087 = vadd.f32 0.0, %v3086
    %v3088 = vpop.f32.mrf.mxu0
    %v3089 = vadd.f32 0.0, %v3088
    %v3090 = vpop.f32.mrf.mxu0
    %v3091 = vpop.f32.mrf.mxu0
    %3092 = vdwg.mxu0
    %v3093 = vld [vmem:[#allocation14] sm:$0xff]
    %v3094 = vld [vmem:[#allocation14 + $0x8] sm:$0xff]
    %v3095 = vld [vmem:[#allocation14 + $0x10] sm:$0xff]
    %v3099 = vlaneseq
    %v3100 = vshrl.u32 %v3099, 7
    %v3101 = vsub.s32 0, %v3100
    %v3102 = vrot.slane %v3093, %v3101
    %v3103 = vlaneseq
    %v3104 = vshrl.u32 %v3103, 7
    %v3105 = vsub.s32 1, %v3104
    %v3106 = vrot.slane %v3093, %v3105
    %v3107 = vlaneseq
    %v3108 = vshrl.u32 %v3107, 7
    %v3109 = vsub.s32 2, %v3108
    %v3110 = vrot.slane %v3093, %v3109
    %v3111 = vlaneseq
    %v3112 = vshrl.u32 %v3111, 7
    %v3113 = vsub.s32 3, %v3112
    %v3114 = vrot.slane %v3093, %v3113
    %v3115 = vlaneseq
    %v3116 = vshrl.u32 %v3115, 7
    %v3117 = vsub.s32 4, %v3116
    %v3118 = vrot.slane %v3093, %v3117
    %v3119 = vlaneseq
    %v3120 = vshrl.u32 %v3119, 7
    %v3121 = vsub.s32 5, %v3120
    %v3122 = vrot.slane %v3093, %v3121
    %v3123 = vlaneseq
    %v3124 = vshrl.u32 %v3123, 7
    %v3125 = vsub.s32 6, %v3124
    %v3126 = vrot.slane %v3093, %v3125
    %v3127 = vlaneseq
    %v3128 = vshrl.u32 %v3127, 7
    %v3129 = vsub.s32 7, %v3128
    %v3130 = vrot.slane %v3093, %v3129
    %v3131 = vlaneseq
    %v3132 = vshrl.u32 %v3131, 7
    %v3133 = vsub.s32 0, %v3132
    %v3134 = vrot.slane %v3094, %v3133
    %v3135 = vlaneseq
    %v3136 = vshrl.u32 %v3135, 7
    %v3137 = vsub.s32 1, %v3136
    %v3138 = vrot.slane %v3094, %v3137
    %v3139 = vlaneseq
    %v3140 = vshrl.u32 %v3139, 7
    %v3141 = vsub.s32 2, %v3140
    %v3142 = vrot.slane %v3094, %v3141
    %v3143 = vlaneseq
    %v3144 = vshrl.u32 %v3143, 7
    %v3145 = vsub.s32 3, %v3144
    %v3146 = vrot.slane %v3094, %v3145
    %v3147 = vlaneseq
    %v3148 = vshrl.u32 %v3147, 7
    %v3149 = vsub.s32 4, %v3148
    %v3150 = vrot.slane %v3094, %v3149
    %v3151 = vlaneseq
    %v3152 = vshrl.u32 %v3151, 7
    %v3153 = vsub.s32 5, %v3152
    %v3154 = vrot.slane %v3094, %v3153
    %v3155 = vlaneseq
    %v3156 = vshrl.u32 %v3155, 7
    %v3157 = vsub.s32 6, %v3156
    %v3158 = vrot.slane %v3094, %v3157
    %v3159 = vlaneseq
    %v3160 = vshrl.u32 %v3159, 7
    %v3161 = vsub.s32 7, %v3160
    %v3162 = vrot.slane %v3094, %v3161
    %v3163 = vlaneseq
    %v3164 = vshrl.u32 %v3163, 7
    %v3165 = vsub.s32 0, %v3164
    %v3166 = vrot.slane %v3095, %v3165
    %v3167 = vlaneseq
    %v3168 = vshrl.u32 %v3167, 7
    %v3169 = vsub.s32 1, %v3168
    %v3170 = vrot.slane %v3095, %v3169
    %v3171 = vlaneseq
    %v3172 = vshrl.u32 %v3171, 7
    %v3173 = vsub.s32 2, %v3172
    %v3174 = vrot.slane %v3095, %v3173
    %v3175 = vlaneseq
    %v3176 = vshrl.u32 %v3175, 7
    %v3177 = vsub.s32 3, %v3176
    %v3178 = vrot.slane %v3095, %v3177
    %v3179 = vlaneseq
    %v3180 = vshrl.u32 %v3179, 7
    %v3181 = vsub.s32 4, %v3180
    %v3182 = vrot.slane %v3095, %v3181
    %v3183 = vlaneseq
    %v3184 = vshrl.u32 %v3183, 7
    %v3185 = vsub.s32 5, %v3184
    %v3186 = vrot.slane %v3095, %v3185
    %v3187 = vlaneseq
    %v3188 = vshrl.u32 %v3187, 7
    %v3189 = vsub.s32 6, %v3188
    %v3190 = vrot.slane %v3095, %v3189
    %v3191 = vlaneseq
    %v3192 = vshrl.u32 %v3191, 7
    %v3193 = vsub.s32 7, %v3192
    %v3194 = vrot.slane %v3095, %v3193
    %v3219 = vmul.f32 %v2636, %v3102
    %v3220 = vmul.f32 %v2638, %v3106
    %v3221 = vmul.f32 %v2677, %v3110
    %v3222 = vmul.f32 %v2679, %v3114
    %v3223 = vmul.f32 %v2718, %v3118
    %v3224 = vmul.f32 %v2720, %v3122
    %v3225 = vmul.f32 %v2759, %v3126
    %v3226 = vmul.f32 %v2761, %v3130
    %v3227 = vmul.f32 %v2800, %v3134
    %v3228 = vmul.f32 %v2802, %v3138
    %v3229 = vmul.f32 %v2841, %v3142
    %v3230 = vmul.f32 %v2843, %v3146
    %v3231 = vmul.f32 %v2882, %v3150
    %v3232 = vmul.f32 %v2884, %v3154
    %v3233 = vmul.f32 %v2923, %v3158
    %v3234 = vmul.f32 %v2925, %v3162
    %v3235 = vmul.f32 %v2964, %v3166
    %v3236 = vmul.f32 %v2966, %v3170
    %v3237 = vmul.f32 %v3005, %v3174
    %v3238 = vmul.f32 %v3007, %v3178
    %v3239 = vmul.f32 %v3046, %v3182
    %v3240 = vmul.f32 %v3048, %v3186
    %v3241 = vmul.f32 %v3087, %v3190
    %v3242 = vmul.f32 %v3089, %v3194
    %v3243 = vld [vmem:[#allocation16] sm:$0xff]
    %v3244 = vld [vmem:[#allocation16 + $0x8] sm:$0xff]
    %v3245 = vld [vmem:[#allocation16 + $0x10] sm:$0xff]
    %v3249 = vlaneseq
    %v3250 = vshrl.u32 %v3249, 7
    %v3251 = vsub.s32 0, %v3250
    %v3252 = vrot.slane %v3243, %v3251
    %v3253 = vlaneseq
    %v3254 = vshrl.u32 %v3253, 7
    %v3255 = vsub.s32 1, %v3254
    %v3256 = vrot.slane %v3243, %v3255
    %v3257 = vlaneseq
    %v3258 = vshrl.u32 %v3257, 7
    %v3259 = vsub.s32 2, %v3258
    %v3260 = vrot.slane %v3243, %v3259
    %v3261 = vlaneseq
    %v3262 = vshrl.u32 %v3261, 7
    %v3263 = vsub.s32 3, %v3262
    %v3264 = vrot.slane %v3243, %v3263
    %v3265 = vlaneseq
    %v3266 = vshrl.u32 %v3265, 7
    %v3267 = vsub.s32 4, %v3266
    %v3268 = vrot.slane %v3243, %v3267
    %v3269 = vlaneseq
    %v3270 = vshrl.u32 %v3269, 7
    %v3271 = vsub.s32 5, %v3270
    %v3272 = vrot.slane %v3243, %v3271
    %v3273 = vlaneseq
    %v3274 = vshrl.u32 %v3273, 7
    %v3275 = vsub.s32 6, %v3274
    %v3276 = vrot.slane %v3243, %v3275
    %v3277 = vlaneseq
    %v3278 = vshrl.u32 %v3277, 7
    %v3279 = vsub.s32 7, %v3278
    %v3280 = vrot.slane %v3243, %v3279
    %v3281 = vlaneseq
    %v3282 = vshrl.u32 %v3281, 7
    %v3283 = vsub.s32 0, %v3282
    %v3284 = vrot.slane %v3244, %v3283
    %v3285 = vlaneseq
    %v3286 = vshrl.u32 %v3285, 7
    %v3287 = vsub.s32 1, %v3286
    %v3288 = vrot.slane %v3244, %v3287
    %v3289 = vlaneseq
    %v3290 = vshrl.u32 %v3289, 7
    %v3291 = vsub.s32 2, %v3290
    %v3292 = vrot.slane %v3244, %v3291
    %v3293 = vlaneseq
    %v3294 = vshrl.u32 %v3293, 7
    %v3295 = vsub.s32 3, %v3294
    %v3296 = vrot.slane %v3244, %v3295
    %v3297 = vlaneseq
    %v3298 = vshrl.u32 %v3297, 7
    %v3299 = vsub.s32 4, %v3298
    %v3300 = vrot.slane %v3244, %v3299
    %v3301 = vlaneseq
    %v3302 = vshrl.u32 %v3301, 7
    %v3303 = vsub.s32 5, %v3302
    %v3304 = vrot.slane %v3244, %v3303
    %v3305 = vlaneseq
    %v3306 = vshrl.u32 %v3305, 7
    %v3307 = vsub.s32 6, %v3306
    %v3308 = vrot.slane %v3244, %v3307
    %v3309 = vlaneseq
    %v3310 = vshrl.u32 %v3309, 7
    %v3311 = vsub.s32 7, %v3310
    %v3312 = vrot.slane %v3244, %v3311
    %v3313 = vlaneseq
    %v3314 = vshrl.u32 %v3313, 7
    %v3315 = vsub.s32 0, %v3314
    %v3316 = vrot.slane %v3245, %v3315
    %v3317 = vlaneseq
    %v3318 = vshrl.u32 %v3317, 7
    %v3319 = vsub.s32 1, %v3318
    %v3320 = vrot.slane %v3245, %v3319
    %v3321 = vlaneseq
    %v3322 = vshrl.u32 %v3321, 7
    %v3323 = vsub.s32 2, %v3322
    %v3324 = vrot.slane %v3245, %v3323
    %v3325 = vlaneseq
    %v3326 = vshrl.u32 %v3325, 7
    %v3327 = vsub.s32 3, %v3326
    %v3328 = vrot.slane %v3245, %v3327
    %v3329 = vlaneseq
    %v3330 = vshrl.u32 %v3329, 7
    %v3331 = vsub.s32 4, %v3330
    %v3332 = vrot.slane %v3245, %v3331
    %v3333 = vlaneseq
    %v3334 = vshrl.u32 %v3333, 7
    %v3335 = vsub.s32 5, %v3334
    %v3336 = vrot.slane %v3245, %v3335
    %v3337 = vlaneseq
    %v3338 = vshrl.u32 %v3337, 7
    %v3339 = vsub.s32 6, %v3338
    %v3340 = vrot.slane %v3245, %v3339
    %v3341 = vlaneseq
    %v3342 = vshrl.u32 %v3341, 7
    %v3343 = vsub.s32 7, %v3342
    %v3344 = vrot.slane %v3245, %v3343
    %v3369 = vadd.f32 %v3219, %v3252
    %v3370 = vadd.f32 %v3220, %v3256
    %v3371 = vadd.f32 %v3221, %v3260
    %v3372 = vadd.f32 %v3222, %v3264
    %v3373 = vadd.f32 %v3223, %v3268
    %v3374 = vadd.f32 %v3224, %v3272
    %v3375 = vadd.f32 %v3225, %v3276
    %v3376 = vadd.f32 %v3226, %v3280
    %v3377 = vadd.f32 %v3227, %v3284
    %v3378 = vadd.f32 %v3228, %v3288
    %v3379 = vadd.f32 %v3229, %v3292
    %v3380 = vadd.f32 %v3230, %v3296
    %v3381 = vadd.f32 %v3231, %v3300
    %v3382 = vadd.f32 %v3232, %v3304
    %v3383 = vadd.f32 %v3233, %v3308
    %v3384 = vadd.f32 %v3234, %v3312
    %v3385 = vadd.f32 %v3235, %v3316
    %v3386 = vadd.f32 %v3236, %v3320
    %v3387 = vadd.f32 %v3237, %v3324
    %v3388 = vadd.f32 %v3238, %v3328
    %v3389 = vadd.f32 %v3239, %v3332
    %v3390 = vadd.f32 %v3240, %v3336
    %v3391 = vadd.f32 %v3241, %v3340
    %v3392 = vadd.f32 %v3242, %v3344
    %v3393 = vtanh.pop %v3369
    %v3394 = vtanh.pop %v3370
    %v3395 = vtanh.pop %v3371
    %v3396 = vtanh.pop %v3372
    %v3397 = vtanh.pop %v3373
    %v3398 = vtanh.pop %v3374
    %v3399 = vtanh.pop %v3375
    %v3400 = vtanh.pop %v3376
    %v3401 = vtanh.pop %v3377
    %v3402 = vtanh.pop %v3378
    %v3403 = vtanh.pop %v3379
    %v3404 = vtanh.pop %v3380
    %v3405 = vtanh.pop %v3381
    %v3406 = vtanh.pop %v3382
    %v3407 = vtanh.pop %v3383
    %v3408 = vtanh.pop %v3384
    %v3409 = vtanh.pop %v3385
    %v3410 = vtanh.pop %v3386
    %v3411 = vtanh.pop %v3387
    %v3412 = vtanh.pop %v3388
    %v3413 = vtanh.pop %v3389
    %v3414 = vtanh.pop %v3390
    %v3415 = vtanh.pop %v3391
    %v3416 = vtanh.pop %v3392
    %v3441 = vcombine.low %v3393, %v3394
    %v3442 = vcombine.low %v3395, %v3396
    %v3444 = vunpack.c.l.s4 1983009808
    %v3445 = vunpack.c.0.s8 %v3444
    %v3446 = vlaneseq
    %v3447 = vshrl.u32 %v3446, 7
    %v3448 = vsub.s32 %v3445, %v3447
    %v3449 = vrot.slane %v3441, %v3448
    %v3451 = vunpack.c.l.s4 1983009808
    %v3452 = vunpack.c.0.s8 %v3451
    %v3453 = vlaneseq
    %v3454 = vshrl.u32 %v3453, 7
    %v3455 = vsub.s32 %v3452, %v3454
    %v3456 = vrot.slane %v3442, %v3455
    %v3457 = vcombine.low %v3449, %v3456
    %v3458 = vcombine.low %v3397, %v3398
    %v3459 = vcombine.low %v3399, %v3400
    %v3461 = vunpack.c.l.s4 1983009808
    %v3462 = vunpack.c.0.s8 %v3461
    %v3463 = vlaneseq
    %v3464 = vshrl.u32 %v3463, 7
    %v3465 = vsub.s32 %v3462, %v3464
    %v3466 = vrot.slane %v3458, %v3465
    %v3468 = vunpack.c.l.s4 1983009808
    %v3469 = vunpack.c.0.s8 %v3468
    %v3470 = vlaneseq
    %v3471 = vshrl.u32 %v3470, 7
    %v3472 = vsub.s32 %v3469, %v3471
    %v3473 = vrot.slane %v3459, %v3472
    %v3474 = vcombine.low %v3466, %v3473
    %v3475 = vcombine.low %v3401, %v3402
    %v3476 = vcombine.low %v3403, %v3404
    %v3478 = vunpack.c.l.s4 1983009808
    %v3479 = vunpack.c.0.s8 %v3478
    %v3480 = vlaneseq
    %v3481 = vshrl.u32 %v3480, 7
    %v3482 = vsub.s32 %v3479, %v3481
    %v3483 = vrot.slane %v3475, %v3482
    %v3485 = vunpack.c.l.s4 1983009808
    %v3486 = vunpack.c.0.s8 %v3485
    %v3487 = vlaneseq
    %v3488 = vshrl.u32 %v3487, 7
    %v3489 = vsub.s32 %v3486, %v3488
    %v3490 = vrot.slane %v3476, %v3489
    %v3491 = vcombine.low %v3483, %v3490
    %v3492 = vcombine.low %v3405, %v3406
    %v3493 = vcombine.low %v3407, %v3408
    %v3495 = vunpack.c.l.s4 1983009808
    %v3496 = vunpack.c.0.s8 %v3495
    %v3497 = vlaneseq
    %v3498 = vshrl.u32 %v3497, 7
    %v3499 = vsub.s32 %v3496, %v3498
    %v3500 = vrot.slane %v3492, %v3499
    %v3502 = vunpack.c.l.s4 1983009808
    %v3503 = vunpack.c.0.s8 %v3502
    %v3504 = vlaneseq
    %v3505 = vshrl.u32 %v3504, 7
    %v3506 = vsub.s32 %v3503, %v3505
    %v3507 = vrot.slane %v3493, %v3506
    %v3508 = vcombine.low %v3500, %v3507
    %v3509 = vcombine.low %v3409, %v3410
    %v3510 = vcombine.low %v3411, %v3412
    %v3512 = vunpack.c.l.s4 1983009808
    %v3513 = vunpack.c.0.s8 %v3512
    %v3514 = vlaneseq
    %v3515 = vshrl.u32 %v3514, 7
    %v3516 = vsub.s32 %v3513, %v3515
    %v3517 = vrot.slane %v3509, %v3516
    %v3519 = vunpack.c.l.s4 1983009808
    %v3520 = vunpack.c.0.s8 %v3519
    %v3521 = vlaneseq
    %v3522 = vshrl.u32 %v3521, 7
    %v3523 = vsub.s32 %v3520, %v3522
    %v3524 = vrot.slane %v3510, %v3523
    %v3525 = vcombine.low %v3517, %v3524
    %v3526 = vcombine.low %v3413, %v3414
    %v3527 = vcombine.low %v3415, %v3416
    %v3529 = vunpack.c.l.s4 1983009808
    %v3530 = vunpack.c.0.s8 %v3529
    %v3531 = vlaneseq
    %v3532 = vshrl.u32 %v3531, 7
    %v3533 = vsub.s32 %v3530, %v3532
    %v3534 = vrot.slane %v3526, %v3533
    %v3536 = vunpack.c.l.s4 1983009808
    %v3537 = vunpack.c.0.s8 %v3536
    %v3538 = vlaneseq
    %v3539 = vshrl.u32 %v3538, 7
    %v3540 = vsub.s32 %v3537, %v3539
    %v3541 = vrot.slane %v3527, %v3540
    %v3542 = vcombine.low %v3534, %v3541
    %3549 = vst [vmem:[#allocation17] sm:$0xff] %v3457
    %3550 = vst [vmem:[#allocation17 + $0x8] sm:$0xff] %v3474
    %3551 = vst [vmem:[#allocation17 + $0x10] sm:$0xff] %v3491
    %3552 = vst [vmem:[#allocation17 + $0x18] sm:$0xff] %v3508
    %3553 = vst [vmem:[#allocation17 + $0x20] sm:$0xff] %v3525
    %3554 = vst [vmem:[#allocation17 + $0x28] sm:$0xff] %v3542
    // Predicated region
    $region90: #{tpu_custom_call.1} parent=1 // pred_check
      _
    $region91: #{tpu_custom_call.1} parent=1 // pred_check_branch
      %3556 = sbr.rel (0) target = $region93
    $region92: #{tpu_custom_call.1} parent=1 // pred_region
      %s3558 = ssub.s32 768, 768
      %3559 = vsyncadd [#allocation4], %s3558
      %s3561 = sshll.u32 [#allocation17], 4
      %s3562 = int_to_ptr.vmem [resolvable:$true] %s3561
      %3564 = dma.vmem_to_hbm [thread:$0]  %s3562, 768, %s13, [#allocation4]
    $region93: #{tpu_custom_call.1} parent=1 // pred_fallthru
      _
    // Predicated region
    $region94: #{tpu_custom_call.1} parent=1 // pred_check
      _
    $region95: #{tpu_custom_call.1} parent=1 // pred_check_branch
      %3566 = sbr.rel (0) target = $region97
    $region96: #{tpu_custom_call.1} parent=1 // pred_region
      %3567 = dma.done [#allocation4], 768
    $region97: #{tpu_custom_call.1} parent=1 // pred_fallthru
      _
    %3568 = vsyncpa [#allocation3], 1
    %3569 = vsyncpa [#allocation6], 1
    %3570 = vsyncpa [#allocation9], 1
    %3571 = vsyncpa [#allocation12], 1
    %3572 = vsyncpa [#allocation15], 1
    %3573 = vsyncpa [#allocation4], 1

</llo_original>
